<compile_context>
chip_gen: v5e
topology: v5e:2x2
jax: 0.10.0
libtpu: 0.0.40
codegen_flags: <defaults>
</compile_context>

<pallas_src>
import functools

import jax
import jax.numpy as jnp
from jax.experimental import pallas as pl
from jax.experimental.pallas import tpu as pltpu


_VMEM_LIMIT = 32 * 1024 * 1024  # fits v5e/v6e scoped limits and v7x's 64 MiB physical


# --------------------------------------------------------------------------- fused kernel
def _fused_attn_kernel(x_ref, wqkv_ref, bqkv_ref, wproj_ref, bproj_ref, o_ref,
                       *, num_heads, head_dim, l_t, scale):
    # One grid step == one batch element, lane-dense (N, C) everywhere.
    x = x_ref[0]                                  # (N, C)
    N, C = x.shape

    # ---- qkv projection (MXU, f32 accumulation) -----------------------------
    qkv = jnp.dot(x, wqkv_ref[...], preferred_element_type=jnp.float32)
    qkv = qkv + bqkv_ref[...].astype(jnp.float32)            # (N, 3C)

    # Static, 128-aligned lane slices -> q / k / v each (N, C), lane-dense.
    q = qkv[:, :C]
    k = qkv[:, C:2 * C]
    v = qkv[:, 2 * C:]

    # ---- 2-D additive ban mask, built once and reused by every head ---------
    # template queries (row < l_t) may only attend to template keys (col < l_t);
    # search queries (row >= l_t) attend to everything.
    row = jax.lax.broadcasted_iota(jnp.int32, (N, N), 0)
    col = jax.lax.broadcasted_iota(jnp.int32, (N, N), 1)
    neg = jnp.where((row < l_t) & (col >= l_t),
                    jnp.float32(-1e30), jnp.float32(0.0))     # (N, N)

    contract_qk = (((1,), (1,)), ((), ()))   # (N,D) x (N,D) -> (N,N), no transpose op
    contract_pv = (((1,), (0,)), ((), ()))   # (N,N) x (N,D) -> (N,D)

    head_outs = []
    for h in range(num_heads):               # static loop, heads via lane slices
        lo = h * head_dim
        hi = lo + head_dim
        q_h = q[:, lo:hi]                    # (N, D)
        k_h = k[:, lo:hi]
        v_h = v[:, lo:hi]

        s = jax.lax.dot_general(q_h, k_h, contract_qk,
                                preferred_element_type=jnp.float32)   # (N, N)
        s = s * jnp.float32(scale) + neg

        # softmax: exp on EUP; masked entries underflow to exactly 0
        s_max = jnp.max(s, axis=-1, keepdims=True)
        p = jnp.exp(s - s_max)
        l = jnp.sum(p, axis=-1, keepdims=True)                        # (N, 1)

        o_h = jax.lax.dot_general(p, v_h, contract_pv,
                                  preferred_element_type=jnp.float32)  # (N, D)
        # Normalize AFTER PV: N*D multiplies instead of N*N; reciprocal on EUP.
        o_h = o_h * pl.reciprocal(l, approx=True)
        head_outs.append(o_h)

    attn_out = jnp.concatenate(head_outs, axis=-1)                     # (N, C)

    # ---- output projection ---------------------------------------------------
    out = jnp.dot(attn_out.astype(wproj_ref.dtype), wproj_ref[...],
                  preferred_element_type=jnp.float32)
    out = out + bproj_ref[...].astype(jnp.float32)
    o_ref[0] = out.astype(o_ref.dtype)


# --------------------------------------------------------------------------- wrapper
@functools.partial(jax.jit, static_argnames=("num_heads", "t_h", "t_w", "s_h", "s_w"))
def attention_pallas(x, w_qkv, b_qkv, w_proj, b_proj, *,
                     num_heads, t_h, t_w, s_h, s_w):
    B, N, C = x.shape
    H = num_heads
    D = C // H
    l_t = t_h * t_w
    assert N == l_t + s_h * s_w, "token count must equal t_h*t_w + s_h*s_w"
    assert C % H == 0
    scale = D ** (-0.5)

    kernel = functools.partial(_fused_attn_kernel, num_heads=H, head_dim=D,
                               l_t=l_t, scale=scale)

    itemsize = x.dtype.itemsize
    cost = pl.CostEstimate(
        flops=2 * B * N * C * 3 * C          # qkv projection
        + 4 * B * N * N * C                  # QK^T + PV over all heads
        + 2 * B * N * C * C,                 # output projection
        transcendentals=B * H * N * N + B * H * N,
        bytes_accessed=(2 * B * N * C + C * 3 * C + 3 * C + C * C + C) * itemsize,
    )

    return pl.pallas_call(
        kernel,
        out_shape=jax.ShapeDtypeStruct((B, N, C), x.dtype),
        grid_spec=pltpu.PrefetchScalarGridSpec(
            num_scalar_prefetch=0,
            grid=(B,),                                               # 2 parallel steps
            in_specs=[
                pl.BlockSpec((1, N, C), lambda b: (b, 0, 0)),        # x (lane-dense)
                pl.BlockSpec((C, 3 * C), lambda b: (0, 0)),          # Wqkv (resident)
                pl.BlockSpec((1, 3 * C), lambda b: (0, 0)),          # bqkv
                pl.BlockSpec((C, C), lambda b: (0, 0)),              # Wproj (resident)
                pl.BlockSpec((1, C), lambda b: (0, 0)),              # bproj
            ],
            out_specs=pl.BlockSpec((1, N, C), lambda b: (b, 0, 0)),  # out (lane-dense)
        ),
        compiler_params=pltpu.CompilerParams(
            dimension_semantics=("parallel",),
            vmem_limit_bytes=_VMEM_LIMIT,
        ),
        cost_estimate=cost,
    )(x, w_qkv, b_qkv.reshape(1, 3 * C), w_proj, b_proj.reshape(1, C))


# --------------------------------------------------------------------------- pure-JAX reference
def attention_reference(x, w_qkv, b_qkv, w_proj, b_proj, *,
                        num_heads, t_h, t_w, s_h, s_w):
    B, N, C = x.shape
    H = num_heads
    D = C // H
    scale = D ** (-0.5)
    l_t = t_h * t_w
    hp = jax.lax.Precision.HIGHEST

    qkv = jnp.einsum("bnc,cd->bnd", x, w_qkv, precision=hp) + b_qkv
    qkv = qkv.reshape(B, N, 3, H, D).transpose(2, 0, 3, 1, 4)
    q, k, v = qkv[0], qkv[1], qkv[2]

    q_mt, q_s = q[:, :, :l_t], q[:, :, l_t:]
    k_mt, v_mt = k[:, :, :l_t], v[:, :, :l_t]

    attn = jax.nn.softmax(
        jnp.einsum("bhqd,bhkd->bhqk", q_mt, k_mt, precision=hp) * scale, axis=-1)
    x_mt = jnp.einsum("bhqk,bhkd->bhqd", attn, v_mt, precision=hp)
    x_mt = x_mt.transpose(0, 2, 1, 3).reshape(B, l_t, C)

    attn = jax.nn.softmax(
        jnp.einsum("bhqd,bhkd->bhqk", q_s, k, precision=hp) * scale, axis=-1)
    x_s = jnp.einsum("bhqk,bhkd->bhqd", attn, v, precision=hp)
    x_s = x_s.transpose(0, 2, 1, 3).reshape(B, N - l_t, C)

    xo = jnp.concatenate([x_mt, x_s], axis=1)
    return jnp.einsum("bnc,cd->bnd", xo, w_proj, precision=hp) + b_proj


if __name__ == "__main__":
    # Small shapes consistent with the module: dim multiple of 128 (lane-dense),
    # template 4x4 = 16 tokens, search 8x8 = 64 tokens -> N = 80 (sublane-aligned).
    B = 2
    dim = 128
    num_heads = 8
    t_h = t_w = 4
    s_h = s_w = 8
    N = t_h * t_w + s_h * s_w  # 80

    key = jax.random.PRNGKey(0)
    kx, kq, kp, kbp = jax.random.split(key, 4)

    x = jax.random.normal(kx, (B, N, dim), dtype=jnp.float32)
    # nn.Linear weights stored transposed ([in, out]) vs PyTorch ([out, in]).
    w_qkv = jax.random.normal(kq, (dim, 3 * dim), dtype=jnp.float32) * 0.02
    b_qkv = jnp.zeros((3 * dim,), dtype=jnp.float32)  # qkv_bias=False
    w_proj = jax.random.normal(kp, (dim, dim), dtype=jnp.float32) * 0.02
    b_proj = jax.random.normal(kbp, (dim,), dtype=jnp.float32) * 0.01

    out = attention_pallas(x, w_qkv, b_qkv, w_proj, b_proj,
                           num_heads=num_heads, t_h=t_h, t_w=t_w,
                           s_h=s_h, s_w=s_w)
    out = jax.block_until_ready(out)

    ref = attention_reference(x, w_qkv, b_qkv, w_proj, b_proj,
                              num_heads=num_heads, t_h=t_h, t_w=t_w,
                              s_h=s_h, s_w=s_w)

    assert out.shape == (B, N, dim)
    max_err = jnp.max(jnp.abs(out - ref))
    # Tolerance relaxed from 1e-4 to 5e-4 because the softmax denominator now uses
    # the EUP approximate reciprocal (perf-review recommendation).
    assert jnp.allclose(out, ref, atol=5e-4, rtol=5e-4), f"mismatch, max abs err {max_err}"

    print("KERNEL_OK")
</pallas_src>

<mosaic_0001>
module attributes {stable_mosaic.version = 11 : i64} {
  func.func @_fused_attn_kernel(%arg0: i32, %arg1: memref<1x80x128xf32, #tpu.memory_space<vmem>>, %arg2: memref<128x384xf32, #tpu.memory_space<vmem>>, %arg3: memref<1x384xf32, #tpu.memory_space<vmem>>, %arg4: memref<128x128xf32, #tpu.memory_space<vmem>>, %arg5: memref<1x128xf32, #tpu.memory_space<vmem>>, %arg6: memref<1x80x128xf32, #tpu.memory_space<vmem>>) attributes {dimension_semantics = [#tpu.dimension_semantics<parallel>], iteration_bounds = array<i64: 2>, scalar_prefetch = 0 : i64, scratch_operands = 0 : i64, tpu.core_type = #tpu.core_type<tc>, window_params = [{transform_indices = @transform_0, window_bounds = array<i64: 1, 80, 128>}, {pipeline_mode = #tpu.pipeline_mode<synchronous>, transform_indices = @transform_1, window_bounds = array<i64: 128, 384>}, {pipeline_mode = #tpu.pipeline_mode<synchronous>, transform_indices = @transform_2, window_bounds = array<i64: 1, 384>}, {pipeline_mode = #tpu.pipeline_mode<synchronous>, transform_indices = @transform_3, window_bounds = array<i64: 128, 128>}, {pipeline_mode = #tpu.pipeline_mode<synchronous>, transform_indices = @transform_4, window_bounds = array<i64: 1, 128>}, {transform_indices = @transform_5, window_bounds = array<i64: 1, 80, 128>}]} {
    %c0 = arith.constant 0 : index
    %c0_0 = arith.constant 0 : index
    %c0_1 = arith.constant 0 : index
    %0 = vector.load %arg1[%c0, %c0_0, %c0_1] : memref<1x80x128xf32, #tpu.memory_space<vmem>>, vector<1x80x128xf32>
    %1 = vector.shape_cast %0 : vector<1x80x128xf32> to vector<80x128xf32>
    %c0_2 = arith.constant 0 : index
    %c0_3 = arith.constant 0 : index
    %2 = vector.load %arg2[%c0_2, %c0_3] : memref<128x384xf32, #tpu.memory_space<vmem>>, vector<128x384xf32>
    %cst = arith.constant dense<0.000000e+00> : vector<80x384xf32>
    %3 = tpu.matmul %1, %2, %cst {dimension_numbers = #tpu.dot_dimension_numbers<[1], [0], [0], [1], [0, 0, 1, 1], [], []>} : vector<80x128xf32>, vector<128x384xf32>, vector<80x384xf32> -> vector<80x384xf32>
    %c0_4 = arith.constant 0 : index
    %c0_5 = arith.constant 0 : index
    %4 = vector.load %arg3[%c0_4, %c0_5] : memref<1x384xf32, #tpu.memory_space<vmem>>, vector<1x384xf32>
    %5 = vector.broadcast %4 : vector<1x384xf32> to vector<80x384xf32>
    %6 = arith.addf %3, %5 : vector<80x384xf32>
    %7 = vector.extract_strided_slice %6 {offsets = [0, 0], sizes = [80, 128], strides = [1, 1]} : vector<80x384xf32> to vector<80x128xf32>
    %8 = vector.extract_strided_slice %6 {offsets = [0, 128], sizes = [80, 128], strides = [1, 1]} : vector<80x384xf32> to vector<80x128xf32>
    %9 = vector.extract_strided_slice %6 {offsets = [0, 256], sizes = [80, 128], strides = [1, 1]} : vector<80x384xf32> to vector<80x128xf32>
    %10 = tpu.iota {dimensions = array<i32: 0>} : vector<80x80xi32>
    %11 = tpu.iota {dimensions = array<i32: 1>} : vector<80x80xi32>
    %c16_i32 = arith.constant 16 : i32
    %12 = vector.broadcast %c16_i32 : i32 to vector<80x80xi32>
    %13 = arith.cmpi slt, %10, %12 : vector<80x80xi32>
    %c16_i32_6 = arith.constant 16 : i32
    %14 = vector.broadcast %c16_i32_6 : i32 to vector<80x80xi32>
    %15 = arith.cmpi sge, %11, %14 : vector<80x80xi32>
    %16 = arith.andi %13, %15 : vector<80x80xi1>
    %cst_7 = arith.constant -1.000000e+30 : f32
    %cst_8 = arith.constant 0.000000e+00 : f32
    %17 = vector.broadcast %cst_7 : f32 to vector<80x80xf32>
    %18 = vector.broadcast %cst_8 : f32 to vector<80x80xf32>
    %19 = arith.select %16, %17, %18 : vector<80x80xi1>, vector<80x80xf32>
    %20 = vector.extract_strided_slice %7 {offsets = [0, 0], sizes = [80, 16], strides = [1, 1]} : vector<80x128xf32> to vector<80x16xf32>
    %21 = vector.extract_strided_slice %8 {offsets = [0, 0], sizes = [80, 16], strides = [1, 1]} : vector<80x128xf32> to vector<80x16xf32>
    %22 = vector.extract_strided_slice %9 {offsets = [0, 0], sizes = [80, 16], strides = [1, 1]} : vector<80x128xf32> to vector<80x16xf32>
    %cst_9 = arith.constant dense<0.000000e+00> : vector<80x80xf32>
    %23 = tpu.matmul %20, %21, %cst_9 {dimension_numbers = #tpu.dot_dimension_numbers<[1], [1], [0], [0], [0, 0, 1, 0], [], []>} : vector<80x16xf32>, vector<80x16xf32>, vector<80x80xf32> -> vector<80x80xf32>
    %cst_10 = arith.constant 2.500000e-01 : f32
    %24 = vector.broadcast %cst_10 : f32 to vector<80x80xf32>
    %25 = arith.mulf %23, %24 : vector<80x80xf32>
    %26 = arith.addf %25, %19 : vector<80x80xf32>
    %cst_11 = arith.constant dense<0xFF800000> : vector<80xf32>
    %27 = vector.multi_reduction <maximumf>, %26, %cst_11 [1] : vector<80x80xf32> to vector<80xf32>
    %28 = vector.shape_cast %27 : vector<80xf32> to vector<80x1xf32>
    %29 = vector.broadcast %28 : vector<80x1xf32> to vector<80x80xf32>
    %30 = arith.subf %26, %29 : vector<80x80xf32>
    %31 = math.exp %30 : vector<80x80xf32>
    %cst_12 = arith.constant dense<0.000000e+00> : vector<80xf32>
    %32 = vector.multi_reduction <add>, %31, %cst_12 [1] : vector<80x80xf32> to vector<80xf32>
    %33 = vector.shape_cast %32 : vector<80xf32> to vector<80x1xf32>
    %cst_13 = arith.constant dense<0.000000e+00> : vector<80x16xf32>
    %34 = tpu.matmul %31, %22, %cst_13 {dimension_numbers = #tpu.dot_dimension_numbers<[1], [0], [0], [1], [0, 0, 1, 1], [], []>} : vector<80x80xf32>, vector<80x16xf32>, vector<80x16xf32> -> vector<80x16xf32>
    %35 = tpu.reciprocal %33 {approx = true} : vector<80x1xf32> -> vector<80x1xf32>
    %36 = vector.broadcast %35 : vector<80x1xf32> to vector<80x16xf32>
    %37 = arith.mulf %34, %36 : vector<80x16xf32>
    %38 = vector.extract_strided_slice %7 {offsets = [0, 16], sizes = [80, 16], strides = [1, 1]} : vector<80x128xf32> to vector<80x16xf32>
    %39 = vector.extract_strided_slice %8 {offsets = [0, 16], sizes = [80, 16], strides = [1, 1]} : vector<80x128xf32> to vector<80x16xf32>
    %40 = vector.extract_strided_slice %9 {offsets = [0, 16], sizes = [80, 16], strides = [1, 1]} : vector<80x128xf32> to vector<80x16xf32>
    %cst_14 = arith.constant dense<0.000000e+00> : vector<80x80xf32>
    %41 = tpu.matmul %38, %39, %cst_14 {dimension_numbers = #tpu.dot_dimension_numbers<[1], [1], [0], [0], [0, 0, 1, 0], [], []>} : vector<80x16xf32>, vector<80x16xf32>, vector<80x80xf32> -> vector<80x80xf32>
    %cst_15 = arith.constant 2.500000e-01 : f32
    %42 = vector.broadcast %cst_15 : f32 to vector<80x80xf32>
    %43 = arith.mulf %41, %42 : vector<80x80xf32>
    %44 = arith.addf %43, %19 : vector<80x80xf32>
    %cst_16 = arith.constant dense<0xFF800000> : vector<80xf32>
    %45 = vector.multi_reduction <maximumf>, %44, %cst_16 [1] : vector<80x80xf32> to vector<80xf32>
    %46 = vector.shape_cast %45 : vector<80xf32> to vector<80x1xf32>
    %47 = vector.broadcast %46 : vector<80x1xf32> to vector<80x80xf32>
    %48 = arith.subf %44, %47 : vector<80x80xf32>
    %49 = math.exp %48 : vector<80x80xf32>
    %cst_17 = arith.constant dense<0.000000e+00> : vector<80xf32>
    %50 = vector.multi_reduction <add>, %49, %cst_17 [1] : vector<80x80xf32> to vector<80xf32>
    %51 = vector.shape_cast %50 : vector<80xf32> to vector<80x1xf32>
    %cst_18 = arith.constant dense<0.000000e+00> : vector<80x16xf32>
    %52 = tpu.matmul %49, %40, %cst_18 {dimension_numbers = #tpu.dot_dimension_numbers<[1], [0], [0], [1], [0, 0, 1, 1], [], []>} : vector<80x80xf32>, vector<80x16xf32>, vector<80x16xf32> -> vector<80x16xf32>
    %53 = tpu.reciprocal %51 {approx = true} : vector<80x1xf32> -> vector<80x1xf32>
    %54 = vector.broadcast %53 : vector<80x1xf32> to vector<80x16xf32>
    %55 = arith.mulf %52, %54 : vector<80x16xf32>
    %56 = vector.extract_strided_slice %7 {offsets = [0, 32], sizes = [80, 16], strides = [1, 1]} : vector<80x128xf32> to vector<80x16xf32>
    %57 = vector.extract_strided_slice %8 {offsets = [0, 32], sizes = [80, 16], strides = [1, 1]} : vector<80x128xf32> to vector<80x16xf32>
    %58 = vector.extract_strided_slice %9 {offsets = [0, 32], sizes = [80, 16], strides = [1, 1]} : vector<80x128xf32> to vector<80x16xf32>
    %cst_19 = arith.constant dense<0.000000e+00> : vector<80x80xf32>
    %59 = tpu.matmul %56, %57, %cst_19 {dimension_numbers = #tpu.dot_dimension_numbers<[1], [1], [0], [0], [0, 0, 1, 0], [], []>} : vector<80x16xf32>, vector<80x16xf32>, vector<80x80xf32> -> vector<80x80xf32>
    %cst_20 = arith.constant 2.500000e-01 : f32
    %60 = vector.broadcast %cst_20 : f32 to vector<80x80xf32>
    %61 = arith.mulf %59, %60 : vector<80x80xf32>
    %62 = arith.addf %61, %19 : vector<80x80xf32>
    %cst_21 = arith.constant dense<0xFF800000> : vector<80xf32>
    %63 = vector.multi_reduction <maximumf>, %62, %cst_21 [1] : vector<80x80xf32> to vector<80xf32>
    %64 = vector.shape_cast %63 : vector<80xf32> to vector<80x1xf32>
    %65 = vector.broadcast %64 : vector<80x1xf32> to vector<80x80xf32>
    %66 = arith.subf %62, %65 : vector<80x80xf32>
    %67 = math.exp %66 : vector<80x80xf32>
    %cst_22 = arith.constant dense<0.000000e+00> : vector<80xf32>
    %68 = vector.multi_reduction <add>, %67, %cst_22 [1] : vector<80x80xf32> to vector<80xf32>
    %69 = vector.shape_cast %68 : vector<80xf32> to vector<80x1xf32>
    %cst_23 = arith.constant dense<0.000000e+00> : vector<80x16xf32>
    %70 = tpu.matmul %67, %58, %cst_23 {dimension_numbers = #tpu.dot_dimension_numbers<[1], [0], [0], [1], [0, 0, 1, 1], [], []>} : vector<80x80xf32>, vector<80x16xf32>, vector<80x16xf32> -> vector<80x16xf32>
    %71 = tpu.reciprocal %69 {approx = true} : vector<80x1xf32> -> vector<80x1xf32>
    %72 = vector.broadcast %71 : vector<80x1xf32> to vector<80x16xf32>
    %73 = arith.mulf %70, %72 : vector<80x16xf32>
    %74 = vector.extract_strided_slice %7 {offsets = [0, 48], sizes = [80, 16], strides = [1, 1]} : vector<80x128xf32> to vector<80x16xf32>
    %75 = vector.extract_strided_slice %8 {offsets = [0, 48], sizes = [80, 16], strides = [1, 1]} : vector<80x128xf32> to vector<80x16xf32>
    %76 = vector.extract_strided_slice %9 {offsets = [0, 48], sizes = [80, 16], strides = [1, 1]} : vector<80x128xf32> to vector<80x16xf32>
    %cst_24 = arith.constant dense<0.000000e+00> : vector<80x80xf32>
    %77 = tpu.matmul %74, %75, %cst_24 {dimension_numbers = #tpu.dot_dimension_numbers<[1], [1], [0], [0], [0, 0, 1, 0], [], []>} : vector<80x16xf32>, vector<80x16xf32>, vector<80x80xf32> -> vector<80x80xf32>
    %cst_25 = arith.constant 2.500000e-01 : f32
    %78 = vector.broadcast %cst_25 : f32 to vector<80x80xf32>
    %79 = arith.mulf %77, %78 : vector<80x80xf32>
    %80 = arith.addf %79, %19 : vector<80x80xf32>
    %cst_26 = arith.constant dense<0xFF800000> : vector<80xf32>
    %81 = vector.multi_reduction <maximumf>, %80, %cst_26 [1] : vector<80x80xf32> to vector<80xf32>
    %82 = vector.shape_cast %81 : vector<80xf32> to vector<80x1xf32>
    %83 = vector.broadcast %82 : vector<80x1xf32> to vector<80x80xf32>
    %84 = arith.subf %80, %83 : vector<80x80xf32>
    %85 = math.exp %84 : vector<80x80xf32>
    %cst_27 = arith.constant dense<0.000000e+00> : vector<80xf32>
    %86 = vector.multi_reduction <add>, %85, %cst_27 [1] : vector<80x80xf32> to vector<80xf32>
    %87 = vector.shape_cast %86 : vector<80xf32> to vector<80x1xf32>
    %cst_28 = arith.constant dense<0.000000e+00> : vector<80x16xf32>
    %88 = tpu.matmul %85, %76, %cst_28 {dimension_numbers = #tpu.dot_dimension_numbers<[1], [0], [0], [1], [0, 0, 1, 1], [], []>} : vector<80x80xf32>, vector<80x16xf32>, vector<80x16xf32> -> vector<80x16xf32>
    %89 = tpu.reciprocal %87 {approx = true} : vector<80x1xf32> -> vector<80x1xf32>
    %90 = vector.broadcast %89 : vector<80x1xf32> to vector<80x16xf32>
    %91 = arith.mulf %88, %90 : vector<80x16xf32>
    %92 = vector.extract_strided_slice %7 {offsets = [0, 64], sizes = [80, 16], strides = [1, 1]} : vector<80x128xf32> to vector<80x16xf32>
    %93 = vector.extract_strided_slice %8 {offsets = [0, 64], sizes = [80, 16], strides = [1, 1]} : vector<80x128xf32> to vector<80x16xf32>
    %94 = vector.extract_strided_slice %9 {offsets = [0, 64], sizes = [80, 16], strides = [1, 1]} : vector<80x128xf32> to vector<80x16xf32>
    %cst_29 = arith.constant dense<0.000000e+00> : vector<80x80xf32>
    %95 = tpu.matmul %92, %93, %cst_29 {dimension_numbers = #tpu.dot_dimension_numbers<[1], [1], [0], [0], [0, 0, 1, 0], [], []>} : vector<80x16xf32>, vector<80x16xf32>, vector<80x80xf32> -> vector<80x80xf32>
    %cst_30 = arith.constant 2.500000e-01 : f32
    %96 = vector.broadcast %cst_30 : f32 to vector<80x80xf32>
    %97 = arith.mulf %95, %96 : vector<80x80xf32>
    %98 = arith.addf %97, %19 : vector<80x80xf32>
    %cst_31 = arith.constant dense<0xFF800000> : vector<80xf32>
    %99 = vector.multi_reduction <maximumf>, %98, %cst_31 [1] : vector<80x80xf32> to vector<80xf32>
    %100 = vector.shape_cast %99 : vector<80xf32> to vector<80x1xf32>
    %101 = vector.broadcast %100 : vector<80x1xf32> to vector<80x80xf32>
    %102 = arith.subf %98, %101 : vector<80x80xf32>
    %103 = math.exp %102 : vector<80x80xf32>
    %cst_32 = arith.constant dense<0.000000e+00> : vector<80xf32>
    %104 = vector.multi_reduction <add>, %103, %cst_32 [1] : vector<80x80xf32> to vector<80xf32>
    %105 = vector.shape_cast %104 : vector<80xf32> to vector<80x1xf32>
    %cst_33 = arith.constant dense<0.000000e+00> : vector<80x16xf32>
    %106 = tpu.matmul %103, %94, %cst_33 {dimension_numbers = #tpu.dot_dimension_numbers<[1], [0], [0], [1], [0, 0, 1, 1], [], []>} : vector<80x80xf32>, vector<80x16xf32>, vector<80x16xf32> -> vector<80x16xf32>
    %107 = tpu.reciprocal %105 {approx = true} : vector<80x1xf32> -> vector<80x1xf32>
    %108 = vector.broadcast %107 : vector<80x1xf32> to vector<80x16xf32>
    %109 = arith.mulf %106, %108 : vector<80x16xf32>
    %110 = vector.extract_strided_slice %7 {offsets = [0, 80], sizes = [80, 16], strides = [1, 1]} : vector<80x128xf32> to vector<80x16xf32>
    %111 = vector.extract_strided_slice %8 {offsets = [0, 80], sizes = [80, 16], strides = [1, 1]} : vector<80x128xf32> to vector<80x16xf32>
    %112 = vector.extract_strided_slice %9 {offsets = [0, 80], sizes = [80, 16], strides = [1, 1]} : vector<80x128xf32> to vector<80x16xf32>
    %cst_34 = arith.constant dense<0.000000e+00> : vector<80x80xf32>
    %113 = tpu.matmul %110, %111, %cst_34 {dimension_numbers = #tpu.dot_dimension_numbers<[1], [1], [0], [0], [0, 0, 1, 0], [], []>} : vector<80x16xf32>, vector<80x16xf32>, vector<80x80xf32> -> vector<80x80xf32>
    %cst_35 = arith.constant 2.500000e-01 : f32
    %114 = vector.broadcast %cst_35 : f32 to vector<80x80xf32>
    %115 = arith.mulf %113, %114 : vector<80x80xf32>
    %116 = arith.addf %115, %19 : vector<80x80xf32>
    %cst_36 = arith.constant dense<0xFF800000> : vector<80xf32>
    %117 = vector.multi_reduction <maximumf>, %116, %cst_36 [1] : vector<80x80xf32> to vector<80xf32>
    %118 = vector.shape_cast %117 : vector<80xf32> to vector<80x1xf32>
    %119 = vector.broadcast %118 : vector<80x1xf32> to vector<80x80xf32>
    %120 = arith.subf %116, %119 : vector<80x80xf32>
    %121 = math.exp %120 : vector<80x80xf32>
    %cst_37 = arith.constant dense<0.000000e+00> : vector<80xf32>
    %122 = vector.multi_reduction <add>, %121, %cst_37 [1] : vector<80x80xf32> to vector<80xf32>
    %123 = vector.shape_cast %122 : vector<80xf32> to vector<80x1xf32>
    %cst_38 = arith.constant dense<0.000000e+00> : vector<80x16xf32>
    %124 = tpu.matmul %121, %112, %cst_38 {dimension_numbers = #tpu.dot_dimension_numbers<[1], [0], [0], [1], [0, 0, 1, 1], [], []>} : vector<80x80xf32>, vector<80x16xf32>, vector<80x16xf32> -> vector<80x16xf32>
    %125 = tpu.reciprocal %123 {approx = true} : vector<80x1xf32> -> vector<80x1xf32>
    %126 = vector.broadcast %125 : vector<80x1xf32> to vector<80x16xf32>
    %127 = arith.mulf %124, %126 : vector<80x16xf32>
    %128 = vector.extract_strided_slice %7 {offsets = [0, 96], sizes = [80, 16], strides = [1, 1]} : vector<80x128xf32> to vector<80x16xf32>
    %129 = vector.extract_strided_slice %8 {offsets = [0, 96], sizes = [80, 16], strides = [1, 1]} : vector<80x128xf32> to vector<80x16xf32>
    %130 = vector.extract_strided_slice %9 {offsets = [0, 96], sizes = [80, 16], strides = [1, 1]} : vector<80x128xf32> to vector<80x16xf32>
    %cst_39 = arith.constant dense<0.000000e+00> : vector<80x80xf32>
    %131 = tpu.matmul %128, %129, %cst_39 {dimension_numbers = #tpu.dot_dimension_numbers<[1], [1], [0], [0], [0, 0, 1, 0], [], []>} : vector<80x16xf32>, vector<80x16xf32>, vector<80x80xf32> -> vector<80x80xf32>
    %cst_40 = arith.constant 2.500000e-01 : f32
    %132 = vector.broadcast %cst_40 : f32 to vector<80x80xf32>
    %133 = arith.mulf %131, %132 : vector<80x80xf32>
    %134 = arith.addf %133, %19 : vector<80x80xf32>
    %cst_41 = arith.constant dense<0xFF800000> : vector<80xf32>
    %135 = vector.multi_reduction <maximumf>, %134, %cst_41 [1] : vector<80x80xf32> to vector<80xf32>
    %136 = vector.shape_cast %135 : vector<80xf32> to vector<80x1xf32>
    %137 = vector.broadcast %136 : vector<80x1xf32> to vector<80x80xf32>
    %138 = arith.subf %134, %137 : vector<80x80xf32>
    %139 = math.exp %138 : vector<80x80xf32>
    %cst_42 = arith.constant dense<0.000000e+00> : vector<80xf32>
    %140 = vector.multi_reduction <add>, %139, %cst_42 [1] : vector<80x80xf32> to vector<80xf32>
    %141 = vector.shape_cast %140 : vector<80xf32> to vector<80x1xf32>
    %cst_43 = arith.constant dense<0.000000e+00> : vector<80x16xf32>
    %142 = tpu.matmul %139, %130, %cst_43 {dimension_numbers = #tpu.dot_dimension_numbers<[1], [0], [0], [1], [0, 0, 1, 1], [], []>} : vector<80x80xf32>, vector<80x16xf32>, vector<80x16xf32> -> vector<80x16xf32>
    %143 = tpu.reciprocal %141 {approx = true} : vector<80x1xf32> -> vector<80x1xf32>
    %144 = vector.broadcast %143 : vector<80x1xf32> to vector<80x16xf32>
    %145 = arith.mulf %142, %144 : vector<80x16xf32>
    %146 = vector.extract_strided_slice %7 {offsets = [0, 112], sizes = [80, 16], strides = [1, 1]} : vector<80x128xf32> to vector<80x16xf32>
    %147 = vector.extract_strided_slice %8 {offsets = [0, 112], sizes = [80, 16], strides = [1, 1]} : vector<80x128xf32> to vector<80x16xf32>
    %148 = vector.extract_strided_slice %9 {offsets = [0, 112], sizes = [80, 16], strides = [1, 1]} : vector<80x128xf32> to vector<80x16xf32>
    %cst_44 = arith.constant dense<0.000000e+00> : vector<80x80xf32>
    %149 = tpu.matmul %146, %147, %cst_44 {dimension_numbers = #tpu.dot_dimension_numbers<[1], [1], [0], [0], [0, 0, 1, 0], [], []>} : vector<80x16xf32>, vector<80x16xf32>, vector<80x80xf32> -> vector<80x80xf32>
    %cst_45 = arith.constant 2.500000e-01 : f32
    %150 = vector.broadcast %cst_45 : f32 to vector<80x80xf32>
    %151 = arith.mulf %149, %150 : vector<80x80xf32>
    %152 = arith.addf %151, %19 : vector<80x80xf32>
    %cst_46 = arith.constant dense<0xFF800000> : vector<80xf32>
    %153 = vector.multi_reduction <maximumf>, %152, %cst_46 [1] : vector<80x80xf32> to vector<80xf32>
    %154 = vector.shape_cast %153 : vector<80xf32> to vector<80x1xf32>
    %155 = vector.broadcast %154 : vector<80x1xf32> to vector<80x80xf32>
    %156 = arith.subf %152, %155 : vector<80x80xf32>
    %157 = math.exp %156 : vector<80x80xf32>
    %cst_47 = arith.constant dense<0.000000e+00> : vector<80xf32>
    %158 = vector.multi_reduction <add>, %157, %cst_47 [1] : vector<80x80xf32> to vector<80xf32>
    %159 = vector.shape_cast %158 : vector<80xf32> to vector<80x1xf32>
    %cst_48 = arith.constant dense<0.000000e+00> : vector<80x16xf32>
    %160 = tpu.matmul %157, %148, %cst_48 {dimension_numbers = #tpu.dot_dimension_numbers<[1], [0], [0], [1], [0, 0, 1, 1], [], []>} : vector<80x80xf32>, vector<80x16xf32>, vector<80x16xf32> -> vector<80x16xf32>
    %161 = tpu.reciprocal %159 {approx = true} : vector<80x1xf32> -> vector<80x1xf32>
    %162 = vector.broadcast %161 : vector<80x1xf32> to vector<80x16xf32>
    %163 = arith.mulf %160, %162 : vector<80x16xf32>
    %164 = tpu.concatenate %37, %55, %73, %91, %109, %127, %145, %163 in 1 : vector<80x16xf32>, vector<80x16xf32>, vector<80x16xf32>, vector<80x16xf32>, vector<80x16xf32>, vector<80x16xf32>, vector<80x16xf32>, vector<80x16xf32> -> vector<80x128xf32>
    %c0_49 = arith.constant 0 : index
    %c0_50 = arith.constant 0 : index
    %165 = vector.load %arg4[%c0_49, %c0_50] : memref<128x128xf32, #tpu.memory_space<vmem>>, vector<128x128xf32>
    %cst_51 = arith.constant dense<0.000000e+00> : vector<80x128xf32>
    %166 = tpu.matmul %164, %165, %cst_51 {dimension_numbers = #tpu.dot_dimension_numbers<[1], [0], [0], [1], [0, 0, 1, 1], [], []>} : vector<80x128xf32>, vector<128x128xf32>, vector<80x128xf32> -> vector<80x128xf32>
    %c0_52 = arith.constant 0 : index
    %c0_53 = arith.constant 0 : index
    %167 = vector.load %arg5[%c0_52, %c0_53] : memref<1x128xf32, #tpu.memory_space<vmem>>, vector<1x128xf32>
    %168 = vector.broadcast %167 : vector<1x128xf32> to vector<80x128xf32>
    %169 = arith.addf %166, %168 : vector<80x128xf32>
    %c0_54 = arith.constant 0 : index
    %c0_55 = arith.constant 0 : index
    %c0_56 = arith.constant 0 : index
    %170 = vector.load %arg6[%c0_54, %c0_55, %c0_56] : memref<1x80x128xf32, #tpu.memory_space<vmem>>, vector<1x80x128xf32>
    %171 = vector.shape_cast %170 : vector<1x80x128xf32> to vector<80x128xf32>
    %172 = vector.shape_cast %169 : vector<80x128xf32> to vector<1x80x128xf32>
    tpu.vector_store %arg6[%c0_54, %c0_55, %c0_56], %172 {strides = array<i32>} : memref<1x80x128xf32, #tpu.memory_space<vmem>>, vector<1x80x128xf32>,
    return
  }
  func.func @transform_0(%arg0: i32) -> (i32, i32, i32) {
    %c0_i32 = arith.constant 0 : i32
    %c0_i32_0 = arith.constant 0 : i32
    %c0_i32_1 = arith.constant 0 : i32
    return %arg0, %c0_i32, %c0_i32_0 : i32, i32, i32
  }
  func.func @transform_1(%arg0: i32) -> (i32, i32) {
    %c0_i32 = arith.constant 0 : i32
    %c0_i32_0 = arith.constant 0 : i32
    %c0_i32_1 = arith.constant 0 : i32
    return %c0_i32, %c0_i32_0 : i32, i32
  }
  func.func @transform_2(%arg0: i32) -> (i32, i32) {
    %c0_i32 = arith.constant 0 : i32
    %c0_i32_0 = arith.constant 0 : i32
    %c0_i32_1 = arith.constant 0 : i32
    return %c0_i32, %c0_i32_0 : i32, i32
  }
  func.func @transform_3(%arg0: i32) -> (i32, i32) {
    %c0_i32 = arith.constant 0 : i32
    %c0_i32_0 = arith.constant 0 : i32
    %c0_i32_1 = arith.constant 0 : i32
    return %c0_i32, %c0_i32_0 : i32, i32
  }
  func.func @transform_4(%arg0: i32) -> (i32, i32) {
    %c0_i32 = arith.constant 0 : i32
    %c0_i32_0 = arith.constant 0 : i32
    %c0_i32_1 = arith.constant 0 : i32
    return %c0_i32, %c0_i32_0 : i32, i32
  }
  func.func @transform_5(%arg0: i32) -> (i32, i32, i32) {
    %c0_i32 = arith.constant 0 : i32
    %c0_i32_0 = arith.constant 0 : i32
    %c0_i32_1 = arith.constant 0 : i32
    return %arg0, %c0_i32, %c0_i32_0 : i32, i32, i32
  }
}

</mosaic_0001>

<llo_original>
// kernel: attention_pallas.1
$region0: #{attention_pallas.1}
  #allocation0 [shape = 'u32[]', space=smem, size = 0x4, offset = 0x4, fixed_abs, tag = 'smem constant byte address 0x4 - core index']
  #allocation1 [shape = 'u32[72,128]{1,0:T(1,128)}', space=vmem, size = 0x9000, scoped, tag = 'internal scratch']
  %s0 = inlined_call_operand.hbm [shape: f32[2,80,128], index: 0, kind: input, shape index: {}]
  %s1 = inlined_call_operand.hbm [shape: f32[128,384], index: 1, kind: input, shape index: {}]
  %s2 = inlined_call_operand.vmem [shape: f32[1,384], index: 2, kind: input, shape index: {}]
  %s3 = inlined_call_operand.hbm [shape: f32[128,128], index: 3, kind: input, shape index: {}]
  %s4 = inlined_call_operand.vmem [shape: f32[1,128], index: 4, kind: input, shape index: {}]
  %s5 = inlined_call_operand.hbm [shape: f32[2,80,128], index: 5, kind: output, shape index: {}]
  %s6 = sld [smem:[#allocation0]]
  $region65: #{attention_pallas.1} parent=0
    _
  %s8 = ssub.s32 1, %s6
  %s9 = scalar_select 0, %s8, %s6
  $region1: #{attention_pallas.1} parent=0
    #allocation2 [shape = 'u8[81920]{0}', space=vmem, size = 0x14000, scoped, tag = 'input window, operand 0']
    #allocation3 [shape = 's32[2]{0}', space=sflag, size = 0x8, scoped, tag = 'scoped memory for attention_pallas.1']
    #allocation4 [shape = 's32[2]{0}', space=sflag, size = 0x8, scoped, tag = 'scoped memory for attention_pallas.1']
    #allocation5 [shape = 'u8[196608]{0}', space=vmem, size = 0x30000, scoped, tag = 'input window, operand 1, single buffered']
    #allocation6 [shape = 's32[1]{0}', space=sflag, size = 0x4, scoped, tag = 'scoped memory for attention_pallas.1']
    #allocation7 [shape = 'u8[65536]{0}', space=vmem, size = 0x10000, scoped, tag = 'input window, operand 3, single buffered']
    #allocation8 [shape = 'u8[81920]{0}', space=vmem, size = 0x14000, scoped, tag = 'output window, operand 0']
    %10 = vsyncpa [#allocation3], 0
    %s11 = scalar_lea.sflag [#allocation3], 1
    %12 = vsyncpa %s11, 0
    %13 = vsyncpa [#allocation6], 0
    %14 = vsyncpa [#allocation4], 0
    %s15 = scalar_lea.sflag [#allocation4], 1
    %16 = vsyncpa %s15, 0
    loop: start=0, step=1, limit=4
    $region2: #{attention_pallas.1} parent=1 // loop_pre_header
      _
    $region3: #{attention_pallas.1} parent=1 // loop_header
      %s18 = sphi 0, %s22
      %p19 = scmp.ge.s32.totalorder %s18, 4
      %s28 = sphi 0, %s30
      %s31 = sphi 0, %s28
      %s32 = sphi 0, %s31
      %s48 = sphi 0, %s32
      %s52 = sphi 0, %s52
      %s54 = sphi 0, %s52
      %s55 = sphi 0, %s54
      %s69 = sphi 0, %s55
      %s73 = sphi 0, %s73
      %s75 = sphi 0, %s73
      %s76 = sphi 0, %s75
      %s90 = sphi 0, %s76
      %s94 = sphi 0, %s94
      %s96 = sphi 0, %s94
      %s97 = sphi 0, %s96
      %s111 = sphi 0, %s97
      %s115 = sphi 0, %s115
      %s117 = sphi 0, %s115
      %s118 = sphi 0, %s117
      %s132 = sphi 0, %s118
      %s138 = sphi 0, %s140
      %s141 = sphi 0, %s138
      %s142 = sphi 0, %s141
      %s158 = sphi 0, %s142
    $region4: #{attention_pallas.1} parent=1 // loop_header_branch
      %21 = sbr.rel (%p19) target = $region8
    $region5: #{attention_pallas.1} parent=1 // loop_body
      %s23 = ssub.s32 %s18, 1
      %s24 = ssub.s32 %s18, 2
      %s25 = sadd.s32 %s18, 1
      %s26 = ssub.s32 %s18, %s25
      %p27 = scmp.eq.s32.totalorder %s26, 0
      %s29 = sadd.s32 %s28, 1
      %s30 = scalar_select %p27, %s28, %s29
      %p33 = pneg %p27
      %p34 = scmp.eq.s32.totalorder %s18, 1
      %p35 = por %p33, %p34
      %p36 = scmp.ne.s32.totalorder %s28, %s31
      %p37 = scmp.eq.s32.totalorder %s18, 0
      %p38 = por %p36, %p37
      %p39 = scmp.ne.s32.totalorder %s28, %s31
      %p40 = scmp.eq.s32.totalorder %s23, 1
      %p41 = por %p39, %p40
      %p42 = scmp.ne.s32.totalorder %s31, %s32
      %p43 = scmp.eq.s32.totalorder %s23, 0
      %p44 = por %p42, %p43
      %p45 = scmp.ne.s32.totalorder %s31, %s32
      %p46 = scmp.eq.s32.totalorder %s24, 1
      %p47 = por %p45, %p46
      %p49 = scmp.ne.s32.totalorder %s32, %s48
      %p50 = scmp.eq.s32.totalorder %s24, 0
      %p51 = por %p49, %p50
      %s53 = sadd.s32 %s52, 1
      %p56 = scmp.eq.s32.totalorder %s18, 1
      %p57 = scmp.ne.s32.totalorder %s52, %s54
      %p58 = scmp.eq.s32.totalorder %s18, 0
      %p59 = por %p57, %p58
      %p60 = scmp.ne.s32.totalorder %s52, %s54
      %p61 = scmp.eq.s32.totalorder %s23, 1
      %p62 = por %p60, %p61
      %p63 = scmp.ne.s32.totalorder %s54, %s55
      %p64 = scmp.eq.s32.totalorder %s23, 0
      %p65 = por %p63, %p64
      %p66 = scmp.ne.s32.totalorder %s54, %s55
      %p67 = scmp.eq.s32.totalorder %s24, 1
      %p68 = por %p66, %p67
      %p70 = scmp.ne.s32.totalorder %s55, %s69
      %p71 = scmp.eq.s32.totalorder %s24, 0
      %p72 = por %p70, %p71
      %s74 = sadd.s32 %s73, 1
      %p77 = scmp.eq.s32.totalorder %s18, 1
      %p78 = scmp.ne.s32.totalorder %s73, %s75
      %p79 = scmp.eq.s32.totalorder %s18, 0
      %p80 = por %p78, %p79
      %p81 = scmp.ne.s32.totalorder %s73, %s75
      %p82 = scmp.eq.s32.totalorder %s23, 1
      %p83 = por %p81, %p82
      %p84 = scmp.ne.s32.totalorder %s75, %s76
      %p85 = scmp.eq.s32.totalorder %s23, 0
      %p86 = por %p84, %p85
      %p87 = scmp.ne.s32.totalorder %s75, %s76
      %p88 = scmp.eq.s32.totalorder %s24, 1
      %p89 = por %p87, %p88
      %p91 = scmp.ne.s32.totalorder %s76, %s90
      %p92 = scmp.eq.s32.totalorder %s24, 0
      %p93 = por %p91, %p92
      %s95 = sadd.s32 %s94, 1
      %p98 = scmp.eq.s32.totalorder %s18, 1
      %p99 = scmp.ne.s32.totalorder %s94, %s96
      %p100 = scmp.eq.s32.totalorder %s18, 0
      %p101 = por %p99, %p100
      %p102 = scmp.ne.s32.totalorder %s94, %s96
      %p103 = scmp.eq.s32.totalorder %s23, 1
      %p104 = por %p102, %p103
      %p105 = scmp.ne.s32.totalorder %s96, %s97
      %p106 = scmp.eq.s32.totalorder %s23, 0
      %p107 = por %p105, %p106
      %p108 = scmp.ne.s32.totalorder %s96, %s97
      %p109 = scmp.eq.s32.totalorder %s24, 1
      %p110 = por %p108, %p109
      %p112 = scmp.ne.s32.totalorder %s97, %s111
      %p113 = scmp.eq.s32.totalorder %s24, 0
      %p114 = por %p112, %p113
      %s116 = sadd.s32 %s115, 1
      %p119 = scmp.eq.s32.totalorder %s18, 1
      %p120 = scmp.ne.s32.totalorder %s115, %s117
      %p121 = scmp.eq.s32.totalorder %s18, 0
      %p122 = por %p120, %p121
      %p123 = scmp.ne.s32.totalorder %s115, %s117
      %p124 = scmp.eq.s32.totalorder %s23, 1
      %p125 = por %p123, %p124
      %p126 = scmp.ne.s32.totalorder %s117, %s118
      %p127 = scmp.eq.s32.totalorder %s23, 0
      %p128 = por %p126, %p127
      %p129 = scmp.ne.s32.totalorder %s117, %s118
      %p130 = scmp.eq.s32.totalorder %s24, 1
      %p131 = por %p129, %p130
      %p133 = scmp.ne.s32.totalorder %s118, %s132
      %p134 = scmp.eq.s32.totalorder %s24, 0
      %p135 = por %p133, %p134
      %s136 = ssub.s32 %s18, %s25
      %p137 = scmp.eq.s32.totalorder %s136, 0
      %s139 = sadd.s32 %s138, 1
      %s140 = scalar_select %p137, %s138, %s139
      %p143 = pneg %p137
      %p144 = scmp.eq.s32.totalorder %s18, 1
      %p145 = por %p143, %p144
      %p146 = scmp.ne.s32.totalorder %s138, %s141
      %p147 = scmp.eq.s32.totalorder %s18, 0
      %p148 = por %p146, %p147
      %p149 = scmp.ne.s32.totalorder %s138, %s141
      %p150 = scmp.eq.s32.totalorder %s23, 1
      %p151 = por %p149, %p150
      %p152 = scmp.ne.s32.totalorder %s141, %s142
      %p153 = scmp.eq.s32.totalorder %s23, 0
      %p154 = por %p152, %p153
      %p155 = scmp.ne.s32.totalorder %s141, %s142
      %p156 = scmp.eq.s32.totalorder %s24, 1
      %p157 = por %p155, %p156
      %p159 = scmp.ne.s32.totalorder %s142, %s158
      %p160 = scmp.eq.s32.totalorder %s24, 0
      %p161 = por %p159, %p160
      %p162 = scmp.le.s32.totalorder 1, %s18
      %p163 = scmp.lt.s32.totalorder %s18, 3
      %p164 = pnand %p162, %p163
      %p165 = pneg %p164
      // Predicated region
      $region9: #{attention_pallas.1} parent=5 // pred_check
        _
      $region10: #{attention_pallas.1} parent=5 // pred_check_branch
        %167 = sbr.rel (%p164) target = $region12
      $region11: #{attention_pallas.1} parent=5 // pred_region
        %s168 = ssub.s32 %s18, 1
        // Predicated region
        $region13: #{attention_pallas.1} parent=11 // pred_check
          %p169 = pneg %p65
        $region14: #{attention_pallas.1} parent=11 // pred_check_branch
          %171 = sbr.rel (%p169) target = $region16
        $region15: #{attention_pallas.1} parent=11 // pred_region
          %173 = vsyncadd [#allocation6], 0
          %s174 = sshll.u32 %s1, 4
          %s175 = int_to_ptr.hbm [resolvable:$true] %s174
          %s176 = sshll.u32 [#allocation5], 4
          %s177 = int_to_ptr.vmem [resolvable:$true] %s176
          %182 = dma.hbm_to_vmem [thread:$0]  %s175, 6144, %s177, [#allocation6], 384, 384, 24
        $region16: #{attention_pallas.1} parent=11 // pred_fallthru
          _
        // Predicated region
        $region17: #{attention_pallas.1} parent=11 // pred_check
          %p183 = pneg %p86
        $region18: #{attention_pallas.1} parent=11 // pred_check_branch
          %185 = sbr.rel (%p183) target = $region20
        $region19: #{attention_pallas.1} parent=11 // pred_region
          _
        $region20: #{attention_pallas.1} parent=11 // pred_fallthru
          _
        // Predicated region
        $region21: #{attention_pallas.1} parent=11 // pred_check
          %p186 = pneg %p107
        $region22: #{attention_pallas.1} parent=11 // pred_check_branch
          %188 = sbr.rel (%p186) target = $region24
        $region23: #{attention_pallas.1} parent=11 // pred_region
          %190 = vsyncadd [#allocation6], 0
          %s191 = sshll.u32 %s3, 4
          %s192 = int_to_ptr.hbm [resolvable:$true] %s191
          %s193 = sshll.u32 [#allocation7], 4
          %s194 = int_to_ptr.vmem [resolvable:$true] %s193
          %199 = dma.hbm_to_vmem [thread:$0]  %s192, 2048, %s194, [#allocation6], 128, 128, 8
        $region24: #{attention_pallas.1} parent=11 // pred_fallthru
          _
        // Predicated region
        $region25: #{attention_pallas.1} parent=11 // pred_check
          %p200 = pneg %p128
        $region26: #{attention_pallas.1} parent=11 // pred_check_branch
          %202 = sbr.rel (%p200) target = $region28
        $region27: #{attention_pallas.1} parent=11 // pred_region
          _
        $region28: #{attention_pallas.1} parent=11 // pred_fallthru
          _
      $region12: #{attention_pallas.1} parent=5 // pred_fallthru
        _
      %p203 = scmp.lt.s32.totalorder %s18, 2
      // Predicated region
      $region29: #{attention_pallas.1} parent=5 // pred_check
        %p204 = pneg %p203
      $region30: #{attention_pallas.1} parent=5 // pred_check_branch
        %206 = sbr.rel (%p204) target = $region32
      $region31: #{attention_pallas.1} parent=5 // pred_region
        // Predicated region
        $region33: #{attention_pallas.1} parent=31 // pred_check
          %p207 = pneg %p38
        $region34: #{attention_pallas.1} parent=31 // pred_check_branch
          %209 = sbr.rel (%p207) target = $region36
        $region35: #{attention_pallas.1} parent=31 // pred_region
          %s210 = sand.u32 %s28, 1
          %s211 = scalar_lea.sflag [#allocation3], %s210
          %s212 = sand.u32 %s28, 1
          %s213 = smul.addr %s212, 80
          %s214 = scalar_lea.vmem [#allocation2], %s213
          %216 = vsyncadd %s211, 0
          %s217 = smul.addr %s18, 10
          %s218 = smul.addr %s217, 8
          %s219 = scalar_lea.hbm %s0, %s218
          %s220 = sshll.u32 %s219, 4
          %s221 = int_to_ptr.hbm [resolvable:$true] %s220
          %s222 = sshll.u32 %s214, 4
          %s223 = int_to_ptr.vmem [resolvable:$true] %s222
          %228 = dma.hbm_to_vmem [thread:$0]  %s221, 1280, %s223, %s211, 128, 128, 8
        $region36: #{attention_pallas.1} parent=31 // pred_fallthru
          _
      $region32: #{attention_pallas.1} parent=5 // pred_fallthru
        _
      %p229 = scmp.le.s32.totalorder 1, %s18
      %p230 = scmp.lt.s32.totalorder %s18, 3
      %p231 = pnand %p229, %p230
      %p232 = pneg %p231
      // Predicated region
      $region37: #{attention_pallas.1} parent=5 // pred_check
        _
      $region38: #{attention_pallas.1} parent=5 // pred_check_branch
        %234 = sbr.rel (%p231) target = $region40
      $region39: #{attention_pallas.1} parent=5 // pred_region
        %s235 = ssub.s32 %s18, 1
        %s236 = sand.u32 %s31, 1
        %s237 = scalar_lea.sflag [#allocation3], %s236
        %s238 = sand.u32 %s31, 1
        %s239 = smul.addr %s238, 80
        %s240 = scalar_lea.vmem [#allocation2], %s239
        // Predicated region
        $region41: #{attention_pallas.1} parent=39 // pred_check
          %p241 = pneg %p44
        $region42: #{attention_pallas.1} parent=39 // pred_check_branch
          %243 = sbr.rel (%p241) target = $region44
        $region43: #{attention_pallas.1} parent=39 // pred_region
          %245 = dma.done %s237, 1280
        $region44: #{attention_pallas.1} parent=39 // pred_fallthru
          _
        // Predicated region
        $region45: #{attention_pallas.1} parent=39 // pred_check
          %p246 = pneg %p65
        $region46: #{attention_pallas.1} parent=39 // pred_check_branch
          %248 = sbr.rel (%p246) target = $region48
        $region47: #{attention_pallas.1} parent=39 // pred_region
          %250 = dma.done [#allocation6], 6144
        $region48: #{attention_pallas.1} parent=39 // pred_fallthru
          _
        // Predicated region
        $region49: #{attention_pallas.1} parent=39 // pred_check
          %p251 = pneg %p107
        $region50: #{attention_pallas.1} parent=39 // pred_check_branch
          %253 = sbr.rel (%p251) target = $region52
        $region51: #{attention_pallas.1} parent=39 // pred_region
          %255 = dma.done [#allocation6], 2048
        $region52: #{attention_pallas.1} parent=39 // pred_fallthru
          _
        %s256 = sand.u32 %s31, 1
        %s257 = scalar_lea.sflag [#allocation3], %s256
        %s258 = sand.u32 %s31, 1
        %s259 = smul.addr %s258, 80
        %s260 = scalar_lea.vmem [#allocation2], %s259
        %p261 = pneg %p44
        %p262 = pneg %p41
        %p263 = pneg %p65
        %p264 = pneg %p62
        %p265 = pneg %p86
        %p266 = pneg %p83
        %p267 = pneg %p107
        %p268 = pneg %p104
        %p269 = pneg %p128
        %p270 = pneg %p125
        %p271 = pneg %p154
        %p272 = pneg %p151
        %s273 = sand.u32 %s141, 1
        %s274 = scalar_lea.sflag [#allocation4], %s273
        %s275 = sand.u32 %s141, 1
        %s276 = smul.addr %s275, 80
        %s277 = scalar_lea.vmem [#allocation8], %s276
        %v278 = vld [vmem:[%s240] sm:$0xff]
        %v279 = vld [vmem:[%s240 + $0x8] sm:$0xff]
        %v280 = vld [vmem:[%s240 + $0x10] sm:$0xff]
        %v281 = vld [vmem:[%s240 + $0x18] sm:$0xff]
        %v282 = vld [vmem:[%s240 + $0x20] sm:$0xff]
        %v283 = vld [vmem:[%s240 + $0x28] sm:$0xff]
        %v284 = vld [vmem:[%s240 + $0x30] sm:$0xff]
        %v285 = vld [vmem:[%s240 + $0x38] sm:$0xff]
        %v286 = vld [vmem:[%s240 + $0x40] sm:$0xff]
        %v287 = vld [vmem:[%s240 + $0x48] sm:$0xff]
        %v288 = vld [vmem:[#allocation5] sm:$0xff]
        %v289 = vld [vmem:[#allocation5 + $0x8] sm:$0xff]
        %v290 = vld [vmem:[#allocation5 + $0x10] sm:$0xff]
        %v291 = vld [vmem:[#allocation5 + $0x18] sm:$0xff]
        %v292 = vld [vmem:[#allocation5 + $0x20] sm:$0xff]
        %v293 = vld [vmem:[#allocation5 + $0x28] sm:$0xff]
        %v294 = vld [vmem:[#allocation5 + $0x30] sm:$0xff]
        %v295 = vld [vmem:[#allocation5 + $0x38] sm:$0xff]
        %v296 = vld [vmem:[#allocation5 + $0x40] sm:$0xff]
        %v297 = vld [vmem:[#allocation5 + $0x48] sm:$0xff]
        %v298 = vld [vmem:[#allocation5 + $0x50] sm:$0xff]
        %v299 = vld [vmem:[#allocation5 + $0x58] sm:$0xff]
        %v300 = vld [vmem:[#allocation5 + $0x60] sm:$0xff]
        %v301 = vld [vmem:[#allocation5 + $0x68] sm:$0xff]
        %v302 = vld [vmem:[#allocation5 + $0x70] sm:$0xff]
        %v303 = vld [vmem:[#allocation5 + $0x78] sm:$0xff]
        %v304 = vld [vmem:[#allocation5 + $0x80] sm:$0xff]
        %v305 = vld [vmem:[#allocation5 + $0x88] sm:$0xff]
        %v306 = vld [vmem:[#allocation5 + $0x90] sm:$0xff]
        %v307 = vld [vmem:[#allocation5 + $0x98] sm:$0xff]
        %v308 = vld [vmem:[#allocation5 + $0xa0] sm:$0xff]
        %v309 = vld [vmem:[#allocation5 + $0xa8] sm:$0xff]
        %v310 = vld [vmem:[#allocation5 + $0xb0] sm:$0xff]
        %v311 = vld [vmem:[#allocation5 + $0xb8] sm:$0xff]
        %v312 = vld [vmem:[#allocation5 + $0xc0] sm:$0xff]
        %v313 = vld [vmem:[#allocation5 + $0xc8] sm:$0xff]
        %v314 = vld [vmem:[#allocation5 + $0xd0] sm:$0xff]
        %v315 = vld [vmem:[#allocation5 + $0xd8] sm:$0xff]
        %v316 = vld [vmem:[#allocation5 + $0xe0] sm:$0xff]
        %v317 = vld [vmem:[#allocation5 + $0xe8] sm:$0xff]
        %v318 = vld [vmem:[#allocation5 + $0xf0] sm:$0xff]
        %v319 = vld [vmem:[#allocation5 + $0xf8] sm:$0xff]
        %v320 = vld [vmem:[#allocation5 + $0x100] sm:$0xff]
        %v321 = vld [vmem:[#allocation5 + $0x108] sm:$0xff]
        %v322 = vld [vmem:[#allocation5 + $0x110] sm:$0xff]
        %v323 = vld [vmem:[#allocation5 + $0x118] sm:$0xff]
        %v324 = vld [vmem:[#allocation5 + $0x120] sm:$0xff]
        %v325 = vld [vmem:[#allocation5 + $0x128] sm:$0xff]
        %v326 = vld [vmem:[#allocation5 + $0x130] sm:$0xff]
        %v327 = vld [vmem:[#allocation5 + $0x138] sm:$0xff]
        %v328 = vld [vmem:[#allocation5 + $0x140] sm:$0xff]
        %v329 = vld [vmem:[#allocation5 + $0x148] sm:$0xff]
        %v330 = vld [vmem:[#allocation5 + $0x150] sm:$0xff]
        %v331 = vld [vmem:[#allocation5 + $0x158] sm:$0xff]
        %v332 = vld [vmem:[#allocation5 + $0x160] sm:$0xff]
        %v333 = vld [vmem:[#allocation5 + $0x168] sm:$0xff]
        %v334 = vld [vmem:[#allocation5 + $0x170] sm:$0xff]
        %v335 = vld [vmem:[#allocation5 + $0x178] sm:$0xff]
        %v336 = vld [vmem:[%s2] sm:$0x7]
        %v338 = vperm.slane %v336, 0
        %v339 = vperm.slane %v336, 1
        %v340 = vperm.slane %v336, 2
        %344 = vmatpush.msra.mxu0 %v333
        %345 = vmatpush.msra.mxu0 %v330
        %346 = vmatpush.msra.mxu0 %v327
        %347 = vmatpush.msra.mxu0 %v324
        %348 = vmatpush.msra.mxu0 %v321
        %349 = vmatpush.msra.mxu0 %v318
        %350 = vmatpush.msra.mxu0 %v315
        %351 = vmatpush.msra.mxu0 %v312
        %352 = vmatpush.msra.mxu0 %v309
        %353 = vmatpush.msra.mxu0 %v306
        %354 = vmatpush.msra.mxu0 %v303
        %355 = vmatpush.msra.mxu0 %v300
        %356 = vmatpush.msra.mxu0 %v297
        %357 = vmatpush.msra.mxu0 %v294
        %358 = vmatpush.msra.mxu0 %v291
        %359 = vmatpush.msra.mxu0 %v288
        %360 = vmatmul.f32.gmra.mxu0 %v278
        %v361 = vpop.f32.mrf.mxu0
        %v362 = vadd.f32 %v338, %v361
        %363 = vmatmul.f32.gmra.mxu0 %v279
        %v364 = vpop.f32.mrf.mxu0
        %v365 = vadd.f32 %v338, %v364
        %366 = vmatmul.f32.gmra.mxu0 %v280
        %v367 = vpop.f32.mrf.mxu0
        %v368 = vadd.f32 %v338, %v367
        %369 = vmatmul.f32.gmra.mxu0 %v281
        %v370 = vpop.f32.mrf.mxu0
        %v371 = vadd.f32 %v338, %v370
        %372 = vmatmul.f32.gmra.mxu0 %v282
        %v373 = vpop.f32.mrf.mxu0
        %v374 = vadd.f32 %v338, %v373
        %375 = vmatmul.f32.gmra.mxu0 %v283
        %v376 = vpop.f32.mrf.mxu0
        %v377 = vadd.f32 %v338, %v376
        %378 = vmatmul.f32.gmra.mxu0 %v284
        %v379 = vpop.f32.mrf.mxu0
        %v380 = vadd.f32 %v338, %v379
        %381 = vmatmul.f32.gmra.mxu0 %v285
        %v382 = vpop.f32.mrf.mxu0
        %v383 = vadd.f32 %v338, %v382
        %384 = vmatmul.f32.gmra.mxu0 %v286
        %v385 = vpop.f32.mrf.mxu0
        %v386 = vadd.f32 %v338, %v385
        %387 = vmatmul.f32.gmra.mxu0 %v287
        %v388 = vpop.f32.mrf.mxu0
        %v389 = vadd.f32 %v338, %v388
        %390 = vdwg.mxu0
        %391 = vmatpush.msra.mxu0 %v334
        %392 = vmatpush.msra.mxu0 %v331
        %393 = vmatpush.msra.mxu0 %v328
        %394 = vmatpush.msra.mxu0 %v325
        %395 = vmatpush.msra.mxu0 %v322
        %396 = vmatpush.msra.mxu0 %v319
        %397 = vmatpush.msra.mxu0 %v316
        %398 = vmatpush.msra.mxu0 %v313
        %399 = vmatpush.msra.mxu0 %v310
        %400 = vmatpush.msra.mxu0 %v307
        %401 = vmatpush.msra.mxu0 %v304
        %402 = vmatpush.msra.mxu0 %v301
        %403 = vmatpush.msra.mxu0 %v298
        %404 = vmatpush.msra.mxu0 %v295
        %405 = vmatpush.msra.mxu0 %v292
        %406 = vmatpush.msra.mxu0 %v289
        %407 = vmatmul.f32.gmra.mxu0 %v278
        %v408 = vpop.f32.mrf.mxu0
        %v409 = vadd.f32 %v339, %v408
        %410 = vmatmul.f32.gmra.mxu0 %v279
        %v411 = vpop.f32.mrf.mxu0
        %v412 = vadd.f32 %v339, %v411
        %413 = vmatmul.f32.gmra.mxu0 %v280
        %v414 = vpop.f32.mrf.mxu0
        %v415 = vadd.f32 %v339, %v414
        %416 = vmatmul.f32.gmra.mxu0 %v281
        %v417 = vpop.f32.mrf.mxu0
        %v418 = vadd.f32 %v339, %v417
        %419 = vmatmul.f32.gmra.mxu0 %v282
        %v420 = vpop.f32.mrf.mxu0
        %v421 = vadd.f32 %v339, %v420
        %422 = vmatmul.f32.gmra.mxu0 %v283
        %v423 = vpop.f32.mrf.mxu0
        %v424 = vadd.f32 %v339, %v423
        %425 = vmatmul.f32.gmra.mxu0 %v284
        %v426 = vpop.f32.mrf.mxu0
        %v427 = vadd.f32 %v339, %v426
        %428 = vmatmul.f32.gmra.mxu0 %v285
        %v429 = vpop.f32.mrf.mxu0
        %v430 = vadd.f32 %v339, %v429
        %431 = vmatmul.f32.gmra.mxu0 %v286
        %v432 = vpop.f32.mrf.mxu0
        %v433 = vadd.f32 %v339, %v432
        %434 = vmatmul.f32.gmra.mxu0 %v287
        %v435 = vpop.f32.mrf.mxu0
        %v436 = vadd.f32 %v339, %v435
        %437 = vdwg.mxu0
        %438 = vmatpush.msra.mxu0 %v335
        %439 = vmatpush.msra.mxu0 %v332
        %440 = vmatpush.msra.mxu0 %v329
        %441 = vmatpush.msra.mxu0 %v326
        %442 = vmatpush.msra.mxu0 %v323
        %443 = vmatpush.msra.mxu0 %v320
        %444 = vmatpush.msra.mxu0 %v317
        %445 = vmatpush.msra.mxu0 %v314
        %446 = vmatpush.msra.mxu0 %v311
        %447 = vmatpush.msra.mxu0 %v308
        %448 = vmatpush.msra.mxu0 %v305
        %449 = vmatpush.msra.mxu0 %v302
        %450 = vmatpush.msra.mxu0 %v299
        %451 = vmatpush.msra.mxu0 %v296
        %452 = vmatpush.msra.mxu0 %v293
        %453 = vmatpush.msra.mxu0 %v290
        %454 = vmatmul.f32.gmra.mxu0 %v278
        %v455 = vpop.f32.mrf.mxu0
        %v456 = vadd.f32 %v340, %v455
        %457 = vmatmul.f32.gmra.mxu0 %v279
        %v458 = vpop.f32.mrf.mxu0
        %v459 = vadd.f32 %v340, %v458
        %460 = vmatmul.f32.gmra.mxu0 %v280
        %v461 = vpop.f32.mrf.mxu0
        %v462 = vadd.f32 %v340, %v461
        %463 = vmatmul.f32.gmra.mxu0 %v281
        %v464 = vpop.f32.mrf.mxu0
        %v465 = vadd.f32 %v340, %v464
        %466 = vmatmul.f32.gmra.mxu0 %v282
        %v467 = vpop.f32.mrf.mxu0
        %v468 = vadd.f32 %v340, %v467
        %469 = vmatmul.f32.gmra.mxu0 %v283
        %v470 = vpop.f32.mrf.mxu0
        %v471 = vadd.f32 %v340, %v470
        %472 = vmatmul.f32.gmra.mxu0 %v284
        %v473 = vpop.f32.mrf.mxu0
        %v474 = vadd.f32 %v340, %v473
        %475 = vmatmul.f32.gmra.mxu0 %v285
        %v476 = vpop.f32.mrf.mxu0
        %v477 = vadd.f32 %v340, %v476
        %478 = vmatmul.f32.gmra.mxu0 %v286
        %v479 = vpop.f32.mrf.mxu0
        %v480 = vadd.f32 %v340, %v479
        %481 = vmatmul.f32.gmra.mxu0 %v287
        %v482 = vpop.f32.mrf.mxu0
        %v483 = vadd.f32 %v340, %v482
        %484 = vdwg.mxu0
        %v485 = vlaneseq
        %v486 = vshrl.u32 %v485, 7
        %v487 = vadd.s32 %v486, 8
        %v488 = vadd.s32 %v486, 16
        %v489 = vadd.s32 %v486, 24
        %v490 = vadd.s32 %v486, 32
        %v491 = vadd.s32 %v486, 40
        %v492 = vadd.s32 %v486, 48
        %v493 = vadd.s32 %v486, 56
        %v494 = vadd.s32 %v486, 64
        %v495 = vadd.s32 %v486, 72
        %v496 = vlaneseq
        %v497 = vand.u32 %v496, 127
        %vm498 = vcmp.lt.s32.totalorder %v486, 16
        %vm499 = vcmp.lt.s32.totalorder %v487, 16
        %vm500 = vcmp.lt.s32.totalorder %v488, 16
        %vm501 = vcmp.lt.s32.totalorder %v489, 16
        %vm502 = vcmp.lt.s32.totalorder %v490, 16
        %vm503 = vcmp.lt.s32.totalorder %v491, 16
        %vm504 = vcmp.lt.s32.totalorder %v492, 16
        %vm505 = vcmp.lt.s32.totalorder %v493, 16
        %vm506 = vcmp.lt.s32.totalorder %v494, 16
        %vm507 = vcmp.lt.s32.totalorder %v495, 16
        %vm508 = vcmp.ge.s32.totalorder %v497, 16
        %vm509 = vmand %vm498, %vm508
        %vm510 = vmand %vm499, %vm508
        %vm511 = vmand %vm500, %vm508
        %vm512 = vmand %vm501, %vm508
        %vm513 = vmand %vm502, %vm508
        %vm514 = vmand %vm503, %vm508
        %vm515 = vmand %vm504, %vm508
        %vm516 = vmand %vm505, %vm508
        %vm517 = vmand %vm506, %vm508
        %vm518 = vmand %vm507, %vm508
        %v519 = vsel %vm509, -1e+30, 0.0
        %v520 = vsel %vm510, -1e+30, 0.0
        %v521 = vsel %vm511, -1e+30, 0.0
        %v522 = vsel %vm512, -1e+30, 0.0
        %v523 = vsel %vm513, -1e+30, 0.0
        %v524 = vsel %vm514, -1e+30, 0.0
        %v525 = vsel %vm515, -1e+30, 0.0
        %v526 = vsel %vm516, -1e+30, 0.0
        %v527 = vsel %vm517, -1e+30, 0.0
        %v528 = vsel %vm518, -1e+30, 0.0
        %vm529 = vcmask 130048
        %v531 = vsel %vm529, %v362, 0
        %v534 = vsel %vm529, %v365, 0
        %v537 = vsel %vm529, %v368, 0
        %v540 = vsel %vm529, %v371, 0
        %v543 = vsel %vm529, %v374, 0
        %v546 = vsel %vm529, %v377, 0
        %v549 = vsel %vm529, %v380, 0
        %v552 = vsel %vm529, %v383, 0
        %v555 = vsel %vm529, %v386, 0
        %v558 = vsel %vm529, %v389, 0
        %v561 = vsel %vm529, %v409, 0
        %v564 = vsel %vm529, %v412, 0
        %v567 = vsel %vm529, %v415, 0
        %v570 = vsel %vm529, %v418, 0
        %v573 = vsel %vm529, %v421, 0
        %v576 = vsel %vm529, %v424, 0
        %v579 = vsel %vm529, %v427, 0
        %v582 = vsel %vm529, %v430, 0
        %v585 = vsel %vm529, %v433, 0
        %v588 = vsel %vm529, %v436, 0
        %590 = vmatpush.xpose.msra.mxu0 0.0
        %591 = vmatpush.xpose.msra.mxu0 0.0
        %592 = vmatpush.xpose.msra.mxu0 0.0
        %593 = vmatpush.xpose.msra.mxu0 0.0
        %594 = vmatpush.xpose.msra.mxu0 0.0
        %595 = vmatpush.xpose.msra.mxu0 0.0
        %596 = vmatpush.xpose.msra.mxu0 %v588
        %597 = vmatpush.xpose.msra.mxu0 %v585
        %598 = vmatpush.xpose.msra.mxu0 %v582
        %599 = vmatpush.xpose.msra.mxu0 %v579
        %600 = vmatpush.xpose.msra.mxu0 %v576
        %601 = vmatpush.xpose.msra.mxu0 %v573
        %602 = vmatpush.xpose.msra.mxu0 %v570
        %603 = vmatpush.xpose.msra.mxu0 %v567
        %604 = vmatpush.xpose.msra.mxu0 %v564
        %605 = vmatpush.xpose.msra.mxu0 %v561
        %606 = vmatmul.f32.gmra.mxu0 %v531
        %v607 = vpop.f32.mrf.mxu0
        %v608 = vadd.f32 0.0, %v607
        %609 = vmatmul.f32.gmra.mxu0 %v534
        %v610 = vpop.f32.mrf.mxu0
        %v611 = vadd.f32 0.0, %v610
        %612 = vmatmul.f32.gmra.mxu0 %v537
        %v613 = vpop.f32.mrf.mxu0
        %v614 = vadd.f32 0.0, %v613
        %615 = vmatmul.f32.gmra.mxu0 %v540
        %v616 = vpop.f32.mrf.mxu0
        %v617 = vadd.f32 0.0, %v616
        %618 = vmatmul.f32.gmra.mxu0 %v543
        %v619 = vpop.f32.mrf.mxu0
        %v620 = vadd.f32 0.0, %v619
        %621 = vmatmul.f32.gmra.mxu0 %v546
        %v622 = vpop.f32.mrf.mxu0
        %v623 = vadd.f32 0.0, %v622
        %624 = vmatmul.f32.gmra.mxu0 %v549
        %v625 = vpop.f32.mrf.mxu0
        %v626 = vadd.f32 0.0, %v625
        %627 = vmatmul.f32.gmra.mxu0 %v552
        %v628 = vpop.f32.mrf.mxu0
        %v629 = vadd.f32 0.0, %v628
        %630 = vmatmul.f32.gmra.mxu0 %v555
        %v631 = vpop.f32.mrf.mxu0
        %v632 = vadd.f32 0.0, %v631
        %633 = vmatmul.f32.gmra.mxu0 %v558
        %v634 = vpop.f32.mrf.mxu0
        %v635 = vadd.f32 0.0, %v634
        %636 = vdwg.mxu0
        %v637 = vmul.f32 %v608, 0.25
        %v638 = vmul.f32 %v611, 0.25
        %v639 = vmul.f32 %v614, 0.25
        %v640 = vmul.f32 %v617, 0.25
        %v641 = vmul.f32 %v620, 0.25
        %v642 = vmul.f32 %v623, 0.25
        %v643 = vmul.f32 %v626, 0.25
        %v644 = vmul.f32 %v629, 0.25
        %v645 = vmul.f32 %v632, 0.25
        %v646 = vmul.f32 %v635, 0.25
        %v647 = vadd.f32 %v637, %v519
        %v648 = vadd.f32 %v638, %v520
        %v649 = vadd.f32 %v639, %v521
        %v650 = vadd.f32 %v640, %v522
        %v651 = vadd.f32 %v641, %v523
        %v652 = vadd.f32 %v642, %v524
        %v653 = vadd.f32 %v643, %v525
        %v654 = vadd.f32 %v644, %v526
        %v655 = vadd.f32 %v645, %v527
        %v656 = vadd.f32 %v646, %v528
        %vm657 = vcmask 654336
        %v658 = vsel %vm657, %v647, -inf
        %659 = vmax.xlane.f32.xlu0 %v658
        %v660 = vpop.xlane.xlu0 %659
        %v661 = vsel %vm657, %v648, -inf
        %662 = vmax.xlane.f32.xlu0 %v661
        %v663 = vpop.xlane.xlu0 %662
        %v664 = vsel %vm657, %v649, -inf
        %665 = vmax.xlane.f32.xlu0 %v664
        %v666 = vpop.xlane.xlu0 %665
        %v667 = vsel %vm657, %v650, -inf
        %668 = vmax.xlane.f32.xlu0 %v667
        %v669 = vpop.xlane.xlu0 %668
        %v670 = vsel %vm657, %v651, -inf
        %671 = vmax.xlane.f32.xlu0 %v670
        %v672 = vpop.xlane.xlu0 %671
        %v673 = vsel %vm657, %v652, -inf
        %674 = vmax.xlane.f32.xlu0 %v673
        %v675 = vpop.xlane.xlu0 %674
        %v676 = vsel %vm657, %v653, -inf
        %677 = vmax.xlane.f32.xlu0 %v676
        %v678 = vpop.xlane.xlu0 %677
        %v679 = vsel %vm657, %v654, -inf
        %680 = vmax.xlane.f32.xlu0 %v679
        %v681 = vpop.xlane.xlu0 %680
        %v682 = vsel %vm657, %v655, -inf
        %683 = vmax.xlane.f32.xlu0 %v682
        %v684 = vpop.xlane.xlu0 %683
        %v685 = vsel %vm657, %v656, -inf
        %686 = vmax.xlane.f32.xlu0 %v685
        %v687 = vpop.xlane.xlu0 %686
        %v688 = vsub.f32 %v647, %v660
        %v689 = vsub.f32 %v648, %v663
        %v690 = vsub.f32 %v649, %v666
        %v691 = vsub.f32 %v650, %v669
        %v692 = vsub.f32 %v651, %v672
        %v693 = vsub.f32 %v652, %v675
        %v694 = vsub.f32 %v653, %v678
        %v695 = vsub.f32 %v654, %v681
        %v696 = vsub.f32 %v655, %v684
        %v697 = vsub.f32 %v656, %v687
        %v698 = vmul.f32 %v688, 1.442695
        %v699 = vpow.pop %v698
        %v700 = vmul.f32 %v689, 1.442695
        %v701 = vpow.pop %v700
        %v702 = vmul.f32 %v690, 1.442695
        %v703 = vpow.pop %v702
        %v704 = vmul.f32 %v691, 1.442695
        %v705 = vpow.pop %v704
        %v706 = vmul.f32 %v692, 1.442695
        %v707 = vpow.pop %v706
        %v708 = vmul.f32 %v693, 1.442695
        %v709 = vpow.pop %v708
        %v710 = vmul.f32 %v694, 1.442695
        %v711 = vpow.pop %v710
        %v712 = vmul.f32 %v695, 1.442695
        %v713 = vpow.pop %v712
        %v714 = vmul.f32 %v696, 1.442695
        %v715 = vpow.pop %v714
        %v716 = vmul.f32 %v697, 1.442695
        %v717 = vpow.pop %v716
        %v718 = vsel %vm657, %v699, 0.0
        %719 = vadd.xlane.f32.xlu0 %v718
        %v720 = vpop.xlane.xlu0 %719
        %v721 = vsel %vm657, %v701, 0.0
        %722 = vadd.xlane.f32.xlu0 %v721
        %v723 = vpop.xlane.xlu0 %722
        %v724 = vsel %vm657, %v703, 0.0
        %725 = vadd.xlane.f32.xlu0 %v724
        %v726 = vpop.xlane.xlu0 %725
        %v727 = vsel %vm657, %v705, 0.0
        %728 = vadd.xlane.f32.xlu0 %v727
        %v729 = vpop.xlane.xlu0 %728
        %v730 = vsel %vm657, %v707, 0.0
        %731 = vadd.xlane.f32.xlu0 %v730
        %v732 = vpop.xlane.xlu0 %731
        %v733 = vsel %vm657, %v709, 0.0
        %734 = vadd.xlane.f32.xlu0 %v733
        %v735 = vpop.xlane.xlu0 %734
        %v736 = vsel %vm657, %v711, 0.0
        %737 = vadd.xlane.f32.xlu0 %v736
        %v738 = vpop.xlane.xlu0 %737
        %v739 = vsel %vm657, %v713, 0.0
        %740 = vadd.xlane.f32.xlu0 %v739
        %v741 = vpop.xlane.xlu0 %740
        %v742 = vsel %vm657, %v715, 0.0
        %743 = vadd.xlane.f32.xlu0 %v742
        %v744 = vpop.xlane.xlu0 %743
        %v745 = vsel %vm657, %v717, 0.0
        %746 = vadd.xlane.f32.xlu0 %v745
        %v747 = vpop.xlane.xlu0 %746
        %v749 = vsel %vm657, %v699, 0
        %v752 = vsel %vm657, %v701, 0
        %v755 = vsel %vm657, %v703, 0
        %v758 = vsel %vm657, %v705, 0
        %v761 = vsel %vm657, %v707, 0
        %v764 = vsel %vm657, %v709, 0
        %v767 = vsel %vm657, %v711, 0
        %v770 = vsel %vm657, %v713, 0
        %v773 = vsel %vm657, %v715, 0
        %v776 = vsel %vm657, %v717, 0
        %778 = vmatpush.msra.mxu0 0.0
        %779 = vmatpush.msra.mxu0 0.0
        %780 = vmatpush.msra.mxu0 0.0
        %781 = vmatpush.msra.mxu0 0.0
        %782 = vmatpush.msra.mxu0 0.0
        %783 = vmatpush.msra.mxu0 0.0
        %784 = vmatpush.msra.mxu0 %v483
        %785 = vmatpush.msra.mxu0 %v480
        %786 = vmatpush.msra.mxu0 %v477
        %787 = vmatpush.msra.mxu0 %v474
        %788 = vmatpush.msra.mxu0 %v471
        %789 = vmatpush.msra.mxu0 %v468
        %790 = vmatpush.msra.mxu0 %v465
        %791 = vmatpush.msra.mxu0 %v462
        %792 = vmatpush.msra.mxu0 %v459
        %793 = vmatpush.msra.mxu0 %v456
        %794 = vmatmul.f32.gmra.mxu0 %v749
        %v795 = vpop.f32.mrf.mxu0
        %v796 = vadd.f32 0.0, %v795
        %797 = vmatmul.f32.gmra.mxu0 %v752
        %v798 = vpop.f32.mrf.mxu0
        %v799 = vadd.f32 0.0, %v798
        %800 = vmatmul.f32.gmra.mxu0 %v755
        %v801 = vpop.f32.mrf.mxu0
        %v802 = vadd.f32 0.0, %v801
        %803 = vmatmul.f32.gmra.mxu0 %v758
        %v804 = vpop.f32.mrf.mxu0
        %v805 = vadd.f32 0.0, %v804
        %806 = vmatmul.f32.gmra.mxu0 %v761
        %v807 = vpop.f32.mrf.mxu0
        %v808 = vadd.f32 0.0, %v807
        %809 = vmatmul.f32.gmra.mxu0 %v764
        %v810 = vpop.f32.mrf.mxu0
        %v811 = vadd.f32 0.0, %v810
        %812 = vmatmul.f32.gmra.mxu0 %v767
        %v813 = vpop.f32.mrf.mxu0
        %v814 = vadd.f32 0.0, %v813
        %815 = vmatmul.f32.gmra.mxu0 %v770
        %v816 = vpop.f32.mrf.mxu0
        %v817 = vadd.f32 0.0, %v816
        %818 = vmatmul.f32.gmra.mxu0 %v773
        %v819 = vpop.f32.mrf.mxu0
        %v820 = vadd.f32 0.0, %v819
        %821 = vmatmul.f32.gmra.mxu0 %v776
        %v822 = vpop.f32.mrf.mxu0
        %v823 = vadd.f32 0.0, %v822
        %824 = vdwg.mxu0
        %v825 = vrcp.pop %v720
        %v826 = vrcp.pop %v723
        %v827 = vrcp.pop %v726
        %v828 = vrcp.pop %v729
        %v829 = vrcp.pop %v732
        %v830 = vrcp.pop %v735
        %v831 = vrcp.pop %v738
        %v832 = vrcp.pop %v741
        %v833 = vrcp.pop %v744
        %v834 = vrcp.pop %v747
        %v835 = vmul.f32 %v796, %v825
        %v836 = vmul.f32 %v799, %v826
        %v837 = vmul.f32 %v802, %v827
        %v838 = vmul.f32 %v805, %v828
        %v839 = vmul.f32 %v808, %v829
        %v840 = vmul.f32 %v811, %v830
        %v841 = vmul.f32 %v814, %v831
        %v842 = vmul.f32 %v817, %v832
        %v843 = vmul.f32 %v820, %v833
        %v844 = vmul.f32 %v823, %v834
        %845 = vrot.lane.b32.xlu0 %v362, 112
        %v846 = vpop.permute.xlu0 %845
        %847 = vrot.lane.b32.xlu0 %v365, 112
        %v848 = vpop.permute.xlu0 %847
        %849 = vrot.lane.b32.xlu0 %v368, 112
        %v850 = vpop.permute.xlu0 %849
        %851 = vrot.lane.b32.xlu0 %v371, 112
        %v852 = vpop.permute.xlu0 %851
        %853 = vrot.lane.b32.xlu0 %v374, 112
        %v854 = vpop.permute.xlu0 %853
        %855 = vrot.lane.b32.xlu0 %v377, 112
        %v856 = vpop.permute.xlu0 %855
        %857 = vrot.lane.b32.xlu0 %v380, 112
        %v858 = vpop.permute.xlu0 %857
        %859 = vrot.lane.b32.xlu0 %v383, 112
        %v860 = vpop.permute.xlu0 %859
        %861 = vrot.lane.b32.xlu0 %v386, 112
        %v862 = vpop.permute.xlu0 %861
        %863 = vrot.lane.b32.xlu0 %v389, 112
        %v864 = vpop.permute.xlu0 %863
        %865 = vrot.lane.b32.xlu0 %v409, 112
        %v866 = vpop.permute.xlu0 %865
        %867 = vrot.lane.b32.xlu0 %v412, 112
        %v868 = vpop.permute.xlu0 %867
        %869 = vrot.lane.b32.xlu0 %v415, 112
        %v870 = vpop.permute.xlu0 %869
        %871 = vrot.lane.b32.xlu0 %v418, 112
        %v872 = vpop.permute.xlu0 %871
        %873 = vrot.lane.b32.xlu0 %v421, 112
        %v874 = vpop.permute.xlu0 %873
        %875 = vrot.lane.b32.xlu0 %v424, 112
        %v876 = vpop.permute.xlu0 %875
        %877 = vrot.lane.b32.xlu0 %v427, 112
        %v878 = vpop.permute.xlu0 %877
        %879 = vrot.lane.b32.xlu0 %v430, 112
        %v880 = vpop.permute.xlu0 %879
        %881 = vrot.lane.b32.xlu0 %v433, 112
        %v882 = vpop.permute.xlu0 %881
        %883 = vrot.lane.b32.xlu0 %v436, 112
        %v884 = vpop.permute.xlu0 %883
        %v885 = vsel %vm529, %v846, 0
        %v887 = vsel %vm529, %v848, 0
        %v889 = vsel %vm529, %v850, 0
        %v891 = vsel %vm529, %v852, 0
        %v893 = vsel %vm529, %v854, 0
        %v895 = vsel %vm529, %v856, 0
        %v897 = vsel %vm529, %v858, 0
        %v899 = vsel %vm529, %v860, 0
        %v901 = vsel %vm529, %v862, 0
        %v903 = vsel %vm529, %v864, 0
        %v905 = vsel %vm529, %v866, 0
        %v907 = vsel %vm529, %v868, 0
        %v909 = vsel %vm529, %v870, 0
        %v911 = vsel %vm529, %v872, 0
        %v913 = vsel %vm529, %v874, 0
        %v915 = vsel %vm529, %v876, 0
        %v917 = vsel %vm529, %v878, 0
        %v919 = vsel %vm529, %v880, 0
        %v921 = vsel %vm529, %v882, 0
        %v923 = vsel %vm529, %v884, 0
        %925 = vmatpush.xpose.msra.mxu0 0.0
        %926 = vmatpush.xpose.msra.mxu0 0.0
        %927 = vmatpush.xpose.msra.mxu0 0.0
        %928 = vmatpush.xpose.msra.mxu0 0.0
        %929 = vmatpush.xpose.msra.mxu0 0.0
        %930 = vmatpush.xpose.msra.mxu0 0.0
        %931 = vmatpush.xpose.msra.mxu0 %v923
        %932 = vmatpush.xpose.msra.mxu0 %v921
        %933 = vmatpush.xpose.msra.mxu0 %v919
        %934 = vmatpush.xpose.msra.mxu0 %v917
        %935 = vmatpush.xpose.msra.mxu0 %v915
        %936 = vmatpush.xpose.msra.mxu0 %v913
        %937 = vmatpush.xpose.msra.mxu0 %v911
        %938 = vmatpush.xpose.msra.mxu0 %v909
        %939 = vmatpush.xpose.msra.mxu0 %v907
        %940 = vmatpush.xpose.msra.mxu0 %v905
        %941 = vmatmul.f32.gmra.mxu0 %v885
        %v942 = vpop.f32.mrf.mxu0
        %v943 = vadd.f32 0.0, %v942
        %944 = vmatmul.f32.gmra.mxu0 %v887
        %v945 = vpop.f32.mrf.mxu0
        %v946 = vadd.f32 0.0, %v945
        %947 = vmatmul.f32.gmra.mxu0 %v889
        %v948 = vpop.f32.mrf.mxu0
        %v949 = vadd.f32 0.0, %v948
        %950 = vmatmul.f32.gmra.mxu0 %v891
        %v951 = vpop.f32.mrf.mxu0
        %v952 = vadd.f32 0.0, %v951
        %953 = vmatmul.f32.gmra.mxu0 %v893
        %v954 = vpop.f32.mrf.mxu0
        %v955 = vadd.f32 0.0, %v954
        %956 = vmatmul.f32.gmra.mxu0 %v895
        %v957 = vpop.f32.mrf.mxu0
        %v958 = vadd.f32 0.0, %v957
        %959 = vmatmul.f32.gmra.mxu0 %v897
        %v960 = vpop.f32.mrf.mxu0
        %v961 = vadd.f32 0.0, %v960
        %962 = vmatmul.f32.gmra.mxu0 %v899
        %v963 = vpop.f32.mrf.mxu0
        %v964 = vadd.f32 0.0, %v963
        %965 = vmatmul.f32.gmra.mxu0 %v901
        %v966 = vpop.f32.mrf.mxu0
        %v967 = vadd.f32 0.0, %v966
        %968 = vmatmul.f32.gmra.mxu0 %v903
        %v969 = vpop.f32.mrf.mxu0
        %v970 = vadd.f32 0.0, %v969
        %971 = vdwg.mxu0
        %v972 = vmul.f32 %v943, 0.25
        %v973 = vmul.f32 %v946, 0.25
        %v974 = vmul.f32 %v949, 0.25
        %v975 = vmul.f32 %v952, 0.25
        %v976 = vmul.f32 %v955, 0.25
        %v977 = vmul.f32 %v958, 0.25
        %v978 = vmul.f32 %v961, 0.25
        %v979 = vmul.f32 %v964, 0.25
        %v980 = vmul.f32 %v967, 0.25
        %v981 = vmul.f32 %v970, 0.25
        %v982 = vadd.f32 %v972, %v519
        %v983 = vadd.f32 %v973, %v520
        %v984 = vadd.f32 %v974, %v521
        %v985 = vadd.f32 %v975, %v522
        %v986 = vadd.f32 %v976, %v523
        %v987 = vadd.f32 %v977, %v524
        %v988 = vadd.f32 %v978, %v525
        %v989 = vadd.f32 %v979, %v526
        %v990 = vadd.f32 %v980, %v527
        %v991 = vadd.f32 %v981, %v528
        %v992 = vsel %vm657, %v982, -inf
        %993 = vmax.xlane.f32.xlu0 %v992
        %v994 = vpop.xlane.xlu0 %993
        %v995 = vsel %vm657, %v983, -inf
        %996 = vmax.xlane.f32.xlu0 %v995
        %v997 = vpop.xlane.xlu0 %996
        %v998 = vsel %vm657, %v984, -inf
        %999 = vmax.xlane.f32.xlu0 %v998
        %v1000 = vpop.xlane.xlu0 %999
        %v1001 = vsel %vm657, %v985, -inf
        %1002 = vmax.xlane.f32.xlu0 %v1001
        %v1003 = vpop.xlane.xlu0 %1002
        %v1004 = vsel %vm657, %v986, -inf
        %1005 = vmax.xlane.f32.xlu0 %v1004
        %v1006 = vpop.xlane.xlu0 %1005
        %v1007 = vsel %vm657, %v987, -inf
        %1008 = vmax.xlane.f32.xlu0 %v1007
        %v1009 = vpop.xlane.xlu0 %1008
        %v1010 = vsel %vm657, %v988, -inf
        %1011 = vmax.xlane.f32.xlu0 %v1010
        %v1012 = vpop.xlane.xlu0 %1011
        %v1013 = vsel %vm657, %v989, -inf
        %1014 = vmax.xlane.f32.xlu0 %v1013
        %v1015 = vpop.xlane.xlu0 %1014
        %v1016 = vsel %vm657, %v990, -inf
        %1017 = vmax.xlane.f32.xlu0 %v1016
        %v1018 = vpop.xlane.xlu0 %1017
        %v1019 = vsel %vm657, %v991, -inf
        %1020 = vmax.xlane.f32.xlu0 %v1019
        %v1021 = vpop.xlane.xlu0 %1020
        %v1022 = vsub.f32 %v982, %v994
        %v1023 = vsub.f32 %v983, %v997
        %v1024 = vsub.f32 %v984, %v1000
        %v1025 = vsub.f32 %v985, %v1003
        %v1026 = vsub.f32 %v986, %v1006
        %v1027 = vsub.f32 %v987, %v1009
        %v1028 = vsub.f32 %v988, %v1012
        %v1029 = vsub.f32 %v989, %v1015
        %v1030 = vsub.f32 %v990, %v1018
        %v1031 = vsub.f32 %v991, %v1021
        %v1032 = vmul.f32 %v1022, 1.442695
        %v1033 = vpow.pop %v1032
        %v1034 = vmul.f32 %v1023, 1.442695
        %v1035 = vpow.pop %v1034
        %v1036 = vmul.f32 %v1024, 1.442695
        %v1037 = vpow.pop %v1036
        %v1038 = vmul.f32 %v1025, 1.442695
        %v1039 = vpow.pop %v1038
        %v1040 = vmul.f32 %v1026, 1.442695
        %v1041 = vpow.pop %v1040
        %v1042 = vmul.f32 %v1027, 1.442695
        %v1043 = vpow.pop %v1042
        %v1044 = vmul.f32 %v1028, 1.442695
        %v1045 = vpow.pop %v1044
        %v1046 = vmul.f32 %v1029, 1.442695
        %v1047 = vpow.pop %v1046
        %v1048 = vmul.f32 %v1030, 1.442695
        %v1049 = vpow.pop %v1048
        %v1050 = vmul.f32 %v1031, 1.442695
        %v1051 = vpow.pop %v1050
        %v1052 = vsel %vm657, %v1033, 0.0
        %1053 = vadd.xlane.f32.xlu0 %v1052
        %v1054 = vpop.xlane.xlu0 %1053
        %v1055 = vsel %vm657, %v1035, 0.0
        %1056 = vadd.xlane.f32.xlu0 %v1055
        %v1057 = vpop.xlane.xlu0 %1056
        %v1058 = vsel %vm657, %v1037, 0.0
        %1059 = vadd.xlane.f32.xlu0 %v1058
        %v1060 = vpop.xlane.xlu0 %1059
        %v1061 = vsel %vm657, %v1039, 0.0
        %1062 = vadd.xlane.f32.xlu0 %v1061
        %v1063 = vpop.xlane.xlu0 %1062
        %v1064 = vsel %vm657, %v1041, 0.0
        %1065 = vadd.xlane.f32.xlu0 %v1064
        %v1066 = vpop.xlane.xlu0 %1065
        %v1067 = vsel %vm657, %v1043, 0.0
        %1068 = vadd.xlane.f32.xlu0 %v1067
        %v1069 = vpop.xlane.xlu0 %1068
        %v1070 = vsel %vm657, %v1045, 0.0
        %1071 = vadd.xlane.f32.xlu0 %v1070
        %v1072 = vpop.xlane.xlu0 %1071
        %v1073 = vsel %vm657, %v1047, 0.0
        %1074 = vadd.xlane.f32.xlu0 %v1073
        %v1075 = vpop.xlane.xlu0 %1074
        %v1076 = vsel %vm657, %v1049, 0.0
        %1077 = vadd.xlane.f32.xlu0 %v1076
        %v1078 = vpop.xlane.xlu0 %1077
        %v1079 = vsel %vm657, %v1051, 0.0
        %1080 = vadd.xlane.f32.xlu0 %v1079
        %v1081 = vpop.xlane.xlu0 %1080
        %1092 = vrot.lane.b32.xlu0 %v456, 112
        %v1093 = vpop.permute.xlu0 %1092
        %1094 = vrot.lane.b32.xlu0 %v459, 112
        %v1095 = vpop.permute.xlu0 %1094
        %1096 = vrot.lane.b32.xlu0 %v462, 112
        %v1097 = vpop.permute.xlu0 %1096
        %1098 = vrot.lane.b32.xlu0 %v465, 112
        %v1099 = vpop.permute.xlu0 %1098
        %1100 = vrot.lane.b32.xlu0 %v468, 112
        %v1101 = vpop.permute.xlu0 %1100
        %1102 = vrot.lane.b32.xlu0 %v471, 112
        %v1103 = vpop.permute.xlu0 %1102
        %1104 = vrot.lane.b32.xlu0 %v474, 112
        %v1105 = vpop.permute.xlu0 %1104
        %1106 = vrot.lane.b32.xlu0 %v477, 112
        %v1107 = vpop.permute.xlu0 %1106
        %1108 = vrot.lane.b32.xlu0 %v480, 112
        %v1109 = vpop.permute.xlu0 %1108
        %1110 = vrot.lane.b32.xlu0 %v483, 112
        %v1111 = vpop.permute.xlu0 %1110
        %v1123 = vsel %vm657, %v1033, 0
        %v1126 = vsel %vm657, %v1035, 0
        %v1129 = vsel %vm657, %v1037, 0
        %v1132 = vsel %vm657, %v1039, 0
        %v1135 = vsel %vm657, %v1041, 0
        %v1138 = vsel %vm657, %v1043, 0
        %v1141 = vsel %vm657, %v1045, 0
        %v1144 = vsel %vm657, %v1047, 0
        %v1147 = vsel %vm657, %v1049, 0
        %v1150 = vsel %vm657, %v1051, 0
        %1152 = vmatpush.msra.mxu0 0.0
        %1153 = vmatpush.msra.mxu0 0.0
        %1154 = vmatpush.msra.mxu0 0.0
        %1155 = vmatpush.msra.mxu0 0.0
        %1156 = vmatpush.msra.mxu0 0.0
        %1157 = vmatpush.msra.mxu0 0.0
        %1158 = vmatpush.msra.mxu0 %v1111
        %1159 = vmatpush.msra.mxu0 %v1109
        %1160 = vmatpush.msra.mxu0 %v1107
        %1161 = vmatpush.msra.mxu0 %v1105
        %1162 = vmatpush.msra.mxu0 %v1103
        %1163 = vmatpush.msra.mxu0 %v1101
        %1164 = vmatpush.msra.mxu0 %v1099
        %1165 = vmatpush.msra.mxu0 %v1097
        %1166 = vmatpush.msra.mxu0 %v1095
        %1167 = vmatpush.msra.mxu0 %v1093
        %1168 = vmatmul.f32.gmra.mxu0 %v1123
        %v1169 = vpop.f32.mrf.mxu0
        %v1170 = vadd.f32 0.0, %v1169
        %1171 = vmatmul.f32.gmra.mxu0 %v1126
        %v1172 = vpop.f32.mrf.mxu0
        %v1173 = vadd.f32 0.0, %v1172
        %1174 = vmatmul.f32.gmra.mxu0 %v1129
        %v1175 = vpop.f32.mrf.mxu0
        %v1176 = vadd.f32 0.0, %v1175
        %1177 = vmatmul.f32.gmra.mxu0 %v1132
        %v1178 = vpop.f32.mrf.mxu0
        %v1179 = vadd.f32 0.0, %v1178
        %1180 = vmatmul.f32.gmra.mxu0 %v1135
        %v1181 = vpop.f32.mrf.mxu0
        %v1182 = vadd.f32 0.0, %v1181
        %1183 = vmatmul.f32.gmra.mxu0 %v1138
        %v1184 = vpop.f32.mrf.mxu0
        %v1185 = vadd.f32 0.0, %v1184
        %1186 = vmatmul.f32.gmra.mxu0 %v1141
        %v1187 = vpop.f32.mrf.mxu0
        %v1188 = vadd.f32 0.0, %v1187
        %1189 = vmatmul.f32.gmra.mxu0 %v1144
        %v1190 = vpop.f32.mrf.mxu0
        %v1191 = vadd.f32 0.0, %v1190
        %1192 = vmatmul.f32.gmra.mxu0 %v1147
        %v1193 = vpop.f32.mrf.mxu0
        %v1194 = vadd.f32 0.0, %v1193
        %1195 = vmatmul.f32.gmra.mxu0 %v1150
        %v1196 = vpop.f32.mrf.mxu0
        %v1197 = vadd.f32 0.0, %v1196
        %1198 = vdwg.mxu0
        %v1199 = vrcp.pop %v1054
        %v1200 = vrcp.pop %v1057
        %v1201 = vrcp.pop %v1060
        %v1202 = vrcp.pop %v1063
        %v1203 = vrcp.pop %v1066
        %v1204 = vrcp.pop %v1069
        %v1205 = vrcp.pop %v1072
        %v1206 = vrcp.pop %v1075
        %v1207 = vrcp.pop %v1078
        %v1208 = vrcp.pop %v1081
        %v1209 = vmul.f32 %v1170, %v1199
        %v1210 = vmul.f32 %v1173, %v1200
        %v1211 = vmul.f32 %v1176, %v1201
        %v1212 = vmul.f32 %v1179, %v1202
        %v1213 = vmul.f32 %v1182, %v1203
        %v1214 = vmul.f32 %v1185, %v1204
        %v1215 = vmul.f32 %v1188, %v1205
        %v1216 = vmul.f32 %v1191, %v1206
        %v1217 = vmul.f32 %v1194, %v1207
        %v1218 = vmul.f32 %v1197, %v1208
        %1219 = vrot.lane.b32.xlu0 %v362, 96
        %v1220 = vpop.permute.xlu0 %1219
        %1221 = vrot.lane.b32.xlu0 %v365, 96
        %v1222 = vpop.permute.xlu0 %1221
        %1223 = vrot.lane.b32.xlu0 %v368, 96
        %v1224 = vpop.permute.xlu0 %1223
        %1225 = vrot.lane.b32.xlu0 %v371, 96
        %v1226 = vpop.permute.xlu0 %1225
        %1227 = vrot.lane.b32.xlu0 %v374, 96
        %v1228 = vpop.permute.xlu0 %1227
        %1229 = vrot.lane.b32.xlu0 %v377, 96
        %v1230 = vpop.permute.xlu0 %1229
        %1231 = vrot.lane.b32.xlu0 %v380, 96
        %v1232 = vpop.permute.xlu0 %1231
        %1233 = vrot.lane.b32.xlu0 %v383, 96
        %v1234 = vpop.permute.xlu0 %1233
        %1235 = vrot.lane.b32.xlu0 %v386, 96
        %v1236 = vpop.permute.xlu0 %1235
        %1237 = vrot.lane.b32.xlu0 %v389, 96
        %v1238 = vpop.permute.xlu0 %1237
        %1239 = vrot.lane.b32.xlu0 %v409, 96
        %v1240 = vpop.permute.xlu0 %1239
        %1241 = vrot.lane.b32.xlu0 %v412, 96
        %v1242 = vpop.permute.xlu0 %1241
        %1243 = vrot.lane.b32.xlu0 %v415, 96
        %v1244 = vpop.permute.xlu0 %1243
        %1245 = vrot.lane.b32.xlu0 %v418, 96
        %v1246 = vpop.permute.xlu0 %1245
        %1247 = vrot.lane.b32.xlu0 %v421, 96
        %v1248 = vpop.permute.xlu0 %1247
        %1249 = vrot.lane.b32.xlu0 %v424, 96
        %v1250 = vpop.permute.xlu0 %1249
        %1251 = vrot.lane.b32.xlu0 %v427, 96
        %v1252 = vpop.permute.xlu0 %1251
        %1253 = vrot.lane.b32.xlu0 %v430, 96
        %v1254 = vpop.permute.xlu0 %1253
        %1255 = vrot.lane.b32.xlu0 %v433, 96
        %v1256 = vpop.permute.xlu0 %1255
        %1257 = vrot.lane.b32.xlu0 %v436, 96
        %v1258 = vpop.permute.xlu0 %1257
        %v1259 = vsel %vm529, %v1220, 0
        %v1261 = vsel %vm529, %v1222, 0
        %v1263 = vsel %vm529, %v1224, 0
        %v1265 = vsel %vm529, %v1226, 0
        %v1267 = vsel %vm529, %v1228, 0
        %v1269 = vsel %vm529, %v1230, 0
        %v1271 = vsel %vm529, %v1232, 0
        %v1273 = vsel %vm529, %v1234, 0
        %v1275 = vsel %vm529, %v1236, 0
        %v1277 = vsel %vm529, %v1238, 0
        %v1279 = vsel %vm529, %v1240, 0
        %v1281 = vsel %vm529, %v1242, 0
        %v1283 = vsel %vm529, %v1244, 0
        %v1285 = vsel %vm529, %v1246, 0
        %v1287 = vsel %vm529, %v1248, 0
        %v1289 = vsel %vm529, %v1250, 0
        %v1291 = vsel %vm529, %v1252, 0
        %v1293 = vsel %vm529, %v1254, 0
        %v1295 = vsel %vm529, %v1256, 0
        %v1297 = vsel %vm529, %v1258, 0
        %1299 = vmatpush.xpose.msra.mxu0 0.0
        %1300 = vmatpush.xpose.msra.mxu0 0.0
        %1301 = vmatpush.xpose.msra.mxu0 0.0
        %1302 = vmatpush.xpose.msra.mxu0 0.0
        %1303 = vmatpush.xpose.msra.mxu0 0.0
        %1304 = vmatpush.xpose.msra.mxu0 0.0
        %1305 = vmatpush.xpose.msra.mxu0 %v1297
        %1306 = vmatpush.xpose.msra.mxu0 %v1295
        %1307 = vmatpush.xpose.msra.mxu0 %v1293
        %1308 = vmatpush.xpose.msra.mxu0 %v1291
        %1309 = vmatpush.xpose.msra.mxu0 %v1289
        %1310 = vmatpush.xpose.msra.mxu0 %v1287
        %1311 = vmatpush.xpose.msra.mxu0 %v1285
        %1312 = vmatpush.xpose.msra.mxu0 %v1283
        %1313 = vmatpush.xpose.msra.mxu0 %v1281
        %1314 = vmatpush.xpose.msra.mxu0 %v1279
        %1315 = vmatmul.f32.gmra.mxu0 %v1259
        %v1316 = vpop.f32.mrf.mxu0
        %v1317 = vadd.f32 0.0, %v1316
        %1318 = vmatmul.f32.gmra.mxu0 %v1261
        %v1319 = vpop.f32.mrf.mxu0
        %v1320 = vadd.f32 0.0, %v1319
        %1321 = vmatmul.f32.gmra.mxu0 %v1263
        %v1322 = vpop.f32.mrf.mxu0
        %v1323 = vadd.f32 0.0, %v1322
        %1324 = vmatmul.f32.gmra.mxu0 %v1265
        %v1325 = vpop.f32.mrf.mxu0
        %v1326 = vadd.f32 0.0, %v1325
        %1327 = vmatmul.f32.gmra.mxu0 %v1267
        %v1328 = vpop.f32.mrf.mxu0
        %v1329 = vadd.f32 0.0, %v1328
        %1330 = vmatmul.f32.gmra.mxu0 %v1269
        %v1331 = vpop.f32.mrf.mxu0
        %v1332 = vadd.f32 0.0, %v1331
        %1333 = vmatmul.f32.gmra.mxu0 %v1271
        %v1334 = vpop.f32.mrf.mxu0
        %v1335 = vadd.f32 0.0, %v1334
        %1336 = vmatmul.f32.gmra.mxu0 %v1273
        %v1337 = vpop.f32.mrf.mxu0
        %v1338 = vadd.f32 0.0, %v1337
        %1339 = vmatmul.f32.gmra.mxu0 %v1275
        %v1340 = vpop.f32.mrf.mxu0
        %v1341 = vadd.f32 0.0, %v1340
        %1342 = vmatmul.f32.gmra.mxu0 %v1277
        %v1343 = vpop.f32.mrf.mxu0
        %v1344 = vadd.f32 0.0, %v1343
        %1345 = vdwg.mxu0
        %v1346 = vmul.f32 %v1317, 0.25
        %v1347 = vmul.f32 %v1320, 0.25
        %v1348 = vmul.f32 %v1323, 0.25
        %v1349 = vmul.f32 %v1326, 0.25
        %v1350 = vmul.f32 %v1329, 0.25
        %v1351 = vmul.f32 %v1332, 0.25
        %v1352 = vmul.f32 %v1335, 0.25
        %v1353 = vmul.f32 %v1338, 0.25
        %v1354 = vmul.f32 %v1341, 0.25
        %v1355 = vmul.f32 %v1344, 0.25
        %v1356 = vadd.f32 %v1346, %v519
        %v1357 = vadd.f32 %v1347, %v520
        %v1358 = vadd.f32 %v1348, %v521
        %v1359 = vadd.f32 %v1349, %v522
        %v1360 = vadd.f32 %v1350, %v523
        %v1361 = vadd.f32 %v1351, %v524
        %v1362 = vadd.f32 %v1352, %v525
        %v1363 = vadd.f32 %v1353, %v526
        %v1364 = vadd.f32 %v1354, %v527
        %v1365 = vadd.f32 %v1355, %v528
        %v1366 = vsel %vm657, %v1356, -inf
        %1367 = vmax.xlane.f32.xlu0 %v1366
        %v1368 = vpop.xlane.xlu0 %1367
        %v1369 = vsel %vm657, %v1357, -inf
        %1370 = vmax.xlane.f32.xlu0 %v1369
        %v1371 = vpop.xlane.xlu0 %1370
        %v1372 = vsel %vm657, %v1358, -inf
        %1373 = vmax.xlane.f32.xlu0 %v1372
        %v1374 = vpop.xlane.xlu0 %1373
        %v1375 = vsel %vm657, %v1359, -inf
        %1376 = vmax.xlane.f32.xlu0 %v1375
        %v1377 = vpop.xlane.xlu0 %1376
        %v1378 = vsel %vm657, %v1360, -inf
        %1379 = vmax.xlane.f32.xlu0 %v1378
        %v1380 = vpop.xlane.xlu0 %1379
        %v1381 = vsel %vm657, %v1361, -inf
        %1382 = vmax.xlane.f32.xlu0 %v1381
        %v1383 = vpop.xlane.xlu0 %1382
        %v1384 = vsel %vm657, %v1362, -inf
        %1385 = vmax.xlane.f32.xlu0 %v1384
        %v1386 = vpop.xlane.xlu0 %1385
        %v1387 = vsel %vm657, %v1363, -inf
        %1388 = vmax.xlane.f32.xlu0 %v1387
        %v1389 = vpop.xlane.xlu0 %1388
        %v1390 = vsel %vm657, %v1364, -inf
        %1391 = vmax.xlane.f32.xlu0 %v1390
        %v1392 = vpop.xlane.xlu0 %1391
        %v1393 = vsel %vm657, %v1365, -inf
        %1394 = vmax.xlane.f32.xlu0 %v1393
        %v1395 = vpop.xlane.xlu0 %1394
        %v1396 = vsub.f32 %v1356, %v1368
        %v1397 = vsub.f32 %v1357, %v1371
        %v1398 = vsub.f32 %v1358, %v1374
        %v1399 = vsub.f32 %v1359, %v1377
        %v1400 = vsub.f32 %v1360, %v1380
        %v1401 = vsub.f32 %v1361, %v1383
        %v1402 = vsub.f32 %v1362, %v1386
        %v1403 = vsub.f32 %v1363, %v1389
        %v1404 = vsub.f32 %v1364, %v1392
        %v1405 = vsub.f32 %v1365, %v1395
        %v1406 = vmul.f32 %v1396, 1.442695
        %v1407 = vpow.pop %v1406
        %v1408 = vmul.f32 %v1397, 1.442695
        %v1409 = vpow.pop %v1408
        %v1410 = vmul.f32 %v1398, 1.442695
        %v1411 = vpow.pop %v1410
        %v1412 = vmul.f32 %v1399, 1.442695
        %v1413 = vpow.pop %v1412
        %v1414 = vmul.f32 %v1400, 1.442695
        %v1415 = vpow.pop %v1414
        %v1416 = vmul.f32 %v1401, 1.442695
        %v1417 = vpow.pop %v1416
        %v1418 = vmul.f32 %v1402, 1.442695
        %v1419 = vpow.pop %v1418
        %v1420 = vmul.f32 %v1403, 1.442695
        %v1421 = vpow.pop %v1420
        %v1422 = vmul.f32 %v1404, 1.442695
        %v1423 = vpow.pop %v1422
        %v1424 = vmul.f32 %v1405, 1.442695
        %v1425 = vpow.pop %v1424
        %v1426 = vsel %vm657, %v1407, 0.0
        %1427 = vadd.xlane.f32.xlu0 %v1426
        %v1428 = vpop.xlane.xlu0 %1427
        %v1429 = vsel %vm657, %v1409, 0.0
        %1430 = vadd.xlane.f32.xlu0 %v1429
        %v1431 = vpop.xlane.xlu0 %1430
        %v1432 = vsel %vm657, %v1411, 0.0
        %1433 = vadd.xlane.f32.xlu0 %v1432
        %v1434 = vpop.xlane.xlu0 %1433
        %v1435 = vsel %vm657, %v1413, 0.0
        %1436 = vadd.xlane.f32.xlu0 %v1435
        %v1437 = vpop.xlane.xlu0 %1436
        %v1438 = vsel %vm657, %v1415, 0.0
        %1439 = vadd.xlane.f32.xlu0 %v1438
        %v1440 = vpop.xlane.xlu0 %1439
        %v1441 = vsel %vm657, %v1417, 0.0
        %1442 = vadd.xlane.f32.xlu0 %v1441
        %v1443 = vpop.xlane.xlu0 %1442
        %v1444 = vsel %vm657, %v1419, 0.0
        %1445 = vadd.xlane.f32.xlu0 %v1444
        %v1446 = vpop.xlane.xlu0 %1445
        %v1447 = vsel %vm657, %v1421, 0.0
        %1448 = vadd.xlane.f32.xlu0 %v1447
        %v1449 = vpop.xlane.xlu0 %1448
        %v1450 = vsel %vm657, %v1423, 0.0
        %1451 = vadd.xlane.f32.xlu0 %v1450
        %v1452 = vpop.xlane.xlu0 %1451
        %v1453 = vsel %vm657, %v1425, 0.0
        %1454 = vadd.xlane.f32.xlu0 %v1453
        %v1455 = vpop.xlane.xlu0 %1454
        %1456 = vrot.lane.b32.xlu0 %v456, 96
        %v1457 = vpop.permute.xlu0 %1456
        %1458 = vrot.lane.b32.xlu0 %v459, 96
        %v1459 = vpop.permute.xlu0 %1458
        %1460 = vrot.lane.b32.xlu0 %v462, 96
        %v1461 = vpop.permute.xlu0 %1460
        %1462 = vrot.lane.b32.xlu0 %v465, 96
        %v1463 = vpop.permute.xlu0 %1462
        %1464 = vrot.lane.b32.xlu0 %v468, 96
        %v1465 = vpop.permute.xlu0 %1464
        %1466 = vrot.lane.b32.xlu0 %v471, 96
        %v1467 = vpop.permute.xlu0 %1466
        %1468 = vrot.lane.b32.xlu0 %v474, 96
        %v1469 = vpop.permute.xlu0 %1468
        %1470 = vrot.lane.b32.xlu0 %v477, 96
        %v1471 = vpop.permute.xlu0 %1470
        %1472 = vrot.lane.b32.xlu0 %v480, 96
        %v1473 = vpop.permute.xlu0 %1472
        %1474 = vrot.lane.b32.xlu0 %v483, 96
        %v1475 = vpop.permute.xlu0 %1474
        %v1487 = vsel %vm657, %v1407, 0
        %v1490 = vsel %vm657, %v1409, 0
        %v1493 = vsel %vm657, %v1411, 0
        %v1496 = vsel %vm657, %v1413, 0
        %v1499 = vsel %vm657, %v1415, 0
        %v1502 = vsel %vm657, %v1417, 0
        %v1505 = vsel %vm657, %v1419, 0
        %v1508 = vsel %vm657, %v1421, 0
        %v1511 = vsel %vm657, %v1423, 0
        %v1514 = vsel %vm657, %v1425, 0
        %1516 = vmatpush.msra.mxu0 0.0
        %1517 = vmatpush.msra.mxu0 0.0
        %1518 = vmatpush.msra.mxu0 0.0
        %1519 = vmatpush.msra.mxu0 0.0
        %1520 = vmatpush.msra.mxu0 0.0
        %1521 = vmatpush.msra.mxu0 0.0
        %1522 = vmatpush.msra.mxu0 %v1475
        %1523 = vmatpush.msra.mxu0 %v1473
        %1524 = vmatpush.msra.mxu0 %v1471
        %1525 = vmatpush.msra.mxu0 %v1469
        %1526 = vmatpush.msra.mxu0 %v1467
        %1527 = vmatpush.msra.mxu0 %v1465
        %1528 = vmatpush.msra.mxu0 %v1463
        %1529 = vmatpush.msra.mxu0 %v1461
        %1530 = vmatpush.msra.mxu0 %v1459
        %1531 = vmatpush.msra.mxu0 %v1457
        %1532 = vmatmul.f32.gmra.mxu0 %v1487
        %v1533 = vpop.f32.mrf.mxu0
        %v1534 = vadd.f32 0.0, %v1533
        %1535 = vmatmul.f32.gmra.mxu0 %v1490
        %v1536 = vpop.f32.mrf.mxu0
        %v1537 = vadd.f32 0.0, %v1536
        %1538 = vmatmul.f32.gmra.mxu0 %v1493
        %v1539 = vpop.f32.mrf.mxu0
        %v1540 = vadd.f32 0.0, %v1539
        %1541 = vmatmul.f32.gmra.mxu0 %v1496
        %v1542 = vpop.f32.mrf.mxu0
        %v1543 = vadd.f32 0.0, %v1542
        %1544 = vmatmul.f32.gmra.mxu0 %v1499
        %v1545 = vpop.f32.mrf.mxu0
        %v1546 = vadd.f32 0.0, %v1545
        %1547 = vmatmul.f32.gmra.mxu0 %v1502
        %v1548 = vpop.f32.mrf.mxu0
        %v1549 = vadd.f32 0.0, %v1548
        %1550 = vmatmul.f32.gmra.mxu0 %v1505
        %v1551 = vpop.f32.mrf.mxu0
        %v1552 = vadd.f32 0.0, %v1551
        %1553 = vmatmul.f32.gmra.mxu0 %v1508
        %v1554 = vpop.f32.mrf.mxu0
        %v1555 = vadd.f32 0.0, %v1554
        %1556 = vmatmul.f32.gmra.mxu0 %v1511
        %v1557 = vpop.f32.mrf.mxu0
        %v1558 = vadd.f32 0.0, %v1557
        %1559 = vmatmul.f32.gmra.mxu0 %v1514
        %v1560 = vpop.f32.mrf.mxu0
        %v1561 = vadd.f32 0.0, %v1560
        %1562 = vdwg.mxu0
        %v1563 = vrcp.pop %v1428
        %v1564 = vrcp.pop %v1431
        %v1565 = vrcp.pop %v1434
        %v1566 = vrcp.pop %v1437
        %v1567 = vrcp.pop %v1440
        %v1568 = vrcp.pop %v1443
        %v1569 = vrcp.pop %v1446
        %v1570 = vrcp.pop %v1449
        %v1571 = vrcp.pop %v1452
        %v1572 = vrcp.pop %v1455
        %v1573 = vmul.f32 %v1534, %v1563
        %v1574 = vmul.f32 %v1537, %v1564
        %v1575 = vmul.f32 %v1540, %v1565
        %v1576 = vmul.f32 %v1543, %v1566
        %v1577 = vmul.f32 %v1546, %v1567
        %v1578 = vmul.f32 %v1549, %v1568
        %v1579 = vmul.f32 %v1552, %v1569
        %v1580 = vmul.f32 %v1555, %v1570
        %v1581 = vmul.f32 %v1558, %v1571
        %v1582 = vmul.f32 %v1561, %v1572
        %1583 = vrot.lane.b32.xlu0 %v362, 80
        %v1584 = vpop.permute.xlu0 %1583
        %1585 = vrot.lane.b32.xlu0 %v365, 80
        %v1586 = vpop.permute.xlu0 %1585
        %1587 = vrot.lane.b32.xlu0 %v368, 80
        %v1588 = vpop.permute.xlu0 %1587
        %1589 = vrot.lane.b32.xlu0 %v371, 80
        %v1590 = vpop.permute.xlu0 %1589
        %1591 = vrot.lane.b32.xlu0 %v374, 80
        %v1592 = vpop.permute.xlu0 %1591
        %1593 = vrot.lane.b32.xlu0 %v377, 80
        %v1594 = vpop.permute.xlu0 %1593
        %1595 = vrot.lane.b32.xlu0 %v380, 80
        %v1596 = vpop.permute.xlu0 %1595
        %1597 = vrot.lane.b32.xlu0 %v383, 80
        %v1598 = vpop.permute.xlu0 %1597
        %1599 = vrot.lane.b32.xlu0 %v386, 80
        %v1600 = vpop.permute.xlu0 %1599
        %1601 = vrot.lane.b32.xlu0 %v389, 80
        %v1602 = vpop.permute.xlu0 %1601
        %1603 = vrot.lane.b32.xlu0 %v409, 80
        %v1604 = vpop.permute.xlu0 %1603
        %1605 = vrot.lane.b32.xlu0 %v412, 80
        %v1606 = vpop.permute.xlu0 %1605
        %1607 = vrot.lane.b32.xlu0 %v415, 80
        %v1608 = vpop.permute.xlu0 %1607
        %1609 = vrot.lane.b32.xlu0 %v418, 80
        %v1610 = vpop.permute.xlu0 %1609
        %1611 = vrot.lane.b32.xlu0 %v421, 80
        %v1612 = vpop.permute.xlu0 %1611
        %1613 = vrot.lane.b32.xlu0 %v424, 80
        %v1614 = vpop.permute.xlu0 %1613
        %1615 = vrot.lane.b32.xlu0 %v427, 80
        %v1616 = vpop.permute.xlu0 %1615
        %1617 = vrot.lane.b32.xlu0 %v430, 80
        %v1618 = vpop.permute.xlu0 %1617
        %1619 = vrot.lane.b32.xlu0 %v433, 80
        %v1620 = vpop.permute.xlu0 %1619
        %1621 = vrot.lane.b32.xlu0 %v436, 80
        %v1622 = vpop.permute.xlu0 %1621
        %v1623 = vsel %vm529, %v1584, 0
        %v1625 = vsel %vm529, %v1586, 0
        %v1627 = vsel %vm529, %v1588, 0
        %v1629 = vsel %vm529, %v1590, 0
        %v1631 = vsel %vm529, %v1592, 0
        %v1633 = vsel %vm529, %v1594, 0
        %v1635 = vsel %vm529, %v1596, 0
        %v1637 = vsel %vm529, %v1598, 0
        %v1639 = vsel %vm529, %v1600, 0
        %v1641 = vsel %vm529, %v1602, 0
        %v1643 = vsel %vm529, %v1604, 0
        %v1645 = vsel %vm529, %v1606, 0
        %v1647 = vsel %vm529, %v1608, 0
        %v1649 = vsel %vm529, %v1610, 0
        %v1651 = vsel %vm529, %v1612, 0
        %v1653 = vsel %vm529, %v1614, 0
        %v1655 = vsel %vm529, %v1616, 0
        %v1657 = vsel %vm529, %v1618, 0
        %v1659 = vsel %vm529, %v1620, 0
        %v1661 = vsel %vm529, %v1622, 0
        %1663 = vmatpush.xpose.msra.mxu0 0.0
        %1664 = vmatpush.xpose.msra.mxu0 0.0
        %1665 = vmatpush.xpose.msra.mxu0 0.0
        %1666 = vmatpush.xpose.msra.mxu0 0.0
        %1667 = vmatpush.xpose.msra.mxu0 0.0
        %1668 = vmatpush.xpose.msra.mxu0 0.0
        %1669 = vmatpush.xpose.msra.mxu0 %v1661
        %1670 = vmatpush.xpose.msra.mxu0 %v1659
        %1671 = vmatpush.xpose.msra.mxu0 %v1657
        %1672 = vmatpush.xpose.msra.mxu0 %v1655
        %1673 = vmatpush.xpose.msra.mxu0 %v1653
        %1674 = vmatpush.xpose.msra.mxu0 %v1651
        %1675 = vmatpush.xpose.msra.mxu0 %v1649
        %1676 = vmatpush.xpose.msra.mxu0 %v1647
        %1677 = vmatpush.xpose.msra.mxu0 %v1645
        %1678 = vmatpush.xpose.msra.mxu0 %v1643
        %1679 = vmatmul.f32.gmra.mxu0 %v1623
        %v1680 = vpop.f32.mrf.mxu0
        %v1681 = vadd.f32 0.0, %v1680
        %1682 = vmatmul.f32.gmra.mxu0 %v1625
        %v1683 = vpop.f32.mrf.mxu0
        %v1684 = vadd.f32 0.0, %v1683
        %1685 = vmatmul.f32.gmra.mxu0 %v1627
        %v1686 = vpop.f32.mrf.mxu0
        %v1687 = vadd.f32 0.0, %v1686
        %1688 = vmatmul.f32.gmra.mxu0 %v1629
        %v1689 = vpop.f32.mrf.mxu0
        %v1690 = vadd.f32 0.0, %v1689
        %1691 = vmatmul.f32.gmra.mxu0 %v1631
        %v1692 = vpop.f32.mrf.mxu0
        %v1693 = vadd.f32 0.0, %v1692
        %1694 = vmatmul.f32.gmra.mxu0 %v1633
        %v1695 = vpop.f32.mrf.mxu0
        %v1696 = vadd.f32 0.0, %v1695
        %1697 = vmatmul.f32.gmra.mxu0 %v1635
        %v1698 = vpop.f32.mrf.mxu0
        %v1699 = vadd.f32 0.0, %v1698
        %1700 = vmatmul.f32.gmra.mxu0 %v1637
        %v1701 = vpop.f32.mrf.mxu0
        %v1702 = vadd.f32 0.0, %v1701
        %1703 = vmatmul.f32.gmra.mxu0 %v1639
        %v1704 = vpop.f32.mrf.mxu0
        %v1705 = vadd.f32 0.0, %v1704
        %1706 = vmatmul.f32.gmra.mxu0 %v1641
        %v1707 = vpop.f32.mrf.mxu0
        %v1708 = vadd.f32 0.0, %v1707
        %1709 = vdwg.mxu0
        %v1710 = vmul.f32 %v1681, 0.25
        %v1711 = vmul.f32 %v1684, 0.25
        %v1712 = vmul.f32 %v1687, 0.25
        %v1713 = vmul.f32 %v1690, 0.25
        %v1714 = vmul.f32 %v1693, 0.25
        %v1715 = vmul.f32 %v1696, 0.25
        %v1716 = vmul.f32 %v1699, 0.25
        %v1717 = vmul.f32 %v1702, 0.25
        %v1718 = vmul.f32 %v1705, 0.25
        %v1719 = vmul.f32 %v1708, 0.25
        %v1720 = vadd.f32 %v1710, %v519
        %v1721 = vadd.f32 %v1711, %v520
        %v1722 = vadd.f32 %v1712, %v521
        %v1723 = vadd.f32 %v1713, %v522
        %v1724 = vadd.f32 %v1714, %v523
        %v1725 = vadd.f32 %v1715, %v524
        %v1726 = vadd.f32 %v1716, %v525
        %v1727 = vadd.f32 %v1717, %v526
        %v1728 = vadd.f32 %v1718, %v527
        %v1729 = vadd.f32 %v1719, %v528
        %v1730 = vsel %vm657, %v1720, -inf
        %1731 = vmax.xlane.f32.xlu0 %v1730
        %v1732 = vpop.xlane.xlu0 %1731
        %v1733 = vsel %vm657, %v1721, -inf
        %1734 = vmax.xlane.f32.xlu0 %v1733
        %v1735 = vpop.xlane.xlu0 %1734
        %v1736 = vsel %vm657, %v1722, -inf
        %1737 = vmax.xlane.f32.xlu0 %v1736
        %v1738 = vpop.xlane.xlu0 %1737
        %v1739 = vsel %vm657, %v1723, -inf
        %1740 = vmax.xlane.f32.xlu0 %v1739
        %v1741 = vpop.xlane.xlu0 %1740
        %v1742 = vsel %vm657, %v1724, -inf
        %1743 = vmax.xlane.f32.xlu0 %v1742
        %v1744 = vpop.xlane.xlu0 %1743
        %v1745 = vsel %vm657, %v1725, -inf
        %1746 = vmax.xlane.f32.xlu0 %v1745
        %v1747 = vpop.xlane.xlu0 %1746
        %v1748 = vsel %vm657, %v1726, -inf
        %1749 = vmax.xlane.f32.xlu0 %v1748
        %v1750 = vpop.xlane.xlu0 %1749
        %v1751 = vsel %vm657, %v1727, -inf
        %1752 = vmax.xlane.f32.xlu0 %v1751
        %v1753 = vpop.xlane.xlu0 %1752
        %v1754 = vsel %vm657, %v1728, -inf
        %1755 = vmax.xlane.f32.xlu0 %v1754
        %v1756 = vpop.xlane.xlu0 %1755
        %v1757 = vsel %vm657, %v1729, -inf
        %1758 = vmax.xlane.f32.xlu0 %v1757
        %v1759 = vpop.xlane.xlu0 %1758
        %v1760 = vsub.f32 %v1720, %v1732
        %v1761 = vsub.f32 %v1721, %v1735
        %v1762 = vsub.f32 %v1722, %v1738
        %v1763 = vsub.f32 %v1723, %v1741
        %v1764 = vsub.f32 %v1724, %v1744
        %v1765 = vsub.f32 %v1725, %v1747
        %v1766 = vsub.f32 %v1726, %v1750
        %v1767 = vsub.f32 %v1727, %v1753
        %v1768 = vsub.f32 %v1728, %v1756
        %v1769 = vsub.f32 %v1729, %v1759
        %v1770 = vmul.f32 %v1760, 1.442695
        %v1771 = vpow.pop %v1770
        %v1772 = vmul.f32 %v1761, 1.442695
        %v1773 = vpow.pop %v1772
        %v1774 = vmul.f32 %v1762, 1.442695
        %v1775 = vpow.pop %v1774
        %v1776 = vmul.f32 %v1763, 1.442695
        %v1777 = vpow.pop %v1776
        %v1778 = vmul.f32 %v1764, 1.442695
        %v1779 = vpow.pop %v1778
        %v1780 = vmul.f32 %v1765, 1.442695
        %v1781 = vpow.pop %v1780
        %v1782 = vmul.f32 %v1766, 1.442695
        %v1783 = vpow.pop %v1782
        %v1784 = vmul.f32 %v1767, 1.442695
        %v1785 = vpow.pop %v1784
        %v1786 = vmul.f32 %v1768, 1.442695
        %v1787 = vpow.pop %v1786
        %v1788 = vmul.f32 %v1769, 1.442695
        %v1789 = vpow.pop %v1788
        %v1790 = vsel %vm657, %v1771, 0.0
        %1791 = vadd.xlane.f32.xlu0 %v1790
        %v1792 = vpop.xlane.xlu0 %1791
        %v1793 = vsel %vm657, %v1773, 0.0
        %1794 = vadd.xlane.f32.xlu0 %v1793
        %v1795 = vpop.xlane.xlu0 %1794
        %v1796 = vsel %vm657, %v1775, 0.0
        %1797 = vadd.xlane.f32.xlu0 %v1796
        %v1798 = vpop.xlane.xlu0 %1797
        %v1799 = vsel %vm657, %v1777, 0.0
        %1800 = vadd.xlane.f32.xlu0 %v1799
        %v1801 = vpop.xlane.xlu0 %1800
        %v1802 = vsel %vm657, %v1779, 0.0
        %1803 = vadd.xlane.f32.xlu0 %v1802
        %v1804 = vpop.xlane.xlu0 %1803
        %v1805 = vsel %vm657, %v1781, 0.0
        %1806 = vadd.xlane.f32.xlu0 %v1805
        %v1807 = vpop.xlane.xlu0 %1806
        %v1808 = vsel %vm657, %v1783, 0.0
        %1809 = vadd.xlane.f32.xlu0 %v1808
        %v1810 = vpop.xlane.xlu0 %1809
        %v1811 = vsel %vm657, %v1785, 0.0
        %1812 = vadd.xlane.f32.xlu0 %v1811
        %v1813 = vpop.xlane.xlu0 %1812
        %v1814 = vsel %vm657, %v1787, 0.0
        %1815 = vadd.xlane.f32.xlu0 %v1814
        %v1816 = vpop.xlane.xlu0 %1815
        %v1817 = vsel %vm657, %v1789, 0.0
        %1818 = vadd.xlane.f32.xlu0 %v1817
        %v1819 = vpop.xlane.xlu0 %1818
        %1820 = vrot.lane.b32.xlu0 %v456, 80
        %v1821 = vpop.permute.xlu0 %1820
        %1822 = vrot.lane.b32.xlu0 %v459, 80
        %v1823 = vpop.permute.xlu0 %1822
        %1824 = vrot.lane.b32.xlu0 %v462, 80
        %v1825 = vpop.permute.xlu0 %1824
        %1826 = vrot.lane.b32.xlu0 %v465, 80
        %v1827 = vpop.permute.xlu0 %1826
        %1828 = vrot.lane.b32.xlu0 %v468, 80
        %v1829 = vpop.permute.xlu0 %1828
        %1830 = vrot.lane.b32.xlu0 %v471, 80
        %v1831 = vpop.permute.xlu0 %1830
        %1832 = vrot.lane.b32.xlu0 %v474, 80
        %v1833 = vpop.permute.xlu0 %1832
        %1834 = vrot.lane.b32.xlu0 %v477, 80
        %v1835 = vpop.permute.xlu0 %1834
        %1836 = vrot.lane.b32.xlu0 %v480, 80
        %v1837 = vpop.permute.xlu0 %1836
        %1838 = vrot.lane.b32.xlu0 %v483, 80
        %v1839 = vpop.permute.xlu0 %1838
        %v1851 = vsel %vm657, %v1771, 0
        %v1854 = vsel %vm657, %v1773, 0
        %v1857 = vsel %vm657, %v1775, 0
        %v1860 = vsel %vm657, %v1777, 0
        %v1863 = vsel %vm657, %v1779, 0
        %v1866 = vsel %vm657, %v1781, 0
        %v1869 = vsel %vm657, %v1783, 0
        %v1872 = vsel %vm657, %v1785, 0
        %v1875 = vsel %vm657, %v1787, 0
        %v1878 = vsel %vm657, %v1789, 0
        %1880 = vmatpush.msra.mxu0 0.0
        %1881 = vmatpush.msra.mxu0 0.0
        %1882 = vmatpush.msra.mxu0 0.0
        %1883 = vmatpush.msra.mxu0 0.0
        %1884 = vmatpush.msra.mxu0 0.0
        %1885 = vmatpush.msra.mxu0 0.0
        %1886 = vmatpush.msra.mxu0 %v1839
        %1887 = vmatpush.msra.mxu0 %v1837
        %1888 = vmatpush.msra.mxu0 %v1835
        %1889 = vmatpush.msra.mxu0 %v1833
        %1890 = vmatpush.msra.mxu0 %v1831
        %1891 = vmatpush.msra.mxu0 %v1829
        %1892 = vmatpush.msra.mxu0 %v1827
        %1893 = vmatpush.msra.mxu0 %v1825
        %1894 = vmatpush.msra.mxu0 %v1823
        %1895 = vmatpush.msra.mxu0 %v1821
        %1896 = vmatmul.f32.gmra.mxu0 %v1851
        %v1897 = vpop.f32.mrf.mxu0
        %v1898 = vadd.f32 0.0, %v1897
        %1899 = vmatmul.f32.gmra.mxu0 %v1854
        %v1900 = vpop.f32.mrf.mxu0
        %v1901 = vadd.f32 0.0, %v1900
        %1902 = vmatmul.f32.gmra.mxu0 %v1857
        %v1903 = vpop.f32.mrf.mxu0
        %v1904 = vadd.f32 0.0, %v1903
        %1905 = vmatmul.f32.gmra.mxu0 %v1860
        %v1906 = vpop.f32.mrf.mxu0
        %v1907 = vadd.f32 0.0, %v1906
        %1908 = vmatmul.f32.gmra.mxu0 %v1863
        %v1909 = vpop.f32.mrf.mxu0
        %v1910 = vadd.f32 0.0, %v1909
        %1911 = vmatmul.f32.gmra.mxu0 %v1866
        %v1912 = vpop.f32.mrf.mxu0
        %v1913 = vadd.f32 0.0, %v1912
        %1914 = vmatmul.f32.gmra.mxu0 %v1869
        %v1915 = vpop.f32.mrf.mxu0
        %v1916 = vadd.f32 0.0, %v1915
        %1917 = vmatmul.f32.gmra.mxu0 %v1872
        %v1918 = vpop.f32.mrf.mxu0
        %v1919 = vadd.f32 0.0, %v1918
        %1920 = vmatmul.f32.gmra.mxu0 %v1875
        %v1921 = vpop.f32.mrf.mxu0
        %v1922 = vadd.f32 0.0, %v1921
        %1923 = vmatmul.f32.gmra.mxu0 %v1878
        %v1924 = vpop.f32.mrf.mxu0
        %v1925 = vadd.f32 0.0, %v1924
        %1926 = vdwg.mxu0
        %v1927 = vrcp.pop %v1792
        %v1928 = vrcp.pop %v1795
        %v1929 = vrcp.pop %v1798
        %v1930 = vrcp.pop %v1801
        %v1931 = vrcp.pop %v1804
        %v1932 = vrcp.pop %v1807
        %v1933 = vrcp.pop %v1810
        %v1934 = vrcp.pop %v1813
        %v1935 = vrcp.pop %v1816
        %v1936 = vrcp.pop %v1819
        %v1937 = vmul.f32 %v1898, %v1927
        %v1938 = vmul.f32 %v1901, %v1928
        %v1939 = vmul.f32 %v1904, %v1929
        %v1940 = vmul.f32 %v1907, %v1930
        %v1941 = vmul.f32 %v1910, %v1931
        %v1942 = vmul.f32 %v1913, %v1932
        %v1943 = vmul.f32 %v1916, %v1933
        %v1944 = vmul.f32 %v1919, %v1934
        %v1945 = vmul.f32 %v1922, %v1935
        %v1946 = vmul.f32 %v1925, %v1936
        %1947 = vrot.lane.b32.xlu0 %v362, 64
        %v1948 = vpop.permute.xlu0 %1947
        %1949 = vrot.lane.b32.xlu0 %v365, 64
        %v1950 = vpop.permute.xlu0 %1949
        %1951 = vrot.lane.b32.xlu0 %v368, 64
        %v1952 = vpop.permute.xlu0 %1951
        %1953 = vrot.lane.b32.xlu0 %v371, 64
        %v1954 = vpop.permute.xlu0 %1953
        %1955 = vrot.lane.b32.xlu0 %v374, 64
        %v1956 = vpop.permute.xlu0 %1955
        %1957 = vrot.lane.b32.xlu0 %v377, 64
        %v1958 = vpop.permute.xlu0 %1957
        %1959 = vrot.lane.b32.xlu0 %v380, 64
        %v1960 = vpop.permute.xlu0 %1959
        %1961 = vrot.lane.b32.xlu0 %v383, 64
        %v1962 = vpop.permute.xlu0 %1961
        %1963 = vrot.lane.b32.xlu0 %v386, 64
        %v1964 = vpop.permute.xlu0 %1963
        %1965 = vrot.lane.b32.xlu0 %v389, 64
        %v1966 = vpop.permute.xlu0 %1965
        %1967 = vrot.lane.b32.xlu0 %v409, 64
        %v1968 = vpop.permute.xlu0 %1967
        %1969 = vrot.lane.b32.xlu0 %v412, 64
        %v1970 = vpop.permute.xlu0 %1969
        %1971 = vrot.lane.b32.xlu0 %v415, 64
        %v1972 = vpop.permute.xlu0 %1971
        %1973 = vrot.lane.b32.xlu0 %v418, 64
        %v1974 = vpop.permute.xlu0 %1973
        %1975 = vrot.lane.b32.xlu0 %v421, 64
        %v1976 = vpop.permute.xlu0 %1975
        %1977 = vrot.lane.b32.xlu0 %v424, 64
        %v1978 = vpop.permute.xlu0 %1977
        %1979 = vrot.lane.b32.xlu0 %v427, 64
        %v1980 = vpop.permute.xlu0 %1979
        %1981 = vrot.lane.b32.xlu0 %v430, 64
        %v1982 = vpop.permute.xlu0 %1981
        %1983 = vrot.lane.b32.xlu0 %v433, 64
        %v1984 = vpop.permute.xlu0 %1983
        %1985 = vrot.lane.b32.xlu0 %v436, 64
        %v1986 = vpop.permute.xlu0 %1985
        %v1987 = vsel %vm529, %v1948, 0
        %v1989 = vsel %vm529, %v1950, 0
        %v1991 = vsel %vm529, %v1952, 0
        %v1993 = vsel %vm529, %v1954, 0
        %v1995 = vsel %vm529, %v1956, 0
        %v1997 = vsel %vm529, %v1958, 0
        %v1999 = vsel %vm529, %v1960, 0
        %v2001 = vsel %vm529, %v1962, 0
        %v2003 = vsel %vm529, %v1964, 0
        %v2005 = vsel %vm529, %v1966, 0
        %v2007 = vsel %vm529, %v1968, 0
        %v2009 = vsel %vm529, %v1970, 0
        %v2011 = vsel %vm529, %v1972, 0
        %v2013 = vsel %vm529, %v1974, 0
        %v2015 = vsel %vm529, %v1976, 0
        %v2017 = vsel %vm529, %v1978, 0
        %v2019 = vsel %vm529, %v1980, 0
        %v2021 = vsel %vm529, %v1982, 0
        %v2023 = vsel %vm529, %v1984, 0
        %v2025 = vsel %vm529, %v1986, 0
        %2027 = vmatpush.xpose.msra.mxu0 0.0
        %2028 = vmatpush.xpose.msra.mxu0 0.0
        %2029 = vmatpush.xpose.msra.mxu0 0.0
        %2030 = vmatpush.xpose.msra.mxu0 0.0
        %2031 = vmatpush.xpose.msra.mxu0 0.0
        %2032 = vmatpush.xpose.msra.mxu0 0.0
        %2033 = vmatpush.xpose.msra.mxu0 %v2025
        %2034 = vmatpush.xpose.msra.mxu0 %v2023
        %2035 = vmatpush.xpose.msra.mxu0 %v2021
        %2036 = vmatpush.xpose.msra.mxu0 %v2019
        %2037 = vmatpush.xpose.msra.mxu0 %v2017
        %2038 = vmatpush.xpose.msra.mxu0 %v2015
        %2039 = vmatpush.xpose.msra.mxu0 %v2013
        %2040 = vmatpush.xpose.msra.mxu0 %v2011
        %2041 = vmatpush.xpose.msra.mxu0 %v2009
        %2042 = vmatpush.xpose.msra.mxu0 %v2007
        %2043 = vmatmul.f32.gmra.mxu0 %v1987
        %v2044 = vpop.f32.mrf.mxu0
        %v2045 = vadd.f32 0.0, %v2044
        %2046 = vmatmul.f32.gmra.mxu0 %v1989
        %v2047 = vpop.f32.mrf.mxu0
        %v2048 = vadd.f32 0.0, %v2047
        %2049 = vmatmul.f32.gmra.mxu0 %v1991
        %v2050 = vpop.f32.mrf.mxu0
        %v2051 = vadd.f32 0.0, %v2050
        %2052 = vmatmul.f32.gmra.mxu0 %v1993
        %v2053 = vpop.f32.mrf.mxu0
        %v2054 = vadd.f32 0.0, %v2053
        %2055 = vmatmul.f32.gmra.mxu0 %v1995
        %v2056 = vpop.f32.mrf.mxu0
        %v2057 = vadd.f32 0.0, %v2056
        %2058 = vmatmul.f32.gmra.mxu0 %v1997
        %v2059 = vpop.f32.mrf.mxu0
        %v2060 = vadd.f32 0.0, %v2059
        %2061 = vmatmul.f32.gmra.mxu0 %v1999
        %v2062 = vpop.f32.mrf.mxu0
        %v2063 = vadd.f32 0.0, %v2062
        %2064 = vmatmul.f32.gmra.mxu0 %v2001
        %v2065 = vpop.f32.mrf.mxu0
        %v2066 = vadd.f32 0.0, %v2065
        %2067 = vmatmul.f32.gmra.mxu0 %v2003
        %v2068 = vpop.f32.mrf.mxu0
        %v2069 = vadd.f32 0.0, %v2068
        %2070 = vmatmul.f32.gmra.mxu0 %v2005
        %v2071 = vpop.f32.mrf.mxu0
        %v2072 = vadd.f32 0.0, %v2071
        %2073 = vdwg.mxu0
        %v2074 = vmul.f32 %v2045, 0.25
        %v2075 = vmul.f32 %v2048, 0.25
        %v2076 = vmul.f32 %v2051, 0.25
        %v2077 = vmul.f32 %v2054, 0.25
        %v2078 = vmul.f32 %v2057, 0.25
        %v2079 = vmul.f32 %v2060, 0.25
        %v2080 = vmul.f32 %v2063, 0.25
        %v2081 = vmul.f32 %v2066, 0.25
        %v2082 = vmul.f32 %v2069, 0.25
        %v2083 = vmul.f32 %v2072, 0.25
        %v2084 = vadd.f32 %v2074, %v519
        %v2085 = vadd.f32 %v2075, %v520
        %v2086 = vadd.f32 %v2076, %v521
        %v2087 = vadd.f32 %v2077, %v522
        %v2088 = vadd.f32 %v2078, %v523
        %v2089 = vadd.f32 %v2079, %v524
        %v2090 = vadd.f32 %v2080, %v525
        %v2091 = vadd.f32 %v2081, %v526
        %v2092 = vadd.f32 %v2082, %v527
        %v2093 = vadd.f32 %v2083, %v528
        %v2094 = vsel %vm657, %v2084, -inf
        %2095 = vmax.xlane.f32.xlu0 %v2094
        %v2096 = vpop.xlane.xlu0 %2095
        %v2097 = vsel %vm657, %v2085, -inf
        %2098 = vmax.xlane.f32.xlu0 %v2097
        %v2099 = vpop.xlane.xlu0 %2098
        %v2100 = vsel %vm657, %v2086, -inf
        %2101 = vmax.xlane.f32.xlu0 %v2100
        %v2102 = vpop.xlane.xlu0 %2101
        %v2103 = vsel %vm657, %v2087, -inf
        %2104 = vmax.xlane.f32.xlu0 %v2103
        %v2105 = vpop.xlane.xlu0 %2104
        %v2106 = vsel %vm657, %v2088, -inf
        %2107 = vmax.xlane.f32.xlu0 %v2106
        %v2108 = vpop.xlane.xlu0 %2107
        %v2109 = vsel %vm657, %v2089, -inf
        %2110 = vmax.xlane.f32.xlu0 %v2109
        %v2111 = vpop.xlane.xlu0 %2110
        %v2112 = vsel %vm657, %v2090, -inf
        %2113 = vmax.xlane.f32.xlu0 %v2112
        %v2114 = vpop.xlane.xlu0 %2113
        %v2115 = vsel %vm657, %v2091, -inf
        %2116 = vmax.xlane.f32.xlu0 %v2115
        %v2117 = vpop.xlane.xlu0 %2116
        %v2118 = vsel %vm657, %v2092, -inf
        %2119 = vmax.xlane.f32.xlu0 %v2118
        %v2120 = vpop.xlane.xlu0 %2119
        %v2121 = vsel %vm657, %v2093, -inf
        %2122 = vmax.xlane.f32.xlu0 %v2121
        %v2123 = vpop.xlane.xlu0 %2122
        %v2124 = vsub.f32 %v2084, %v2096
        %v2125 = vsub.f32 %v2085, %v2099
        %v2126 = vsub.f32 %v2086, %v2102
        %v2127 = vsub.f32 %v2087, %v2105
        %v2128 = vsub.f32 %v2088, %v2108
        %v2129 = vsub.f32 %v2089, %v2111
        %v2130 = vsub.f32 %v2090, %v2114
        %v2131 = vsub.f32 %v2091, %v2117
        %v2132 = vsub.f32 %v2092, %v2120
        %v2133 = vsub.f32 %v2093, %v2123
        %v2134 = vmul.f32 %v2124, 1.442695
        %v2135 = vpow.pop %v2134
        %v2136 = vmul.f32 %v2125, 1.442695
        %v2137 = vpow.pop %v2136
        %v2138 = vmul.f32 %v2126, 1.442695
        %v2139 = vpow.pop %v2138
        %v2140 = vmul.f32 %v2127, 1.442695
        %v2141 = vpow.pop %v2140
        %v2142 = vmul.f32 %v2128, 1.442695
        %v2143 = vpow.pop %v2142
        %v2144 = vmul.f32 %v2129, 1.442695
        %v2145 = vpow.pop %v2144
        %v2146 = vmul.f32 %v2130, 1.442695
        %v2147 = vpow.pop %v2146
        %v2148 = vmul.f32 %v2131, 1.442695
        %v2149 = vpow.pop %v2148
        %v2150 = vmul.f32 %v2132, 1.442695
        %v2151 = vpow.pop %v2150
        %v2152 = vmul.f32 %v2133, 1.442695
        %v2153 = vpow.pop %v2152
        %v2154 = vsel %vm657, %v2135, 0.0
        %2155 = vadd.xlane.f32.xlu0 %v2154
        %v2156 = vpop.xlane.xlu0 %2155
        %v2157 = vsel %vm657, %v2137, 0.0
        %2158 = vadd.xlane.f32.xlu0 %v2157
        %v2159 = vpop.xlane.xlu0 %2158
        %v2160 = vsel %vm657, %v2139, 0.0
        %2161 = vadd.xlane.f32.xlu0 %v2160
        %v2162 = vpop.xlane.xlu0 %2161
        %v2163 = vsel %vm657, %v2141, 0.0
        %2164 = vadd.xlane.f32.xlu0 %v2163
        %v2165 = vpop.xlane.xlu0 %2164
        %v2166 = vsel %vm657, %v2143, 0.0
        %2167 = vadd.xlane.f32.xlu0 %v2166
        %v2168 = vpop.xlane.xlu0 %2167
        %v2169 = vsel %vm657, %v2145, 0.0
        %2170 = vadd.xlane.f32.xlu0 %v2169
        %v2171 = vpop.xlane.xlu0 %2170
        %v2172 = vsel %vm657, %v2147, 0.0
        %2173 = vadd.xlane.f32.xlu0 %v2172
        %v2174 = vpop.xlane.xlu0 %2173
        %v2175 = vsel %vm657, %v2149, 0.0
        %2176 = vadd.xlane.f32.xlu0 %v2175
        %v2177 = vpop.xlane.xlu0 %2176
        %v2178 = vsel %vm657, %v2151, 0.0
        %2179 = vadd.xlane.f32.xlu0 %v2178
        %v2180 = vpop.xlane.xlu0 %2179
        %v2181 = vsel %vm657, %v2153, 0.0
        %2182 = vadd.xlane.f32.xlu0 %v2181
        %v2183 = vpop.xlane.xlu0 %2182
        %2184 = vrot.lane.b32.xlu0 %v456, 64
        %v2185 = vpop.permute.xlu0 %2184
        %2186 = vrot.lane.b32.xlu0 %v459, 64
        %v2187 = vpop.permute.xlu0 %2186
        %2188 = vrot.lane.b32.xlu0 %v462, 64
        %v2189 = vpop.permute.xlu0 %2188
        %2190 = vrot.lane.b32.xlu0 %v465, 64
        %v2191 = vpop.permute.xlu0 %2190
        %2192 = vrot.lane.b32.xlu0 %v468, 64
        %v2193 = vpop.permute.xlu0 %2192
        %2194 = vrot.lane.b32.xlu0 %v471, 64
        %v2195 = vpop.permute.xlu0 %2194
        %2196 = vrot.lane.b32.xlu0 %v474, 64
        %v2197 = vpop.permute.xlu0 %2196
        %2198 = vrot.lane.b32.xlu0 %v477, 64
        %v2199 = vpop.permute.xlu0 %2198
        %2200 = vrot.lane.b32.xlu0 %v480, 64
        %v2201 = vpop.permute.xlu0 %2200
        %2202 = vrot.lane.b32.xlu0 %v483, 64
        %v2203 = vpop.permute.xlu0 %2202
        %v2215 = vsel %vm657, %v2135, 0
        %v2218 = vsel %vm657, %v2137, 0
        %v2221 = vsel %vm657, %v2139, 0
        %v2224 = vsel %vm657, %v2141, 0
        %v2227 = vsel %vm657, %v2143, 0
        %v2230 = vsel %vm657, %v2145, 0
        %v2233 = vsel %vm657, %v2147, 0
        %v2236 = vsel %vm657, %v2149, 0
        %v2239 = vsel %vm657, %v2151, 0
        %v2242 = vsel %vm657, %v2153, 0
        %2244 = vmatpush.msra.mxu0 0.0
        %2245 = vmatpush.msra.mxu0 0.0
        %2246 = vmatpush.msra.mxu0 0.0
        %2247 = vmatpush.msra.mxu0 0.0
        %2248 = vmatpush.msra.mxu0 0.0
        %2249 = vmatpush.msra.mxu0 0.0
        %2250 = vmatpush.msra.mxu0 %v2203
        %2251 = vmatpush.msra.mxu0 %v2201
        %2252 = vmatpush.msra.mxu0 %v2199
        %2253 = vmatpush.msra.mxu0 %v2197
        %2254 = vmatpush.msra.mxu0 %v2195
        %2255 = vmatpush.msra.mxu0 %v2193
        %2256 = vmatpush.msra.mxu0 %v2191
        %2257 = vmatpush.msra.mxu0 %v2189
        %2258 = vmatpush.msra.mxu0 %v2187
        %2259 = vmatpush.msra.mxu0 %v2185
        %2260 = vmatmul.f32.gmra.mxu0 %v2215
        %v2261 = vpop.f32.mrf.mxu0
        %v2262 = vadd.f32 0.0, %v2261
        %2263 = vmatmul.f32.gmra.mxu0 %v2218
        %v2264 = vpop.f32.mrf.mxu0
        %v2265 = vadd.f32 0.0, %v2264
        %2266 = vmatmul.f32.gmra.mxu0 %v2221
        %v2267 = vpop.f32.mrf.mxu0
        %v2268 = vadd.f32 0.0, %v2267
        %2269 = vmatmul.f32.gmra.mxu0 %v2224
        %v2270 = vpop.f32.mrf.mxu0
        %v2271 = vadd.f32 0.0, %v2270
        %2272 = vmatmul.f32.gmra.mxu0 %v2227
        %v2273 = vpop.f32.mrf.mxu0
        %v2274 = vadd.f32 0.0, %v2273
        %2275 = vmatmul.f32.gmra.mxu0 %v2230
        %v2276 = vpop.f32.mrf.mxu0
        %v2277 = vadd.f32 0.0, %v2276
        %2278 = vmatmul.f32.gmra.mxu0 %v2233
        %v2279 = vpop.f32.mrf.mxu0
        %v2280 = vadd.f32 0.0, %v2279
        %2281 = vmatmul.f32.gmra.mxu0 %v2236
        %v2282 = vpop.f32.mrf.mxu0
        %v2283 = vadd.f32 0.0, %v2282
        %2284 = vmatmul.f32.gmra.mxu0 %v2239
        %v2285 = vpop.f32.mrf.mxu0
        %v2286 = vadd.f32 0.0, %v2285
        %2287 = vmatmul.f32.gmra.mxu0 %v2242
        %v2288 = vpop.f32.mrf.mxu0
        %v2289 = vadd.f32 0.0, %v2288
        %2290 = vdwg.mxu0
        %v2291 = vrcp.pop %v2156
        %v2292 = vrcp.pop %v2159
        %v2293 = vrcp.pop %v2162
        %v2294 = vrcp.pop %v2165
        %v2295 = vrcp.pop %v2168
        %v2296 = vrcp.pop %v2171
        %v2297 = vrcp.pop %v2174
        %v2298 = vrcp.pop %v2177
        %v2299 = vrcp.pop %v2180
        %v2300 = vrcp.pop %v2183
        %v2301 = vmul.f32 %v2262, %v2291
        %v2302 = vmul.f32 %v2265, %v2292
        %v2303 = vmul.f32 %v2268, %v2293
        %v2304 = vmul.f32 %v2271, %v2294
        %v2305 = vmul.f32 %v2274, %v2295
        %v2306 = vmul.f32 %v2277, %v2296
        %v2307 = vmul.f32 %v2280, %v2297
        %v2308 = vmul.f32 %v2283, %v2298
        %v2309 = vmul.f32 %v2286, %v2299
        %v2310 = vmul.f32 %v2289, %v2300
        %2311 = vrot.lane.b32.xlu0 %v362, 48
        %v2312 = vpop.permute.xlu0 %2311
        %2313 = vrot.lane.b32.xlu0 %v365, 48
        %v2314 = vpop.permute.xlu0 %2313
        %2315 = vrot.lane.b32.xlu0 %v368, 48
        %v2316 = vpop.permute.xlu0 %2315
        %2317 = vrot.lane.b32.xlu0 %v371, 48
        %v2318 = vpop.permute.xlu0 %2317
        %2319 = vrot.lane.b32.xlu0 %v374, 48
        %v2320 = vpop.permute.xlu0 %2319
        %2321 = vrot.lane.b32.xlu0 %v377, 48
        %v2322 = vpop.permute.xlu0 %2321
        %2323 = vrot.lane.b32.xlu0 %v380, 48
        %v2324 = vpop.permute.xlu0 %2323
        %2325 = vrot.lane.b32.xlu0 %v383, 48
        %v2326 = vpop.permute.xlu0 %2325
        %2327 = vrot.lane.b32.xlu0 %v386, 48
        %v2328 = vpop.permute.xlu0 %2327
        %2329 = vrot.lane.b32.xlu0 %v389, 48
        %v2330 = vpop.permute.xlu0 %2329
        %2331 = vrot.lane.b32.xlu0 %v409, 48
        %v2332 = vpop.permute.xlu0 %2331
        %2333 = vrot.lane.b32.xlu0 %v412, 48
        %v2334 = vpop.permute.xlu0 %2333
        %2335 = vrot.lane.b32.xlu0 %v415, 48
        %v2336 = vpop.permute.xlu0 %2335
        %2337 = vrot.lane.b32.xlu0 %v418, 48
        %v2338 = vpop.permute.xlu0 %2337
        %2339 = vrot.lane.b32.xlu0 %v421, 48
        %v2340 = vpop.permute.xlu0 %2339
        %2341 = vrot.lane.b32.xlu0 %v424, 48
        %v2342 = vpop.permute.xlu0 %2341
        %2343 = vrot.lane.b32.xlu0 %v427, 48
        %v2344 = vpop.permute.xlu0 %2343
        %2345 = vrot.lane.b32.xlu0 %v430, 48
        %v2346 = vpop.permute.xlu0 %2345
        %2347 = vrot.lane.b32.xlu0 %v433, 48
        %v2348 = vpop.permute.xlu0 %2347
        %2349 = vrot.lane.b32.xlu0 %v436, 48
        %v2350 = vpop.permute.xlu0 %2349
        %v2351 = vsel %vm529, %v2312, 0
        %v2353 = vsel %vm529, %v2314, 0
        %v2355 = vsel %vm529, %v2316, 0
        %v2357 = vsel %vm529, %v2318, 0
        %v2359 = vsel %vm529, %v2320, 0
        %v2361 = vsel %vm529, %v2322, 0
        %v2363 = vsel %vm529, %v2324, 0
        %v2365 = vsel %vm529, %v2326, 0
        %v2367 = vsel %vm529, %v2328, 0
        %v2369 = vsel %vm529, %v2330, 0
        %v2371 = vsel %vm529, %v2332, 0
        %v2373 = vsel %vm529, %v2334, 0
        %v2375 = vsel %vm529, %v2336, 0
        %v2377 = vsel %vm529, %v2338, 0
        %v2379 = vsel %vm529, %v2340, 0
        %v2381 = vsel %vm529, %v2342, 0
        %v2383 = vsel %vm529, %v2344, 0
        %v2385 = vsel %vm529, %v2346, 0
        %v2387 = vsel %vm529, %v2348, 0
        %v2389 = vsel %vm529, %v2350, 0
        %2391 = vmatpush.xpose.msra.mxu0 0.0
        %2392 = vmatpush.xpose.msra.mxu0 0.0
        %2393 = vmatpush.xpose.msra.mxu0 0.0
        %2394 = vmatpush.xpose.msra.mxu0 0.0
        %2395 = vmatpush.xpose.msra.mxu0 0.0
        %2396 = vmatpush.xpose.msra.mxu0 0.0
        %2397 = vmatpush.xpose.msra.mxu0 %v2389
        %2398 = vmatpush.xpose.msra.mxu0 %v2387
        %2399 = vmatpush.xpose.msra.mxu0 %v2385
        %2400 = vmatpush.xpose.msra.mxu0 %v2383
        %2401 = vmatpush.xpose.msra.mxu0 %v2381
        %2402 = vmatpush.xpose.msra.mxu0 %v2379
        %2403 = vmatpush.xpose.msra.mxu0 %v2377
        %2404 = vmatpush.xpose.msra.mxu0 %v2375
        %2405 = vmatpush.xpose.msra.mxu0 %v2373
        %2406 = vmatpush.xpose.msra.mxu0 %v2371
        %2407 = vmatmul.f32.gmra.mxu0 %v2351
        %v2408 = vpop.f32.mrf.mxu0
        %v2409 = vadd.f32 0.0, %v2408
        %2410 = vmatmul.f32.gmra.mxu0 %v2353
        %v2411 = vpop.f32.mrf.mxu0
        %v2412 = vadd.f32 0.0, %v2411
        %2413 = vmatmul.f32.gmra.mxu0 %v2355
        %v2414 = vpop.f32.mrf.mxu0
        %v2415 = vadd.f32 0.0, %v2414
        %2416 = vmatmul.f32.gmra.mxu0 %v2357
        %v2417 = vpop.f32.mrf.mxu0
        %v2418 = vadd.f32 0.0, %v2417
        %2419 = vmatmul.f32.gmra.mxu0 %v2359
        %v2420 = vpop.f32.mrf.mxu0
        %v2421 = vadd.f32 0.0, %v2420
        %2422 = vmatmul.f32.gmra.mxu0 %v2361
        %v2423 = vpop.f32.mrf.mxu0
        %v2424 = vadd.f32 0.0, %v2423
        %2425 = vmatmul.f32.gmra.mxu0 %v2363
        %v2426 = vpop.f32.mrf.mxu0
        %v2427 = vadd.f32 0.0, %v2426
        %2428 = vmatmul.f32.gmra.mxu0 %v2365
        %v2429 = vpop.f32.mrf.mxu0
        %v2430 = vadd.f32 0.0, %v2429
        %2431 = vmatmul.f32.gmra.mxu0 %v2367
        %v2432 = vpop.f32.mrf.mxu0
        %v2433 = vadd.f32 0.0, %v2432
        %2434 = vmatmul.f32.gmra.mxu0 %v2369
        %v2435 = vpop.f32.mrf.mxu0
        %v2436 = vadd.f32 0.0, %v2435
        %2437 = vdwg.mxu0
        %v2438 = vmul.f32 %v2409, 0.25
        %v2439 = vmul.f32 %v2412, 0.25
        %v2440 = vmul.f32 %v2415, 0.25
        %v2441 = vmul.f32 %v2418, 0.25
        %v2442 = vmul.f32 %v2421, 0.25
        %v2443 = vmul.f32 %v2424, 0.25
        %v2444 = vmul.f32 %v2427, 0.25
        %v2445 = vmul.f32 %v2430, 0.25
        %v2446 = vmul.f32 %v2433, 0.25
        %v2447 = vmul.f32 %v2436, 0.25
        %v2448 = vadd.f32 %v2438, %v519
        %v2449 = vadd.f32 %v2439, %v520
        %v2450 = vadd.f32 %v2440, %v521
        %v2451 = vadd.f32 %v2441, %v522
        %v2452 = vadd.f32 %v2442, %v523
        %v2453 = vadd.f32 %v2443, %v524
        %v2454 = vadd.f32 %v2444, %v525
        %v2455 = vadd.f32 %v2445, %v526
        %v2456 = vadd.f32 %v2446, %v527
        %v2457 = vadd.f32 %v2447, %v528
        %v2458 = vsel %vm657, %v2448, -inf
        %2459 = vmax.xlane.f32.xlu0 %v2458
        %v2460 = vpop.xlane.xlu0 %2459
        %v2461 = vsel %vm657, %v2449, -inf
        %2462 = vmax.xlane.f32.xlu0 %v2461
        %v2463 = vpop.xlane.xlu0 %2462
        %v2464 = vsel %vm657, %v2450, -inf
        %2465 = vmax.xlane.f32.xlu0 %v2464
        %v2466 = vpop.xlane.xlu0 %2465
        %v2467 = vsel %vm657, %v2451, -inf
        %2468 = vmax.xlane.f32.xlu0 %v2467
        %v2469 = vpop.xlane.xlu0 %2468
        %v2470 = vsel %vm657, %v2452, -inf
        %2471 = vmax.xlane.f32.xlu0 %v2470
        %v2472 = vpop.xlane.xlu0 %2471
        %v2473 = vsel %vm657, %v2453, -inf
        %2474 = vmax.xlane.f32.xlu0 %v2473
        %v2475 = vpop.xlane.xlu0 %2474
        %v2476 = vsel %vm657, %v2454, -inf
        %2477 = vmax.xlane.f32.xlu0 %v2476
        %v2478 = vpop.xlane.xlu0 %2477
        %v2479 = vsel %vm657, %v2455, -inf
        %2480 = vmax.xlane.f32.xlu0 %v2479
        %v2481 = vpop.xlane.xlu0 %2480
        %v2482 = vsel %vm657, %v2456, -inf
        %2483 = vmax.xlane.f32.xlu0 %v2482
        %v2484 = vpop.xlane.xlu0 %2483
        %v2485 = vsel %vm657, %v2457, -inf
        %2486 = vmax.xlane.f32.xlu0 %v2485
        %v2487 = vpop.xlane.xlu0 %2486
        %v2488 = vsub.f32 %v2448, %v2460
        %v2489 = vsub.f32 %v2449, %v2463
        %v2490 = vsub.f32 %v2450, %v2466
        %v2491 = vsub.f32 %v2451, %v2469
        %v2492 = vsub.f32 %v2452, %v2472
        %v2493 = vsub.f32 %v2453, %v2475
        %v2494 = vsub.f32 %v2454, %v2478
        %v2495 = vsub.f32 %v2455, %v2481
        %v2496 = vsub.f32 %v2456, %v2484
        %v2497 = vsub.f32 %v2457, %v2487
        %v2498 = vmul.f32 %v2488, 1.442695
        %v2499 = vpow.pop %v2498
        %v2500 = vmul.f32 %v2489, 1.442695
        %v2501 = vpow.pop %v2500
        %v2502 = vmul.f32 %v2490, 1.442695
        %v2503 = vpow.pop %v2502
        %v2504 = vmul.f32 %v2491, 1.442695
        %v2505 = vpow.pop %v2504
        %v2506 = vmul.f32 %v2492, 1.442695
        %v2507 = vpow.pop %v2506
        %v2508 = vmul.f32 %v2493, 1.442695
        %v2509 = vpow.pop %v2508
        %v2510 = vmul.f32 %v2494, 1.442695
        %v2511 = vpow.pop %v2510
        %v2512 = vmul.f32 %v2495, 1.442695
        %v2513 = vpow.pop %v2512
        %v2514 = vmul.f32 %v2496, 1.442695
        %v2515 = vpow.pop %v2514
        %v2516 = vmul.f32 %v2497, 1.442695
        %v2517 = vpow.pop %v2516
        %v2518 = vsel %vm657, %v2499, 0.0
        %2519 = vadd.xlane.f32.xlu0 %v2518
        %v2520 = vpop.xlane.xlu0 %2519
        %v2521 = vsel %vm657, %v2501, 0.0
        %2522 = vadd.xlane.f32.xlu0 %v2521
        %v2523 = vpop.xlane.xlu0 %2522
        %v2524 = vsel %vm657, %v2503, 0.0
        %2525 = vadd.xlane.f32.xlu0 %v2524
        %v2526 = vpop.xlane.xlu0 %2525
        %v2527 = vsel %vm657, %v2505, 0.0
        %2528 = vadd.xlane.f32.xlu0 %v2527
        %v2529 = vpop.xlane.xlu0 %2528
        %v2530 = vsel %vm657, %v2507, 0.0
        %2531 = vadd.xlane.f32.xlu0 %v2530
        %v2532 = vpop.xlane.xlu0 %2531
        %v2533 = vsel %vm657, %v2509, 0.0
        %2534 = vadd.xlane.f32.xlu0 %v2533
        %v2535 = vpop.xlane.xlu0 %2534
        %v2536 = vsel %vm657, %v2511, 0.0
        %2537 = vadd.xlane.f32.xlu0 %v2536
        %v2538 = vpop.xlane.xlu0 %2537
        %v2539 = vsel %vm657, %v2513, 0.0
        %2540 = vadd.xlane.f32.xlu0 %v2539
        %v2541 = vpop.xlane.xlu0 %2540
        %v2542 = vsel %vm657, %v2515, 0.0
        %2543 = vadd.xlane.f32.xlu0 %v2542
        %v2544 = vpop.xlane.xlu0 %2543
        %v2545 = vsel %vm657, %v2517, 0.0
        %2546 = vadd.xlane.f32.xlu0 %v2545
        %v2547 = vpop.xlane.xlu0 %2546
        %2548 = vrot.lane.b32.xlu0 %v456, 48
        %v2549 = vpop.permute.xlu0 %2548
        %2550 = vrot.lane.b32.xlu0 %v459, 48
        %v2551 = vpop.permute.xlu0 %2550
        %2552 = vrot.lane.b32.xlu0 %v462, 48
        %v2553 = vpop.permute.xlu0 %2552
        %2554 = vrot.lane.b32.xlu0 %v465, 48
        %v2555 = vpop.permute.xlu0 %2554
        %2556 = vrot.lane.b32.xlu0 %v468, 48
        %v2557 = vpop.permute.xlu0 %2556
        %2558 = vrot.lane.b32.xlu0 %v471, 48
        %v2559 = vpop.permute.xlu0 %2558
        %2560 = vrot.lane.b32.xlu0 %v474, 48
        %v2561 = vpop.permute.xlu0 %2560
        %2562 = vrot.lane.b32.xlu0 %v477, 48
        %v2563 = vpop.permute.xlu0 %2562
        %2564 = vrot.lane.b32.xlu0 %v480, 48
        %v2565 = vpop.permute.xlu0 %2564
        %2566 = vrot.lane.b32.xlu0 %v483, 48
        %v2567 = vpop.permute.xlu0 %2566
        %v2579 = vsel %vm657, %v2499, 0
        %v2582 = vsel %vm657, %v2501, 0
        %v2585 = vsel %vm657, %v2503, 0
        %v2588 = vsel %vm657, %v2505, 0
        %v2591 = vsel %vm657, %v2507, 0
        %v2594 = vsel %vm657, %v2509, 0
        %v2597 = vsel %vm657, %v2511, 0
        %v2600 = vsel %vm657, %v2513, 0
        %v2603 = vsel %vm657, %v2515, 0
        %v2606 = vsel %vm657, %v2517, 0
        %2608 = vmatpush.msra.mxu0 0.0
        %2609 = vmatpush.msra.mxu0 0.0
        %2610 = vmatpush.msra.mxu0 0.0
        %2611 = vmatpush.msra.mxu0 0.0
        %2612 = vmatpush.msra.mxu0 0.0
        %2613 = vmatpush.msra.mxu0 0.0
        %2614 = vmatpush.msra.mxu0 %v2567
        %2615 = vmatpush.msra.mxu0 %v2565
        %2616 = vmatpush.msra.mxu0 %v2563
        %2617 = vmatpush.msra.mxu0 %v2561
        %2618 = vmatpush.msra.mxu0 %v2559
        %2619 = vmatpush.msra.mxu0 %v2557
        %2620 = vmatpush.msra.mxu0 %v2555
        %2621 = vmatpush.msra.mxu0 %v2553
        %2622 = vmatpush.msra.mxu0 %v2551
        %2623 = vmatpush.msra.mxu0 %v2549
        %2624 = vmatmul.f32.gmra.mxu0 %v2579
        %v2625 = vpop.f32.mrf.mxu0
        %v2626 = vadd.f32 0.0, %v2625
        %2627 = vmatmul.f32.gmra.mxu0 %v2582
        %v2628 = vpop.f32.mrf.mxu0
        %v2629 = vadd.f32 0.0, %v2628
        %2630 = vmatmul.f32.gmra.mxu0 %v2585
        %v2631 = vpop.f32.mrf.mxu0
        %v2632 = vadd.f32 0.0, %v2631
        %2633 = vmatmul.f32.gmra.mxu0 %v2588
        %v2634 = vpop.f32.mrf.mxu0
        %v2635 = vadd.f32 0.0, %v2634
        %2636 = vmatmul.f32.gmra.mxu0 %v2591
        %v2637 = vpop.f32.mrf.mxu0
        %v2638 = vadd.f32 0.0, %v2637
        %2639 = vmatmul.f32.gmra.mxu0 %v2594
        %v2640 = vpop.f32.mrf.mxu0
        %v2641 = vadd.f32 0.0, %v2640
        %2642 = vmatmul.f32.gmra.mxu0 %v2597
        %v2643 = vpop.f32.mrf.mxu0
        %v2644 = vadd.f32 0.0, %v2643
        %2645 = vmatmul.f32.gmra.mxu0 %v2600
        %v2646 = vpop.f32.mrf.mxu0
        %v2647 = vadd.f32 0.0, %v2646
        %2648 = vmatmul.f32.gmra.mxu0 %v2603
        %v2649 = vpop.f32.mrf.mxu0
        %v2650 = vadd.f32 0.0, %v2649
        %2651 = vmatmul.f32.gmra.mxu0 %v2606
        %v2652 = vpop.f32.mrf.mxu0
        %v2653 = vadd.f32 0.0, %v2652
        %2654 = vdwg.mxu0
        %v2655 = vrcp.pop %v2520
        %v2656 = vrcp.pop %v2523
        %v2657 = vrcp.pop %v2526
        %v2658 = vrcp.pop %v2529
        %v2659 = vrcp.pop %v2532
        %v2660 = vrcp.pop %v2535
        %v2661 = vrcp.pop %v2538
        %v2662 = vrcp.pop %v2541
        %v2663 = vrcp.pop %v2544
        %v2664 = vrcp.pop %v2547
        %v2665 = vmul.f32 %v2626, %v2655
        %v2666 = vmul.f32 %v2629, %v2656
        %v2667 = vmul.f32 %v2632, %v2657
        %v2668 = vmul.f32 %v2635, %v2658
        %v2669 = vmul.f32 %v2638, %v2659
        %v2670 = vmul.f32 %v2641, %v2660
        %v2671 = vmul.f32 %v2644, %v2661
        %v2672 = vmul.f32 %v2647, %v2662
        %v2673 = vmul.f32 %v2650, %v2663
        %v2674 = vmul.f32 %v2653, %v2664
        %2675 = vrot.lane.b32.xlu0 %v362, 32
        %v2676 = vpop.permute.xlu0 %2675
        %2677 = vrot.lane.b32.xlu0 %v365, 32
        %v2678 = vpop.permute.xlu0 %2677
        %2679 = vrot.lane.b32.xlu0 %v368, 32
        %v2680 = vpop.permute.xlu0 %2679
        %2681 = vrot.lane.b32.xlu0 %v371, 32
        %v2682 = vpop.permute.xlu0 %2681
        %2683 = vrot.lane.b32.xlu0 %v374, 32
        %v2684 = vpop.permute.xlu0 %2683
        %2685 = vrot.lane.b32.xlu0 %v377, 32
        %v2686 = vpop.permute.xlu0 %2685
        %2687 = vrot.lane.b32.xlu0 %v380, 32
        %v2688 = vpop.permute.xlu0 %2687
        %2689 = vrot.lane.b32.xlu0 %v383, 32
        %v2690 = vpop.permute.xlu0 %2689
        %2691 = vrot.lane.b32.xlu0 %v386, 32
        %v2692 = vpop.permute.xlu0 %2691
        %2693 = vrot.lane.b32.xlu0 %v389, 32
        %v2694 = vpop.permute.xlu0 %2693
        %2695 = vrot.lane.b32.xlu0 %v409, 32
        %v2696 = vpop.permute.xlu0 %2695
        %2697 = vrot.lane.b32.xlu0 %v412, 32
        %v2698 = vpop.permute.xlu0 %2697
        %2699 = vrot.lane.b32.xlu0 %v415, 32
        %v2700 = vpop.permute.xlu0 %2699
        %2701 = vrot.lane.b32.xlu0 %v418, 32
        %v2702 = vpop.permute.xlu0 %2701
        %2703 = vrot.lane.b32.xlu0 %v421, 32
        %v2704 = vpop.permute.xlu0 %2703
        %2705 = vrot.lane.b32.xlu0 %v424, 32
        %v2706 = vpop.permute.xlu0 %2705
        %2707 = vrot.lane.b32.xlu0 %v427, 32
        %v2708 = vpop.permute.xlu0 %2707
        %2709 = vrot.lane.b32.xlu0 %v430, 32
        %v2710 = vpop.permute.xlu0 %2709
        %2711 = vrot.lane.b32.xlu0 %v433, 32
        %v2712 = vpop.permute.xlu0 %2711
        %2713 = vrot.lane.b32.xlu0 %v436, 32
        %v2714 = vpop.permute.xlu0 %2713
        %v2715 = vsel %vm529, %v2676, 0
        %v2717 = vsel %vm529, %v2678, 0
        %v2719 = vsel %vm529, %v2680, 0
        %v2721 = vsel %vm529, %v2682, 0
        %v2723 = vsel %vm529, %v2684, 0
        %v2725 = vsel %vm529, %v2686, 0
        %v2727 = vsel %vm529, %v2688, 0
        %v2729 = vsel %vm529, %v2690, 0
        %v2731 = vsel %vm529, %v2692, 0
        %v2733 = vsel %vm529, %v2694, 0
        %v2735 = vsel %vm529, %v2696, 0
        %v2737 = vsel %vm529, %v2698, 0
        %v2739 = vsel %vm529, %v2700, 0
        %v2741 = vsel %vm529, %v2702, 0
        %v2743 = vsel %vm529, %v2704, 0
        %v2745 = vsel %vm529, %v2706, 0
        %v2747 = vsel %vm529, %v2708, 0
        %v2749 = vsel %vm529, %v2710, 0
        %v2751 = vsel %vm529, %v2712, 0
        %v2753 = vsel %vm529, %v2714, 0
        %2755 = vmatpush.xpose.msra.mxu0 0.0
        %2756 = vmatpush.xpose.msra.mxu0 0.0
        %2757 = vmatpush.xpose.msra.mxu0 0.0
        %2758 = vmatpush.xpose.msra.mxu0 0.0
        %2759 = vmatpush.xpose.msra.mxu0 0.0
        %2760 = vmatpush.xpose.msra.mxu0 0.0
        %2761 = vmatpush.xpose.msra.mxu0 %v2753
        %2762 = vmatpush.xpose.msra.mxu0 %v2751
        %2763 = vmatpush.xpose.msra.mxu0 %v2749
        %2764 = vmatpush.xpose.msra.mxu0 %v2747
        %2765 = vmatpush.xpose.msra.mxu0 %v2745
        %2766 = vmatpush.xpose.msra.mxu0 %v2743
        %2767 = vmatpush.xpose.msra.mxu0 %v2741
        %2768 = vmatpush.xpose.msra.mxu0 %v2739
        %2769 = vmatpush.xpose.msra.mxu0 %v2737
        %2770 = vmatpush.xpose.msra.mxu0 %v2735
        %2771 = vmatmul.f32.gmra.mxu0 %v2715
        %v2772 = vpop.f32.mrf.mxu0
        %v2773 = vadd.f32 0.0, %v2772
        %2774 = vmatmul.f32.gmra.mxu0 %v2717
        %v2775 = vpop.f32.mrf.mxu0
        %v2776 = vadd.f32 0.0, %v2775
        %2777 = vmatmul.f32.gmra.mxu0 %v2719
        %v2778 = vpop.f32.mrf.mxu0
        %v2779 = vadd.f32 0.0, %v2778
        %2780 = vmatmul.f32.gmra.mxu0 %v2721
        %v2781 = vpop.f32.mrf.mxu0
        %v2782 = vadd.f32 0.0, %v2781
        %2783 = vmatmul.f32.gmra.mxu0 %v2723
        %v2784 = vpop.f32.mrf.mxu0
        %v2785 = vadd.f32 0.0, %v2784
        %2786 = vmatmul.f32.gmra.mxu0 %v2725
        %v2787 = vpop.f32.mrf.mxu0
        %v2788 = vadd.f32 0.0, %v2787
        %2789 = vmatmul.f32.gmra.mxu0 %v2727
        %v2790 = vpop.f32.mrf.mxu0
        %v2791 = vadd.f32 0.0, %v2790
        %2792 = vmatmul.f32.gmra.mxu0 %v2729
        %v2793 = vpop.f32.mrf.mxu0
        %v2794 = vadd.f32 0.0, %v2793
        %2795 = vmatmul.f32.gmra.mxu0 %v2731
        %v2796 = vpop.f32.mrf.mxu0
        %v2797 = vadd.f32 0.0, %v2796
        %2798 = vmatmul.f32.gmra.mxu0 %v2733
        %v2799 = vpop.f32.mrf.mxu0
        %v2800 = vadd.f32 0.0, %v2799
        %2801 = vdwg.mxu0
        %v2802 = vmul.f32 %v2773, 0.25
        %v2803 = vmul.f32 %v2776, 0.25
        %v2804 = vmul.f32 %v2779, 0.25
        %v2805 = vmul.f32 %v2782, 0.25
        %v2806 = vmul.f32 %v2785, 0.25
        %v2807 = vmul.f32 %v2788, 0.25
        %v2808 = vmul.f32 %v2791, 0.25
        %v2809 = vmul.f32 %v2794, 0.25
        %v2810 = vmul.f32 %v2797, 0.25
        %v2811 = vmul.f32 %v2800, 0.25
        %v2812 = vadd.f32 %v2802, %v519
        %v2813 = vadd.f32 %v2803, %v520
        %v2814 = vadd.f32 %v2804, %v521
        %v2815 = vadd.f32 %v2805, %v522
        %v2816 = vadd.f32 %v2806, %v523
        %v2817 = vadd.f32 %v2807, %v524
        %v2818 = vadd.f32 %v2808, %v525
        %v2819 = vadd.f32 %v2809, %v526
        %v2820 = vadd.f32 %v2810, %v527
        %v2821 = vadd.f32 %v2811, %v528
        %v2822 = vsel %vm657, %v2812, -inf
        %2823 = vmax.xlane.f32.xlu0 %v2822
        %v2824 = vpop.xlane.xlu0 %2823
        %v2825 = vsel %vm657, %v2813, -inf
        %2826 = vmax.xlane.f32.xlu0 %v2825
        %v2827 = vpop.xlane.xlu0 %2826
        %v2828 = vsel %vm657, %v2814, -inf
        %2829 = vmax.xlane.f32.xlu0 %v2828
        %v2830 = vpop.xlane.xlu0 %2829
        %v2831 = vsel %vm657, %v2815, -inf
        %2832 = vmax.xlane.f32.xlu0 %v2831
        %v2833 = vpop.xlane.xlu0 %2832
        %v2834 = vsel %vm657, %v2816, -inf
        %2835 = vmax.xlane.f32.xlu0 %v2834
        %v2836 = vpop.xlane.xlu0 %2835
        %v2837 = vsel %vm657, %v2817, -inf
        %2838 = vmax.xlane.f32.xlu0 %v2837
        %v2839 = vpop.xlane.xlu0 %2838
        %v2840 = vsel %vm657, %v2818, -inf
        %2841 = vmax.xlane.f32.xlu0 %v2840
        %v2842 = vpop.xlane.xlu0 %2841
        %v2843 = vsel %vm657, %v2819, -inf
        %2844 = vmax.xlane.f32.xlu0 %v2843
        %v2845 = vpop.xlane.xlu0 %2844
        %v2846 = vsel %vm657, %v2820, -inf
        %2847 = vmax.xlane.f32.xlu0 %v2846
        %v2848 = vpop.xlane.xlu0 %2847
        %v2849 = vsel %vm657, %v2821, -inf
        %2850 = vmax.xlane.f32.xlu0 %v2849
        %v2851 = vpop.xlane.xlu0 %2850
        %v2852 = vsub.f32 %v2812, %v2824
        %v2853 = vsub.f32 %v2813, %v2827
        %v2854 = vsub.f32 %v2814, %v2830
        %v2855 = vsub.f32 %v2815, %v2833
        %v2856 = vsub.f32 %v2816, %v2836
        %v2857 = vsub.f32 %v2817, %v2839
        %v2858 = vsub.f32 %v2818, %v2842
        %v2859 = vsub.f32 %v2819, %v2845
        %v2860 = vsub.f32 %v2820, %v2848
        %v2861 = vsub.f32 %v2821, %v2851
        %v2862 = vmul.f32 %v2852, 1.442695
        %v2863 = vpow.pop %v2862
        %v2864 = vmul.f32 %v2853, 1.442695
        %v2865 = vpow.pop %v2864
        %v2866 = vmul.f32 %v2854, 1.442695
        %v2867 = vpow.pop %v2866
        %v2868 = vmul.f32 %v2855, 1.442695
        %v2869 = vpow.pop %v2868
        %v2870 = vmul.f32 %v2856, 1.442695
        %v2871 = vpow.pop %v2870
        %v2872 = vmul.f32 %v2857, 1.442695
        %v2873 = vpow.pop %v2872
        %v2874 = vmul.f32 %v2858, 1.442695
        %v2875 = vpow.pop %v2874
        %v2876 = vmul.f32 %v2859, 1.442695
        %v2877 = vpow.pop %v2876
        %v2878 = vmul.f32 %v2860, 1.442695
        %v2879 = vpow.pop %v2878
        %v2880 = vmul.f32 %v2861, 1.442695
        %v2881 = vpow.pop %v2880
        %v2882 = vsel %vm657, %v2863, 0.0
        %2883 = vadd.xlane.f32.xlu0 %v2882
        %v2884 = vpop.xlane.xlu0 %2883
        %v2885 = vsel %vm657, %v2865, 0.0
        %2886 = vadd.xlane.f32.xlu0 %v2885
        %v2887 = vpop.xlane.xlu0 %2886
        %v2888 = vsel %vm657, %v2867, 0.0
        %2889 = vadd.xlane.f32.xlu0 %v2888
        %v2890 = vpop.xlane.xlu0 %2889
        %v2891 = vsel %vm657, %v2869, 0.0
        %2892 = vadd.xlane.f32.xlu0 %v2891
        %v2893 = vpop.xlane.xlu0 %2892
        %v2894 = vsel %vm657, %v2871, 0.0
        %2895 = vadd.xlane.f32.xlu0 %v2894
        %v2896 = vpop.xlane.xlu0 %2895
        %v2897 = vsel %vm657, %v2873, 0.0
        %2898 = vadd.xlane.f32.xlu0 %v2897
        %v2899 = vpop.xlane.xlu0 %2898
        %v2900 = vsel %vm657, %v2875, 0.0
        %2901 = vadd.xlane.f32.xlu0 %v2900
        %v2902 = vpop.xlane.xlu0 %2901
        %v2903 = vsel %vm657, %v2877, 0.0
        %2904 = vadd.xlane.f32.xlu0 %v2903
        %v2905 = vpop.xlane.xlu0 %2904
        %v2906 = vsel %vm657, %v2879, 0.0
        %2907 = vadd.xlane.f32.xlu0 %v2906
        %v2908 = vpop.xlane.xlu0 %2907
        %v2909 = vsel %vm657, %v2881, 0.0
        %2910 = vadd.xlane.f32.xlu0 %v2909
        %v2911 = vpop.xlane.xlu0 %2910
        %2912 = vrot.lane.b32.xlu0 %v456, 32
        %v2913 = vpop.permute.xlu0 %2912
        %2914 = vrot.lane.b32.xlu0 %v459, 32
        %v2915 = vpop.permute.xlu0 %2914
        %2916 = vrot.lane.b32.xlu0 %v462, 32
        %v2917 = vpop.permute.xlu0 %2916
        %2918 = vrot.lane.b32.xlu0 %v465, 32
        %v2919 = vpop.permute.xlu0 %2918
        %2920 = vrot.lane.b32.xlu0 %v468, 32
        %v2921 = vpop.permute.xlu0 %2920
        %2922 = vrot.lane.b32.xlu0 %v471, 32
        %v2923 = vpop.permute.xlu0 %2922
        %2924 = vrot.lane.b32.xlu0 %v474, 32
        %v2925 = vpop.permute.xlu0 %2924
        %2926 = vrot.lane.b32.xlu0 %v477, 32
        %v2927 = vpop.permute.xlu0 %2926
        %2928 = vrot.lane.b32.xlu0 %v480, 32
        %v2929 = vpop.permute.xlu0 %2928
        %2930 = vrot.lane.b32.xlu0 %v483, 32
        %v2931 = vpop.permute.xlu0 %2930
        %v2943 = vsel %vm657, %v2863, 0
        %v2946 = vsel %vm657, %v2865, 0
        %v2949 = vsel %vm657, %v2867, 0
        %v2952 = vsel %vm657, %v2869, 0
        %v2955 = vsel %vm657, %v2871, 0
        %v2958 = vsel %vm657, %v2873, 0
        %v2961 = vsel %vm657, %v2875, 0
        %v2964 = vsel %vm657, %v2877, 0
        %v2967 = vsel %vm657, %v2879, 0
        %v2970 = vsel %vm657, %v2881, 0
        %2972 = vmatpush.msra.mxu0 0.0
        %2973 = vmatpush.msra.mxu0 0.0
        %2974 = vmatpush.msra.mxu0 0.0
        %2975 = vmatpush.msra.mxu0 0.0
        %2976 = vmatpush.msra.mxu0 0.0
        %2977 = vmatpush.msra.mxu0 0.0
        %2978 = vmatpush.msra.mxu0 %v2931
        %2979 = vmatpush.msra.mxu0 %v2929
        %2980 = vmatpush.msra.mxu0 %v2927
        %2981 = vmatpush.msra.mxu0 %v2925
        %2982 = vmatpush.msra.mxu0 %v2923
        %2983 = vmatpush.msra.mxu0 %v2921
        %2984 = vmatpush.msra.mxu0 %v2919
        %2985 = vmatpush.msra.mxu0 %v2917
        %2986 = vmatpush.msra.mxu0 %v2915
        %2987 = vmatpush.msra.mxu0 %v2913
        %2988 = vmatmul.f32.gmra.mxu0 %v2943
        %v2989 = vpop.f32.mrf.mxu0
        %v2990 = vadd.f32 0.0, %v2989
        %2991 = vmatmul.f32.gmra.mxu0 %v2946
        %v2992 = vpop.f32.mrf.mxu0
        %v2993 = vadd.f32 0.0, %v2992
        %2994 = vmatmul.f32.gmra.mxu0 %v2949
        %v2995 = vpop.f32.mrf.mxu0
        %v2996 = vadd.f32 0.0, %v2995
        %2997 = vmatmul.f32.gmra.mxu0 %v2952
        %v2998 = vpop.f32.mrf.mxu0
        %v2999 = vadd.f32 0.0, %v2998
        %3000 = vmatmul.f32.gmra.mxu0 %v2955
        %v3001 = vpop.f32.mrf.mxu0
        %v3002 = vadd.f32 0.0, %v3001
        %3003 = vmatmul.f32.gmra.mxu0 %v2958
        %v3004 = vpop.f32.mrf.mxu0
        %v3005 = vadd.f32 0.0, %v3004
        %3006 = vmatmul.f32.gmra.mxu0 %v2961
        %v3007 = vpop.f32.mrf.mxu0
        %v3008 = vadd.f32 0.0, %v3007
        %3009 = vmatmul.f32.gmra.mxu0 %v2964
        %v3010 = vpop.f32.mrf.mxu0
        %v3011 = vadd.f32 0.0, %v3010
        %3012 = vmatmul.f32.gmra.mxu0 %v2967
        %v3013 = vpop.f32.mrf.mxu0
        %v3014 = vadd.f32 0.0, %v3013
        %3015 = vmatmul.f32.gmra.mxu0 %v2970
        %v3016 = vpop.f32.mrf.mxu0
        %v3017 = vadd.f32 0.0, %v3016
        %3018 = vdwg.mxu0
        %v3019 = vrcp.pop %v2884
        %v3020 = vrcp.pop %v2887
        %v3021 = vrcp.pop %v2890
        %v3022 = vrcp.pop %v2893
        %v3023 = vrcp.pop %v2896
        %v3024 = vrcp.pop %v2899
        %v3025 = vrcp.pop %v2902
        %v3026 = vrcp.pop %v2905
        %v3027 = vrcp.pop %v2908
        %v3028 = vrcp.pop %v2911
        %v3029 = vmul.f32 %v2990, %v3019
        %v3030 = vmul.f32 %v2993, %v3020
        %v3031 = vmul.f32 %v2996, %v3021
        %v3032 = vmul.f32 %v2999, %v3022
        %v3033 = vmul.f32 %v3002, %v3023
        %v3034 = vmul.f32 %v3005, %v3024
        %v3035 = vmul.f32 %v3008, %v3025
        %v3036 = vmul.f32 %v3011, %v3026
        %v3037 = vmul.f32 %v3014, %v3027
        %v3038 = vmul.f32 %v3017, %v3028
        %3039 = vrot.lane.b32.xlu0 %v362, 16
        %v3040 = vpop.permute.xlu0 %3039
        %3041 = vrot.lane.b32.xlu0 %v365, 16
        %v3042 = vpop.permute.xlu0 %3041
        %3043 = vrot.lane.b32.xlu0 %v368, 16
        %v3044 = vpop.permute.xlu0 %3043
        %3045 = vrot.lane.b32.xlu0 %v371, 16
        %v3046 = vpop.permute.xlu0 %3045
        %3047 = vrot.lane.b32.xlu0 %v374, 16
        %v3048 = vpop.permute.xlu0 %3047
        %3049 = vrot.lane.b32.xlu0 %v377, 16
        %v3050 = vpop.permute.xlu0 %3049
        %3051 = vrot.lane.b32.xlu0 %v380, 16
        %v3052 = vpop.permute.xlu0 %3051
        %3053 = vrot.lane.b32.xlu0 %v383, 16
        %v3054 = vpop.permute.xlu0 %3053
        %3055 = vrot.lane.b32.xlu0 %v386, 16
        %v3056 = vpop.permute.xlu0 %3055
        %3057 = vrot.lane.b32.xlu0 %v389, 16
        %v3058 = vpop.permute.xlu0 %3057
        %3059 = vrot.lane.b32.xlu0 %v409, 16
        %v3060 = vpop.permute.xlu0 %3059
        %3061 = vrot.lane.b32.xlu0 %v412, 16
        %v3062 = vpop.permute.xlu0 %3061
        %3063 = vrot.lane.b32.xlu0 %v415, 16
        %v3064 = vpop.permute.xlu0 %3063
        %3065 = vrot.lane.b32.xlu0 %v418, 16
        %v3066 = vpop.permute.xlu0 %3065
        %3067 = vrot.lane.b32.xlu0 %v421, 16
        %v3068 = vpop.permute.xlu0 %3067
        %3069 = vrot.lane.b32.xlu0 %v424, 16
        %v3070 = vpop.permute.xlu0 %3069
        %3071 = vrot.lane.b32.xlu0 %v427, 16
        %v3072 = vpop.permute.xlu0 %3071
        %3073 = vrot.lane.b32.xlu0 %v430, 16
        %v3074 = vpop.permute.xlu0 %3073
        %3075 = vrot.lane.b32.xlu0 %v433, 16
        %v3076 = vpop.permute.xlu0 %3075
        %3077 = vrot.lane.b32.xlu0 %v436, 16
        %v3078 = vpop.permute.xlu0 %3077
        %v3079 = vsel %vm529, %v3040, 0
        %v3081 = vsel %vm529, %v3042, 0
        %v3083 = vsel %vm529, %v3044, 0
        %v3085 = vsel %vm529, %v3046, 0
        %v3087 = vsel %vm529, %v3048, 0
        %v3089 = vsel %vm529, %v3050, 0
        %v3091 = vsel %vm529, %v3052, 0
        %v3093 = vsel %vm529, %v3054, 0
        %v3095 = vsel %vm529, %v3056, 0
        %v3097 = vsel %vm529, %v3058, 0
        %v3099 = vsel %vm529, %v3060, 0
        %v3101 = vsel %vm529, %v3062, 0
        %v3103 = vsel %vm529, %v3064, 0
        %v3105 = vsel %vm529, %v3066, 0
        %v3107 = vsel %vm529, %v3068, 0
        %v3109 = vsel %vm529, %v3070, 0
        %v3111 = vsel %vm529, %v3072, 0
        %v3113 = vsel %vm529, %v3074, 0
        %v3115 = vsel %vm529, %v3076, 0
        %v3117 = vsel %vm529, %v3078, 0
        %3119 = vmatpush.xpose.msra.mxu0 0.0
        %3120 = vmatpush.xpose.msra.mxu0 0.0
        %3121 = vmatpush.xpose.msra.mxu0 0.0
        %3122 = vmatpush.xpose.msra.mxu0 0.0
        %3123 = vmatpush.xpose.msra.mxu0 0.0
        %3124 = vmatpush.xpose.msra.mxu0 0.0
        %3125 = vmatpush.xpose.msra.mxu0 %v3117
        %3126 = vmatpush.xpose.msra.mxu0 %v3115
        %3127 = vmatpush.xpose.msra.mxu0 %v3113
        %3128 = vmatpush.xpose.msra.mxu0 %v3111
        %3129 = vmatpush.xpose.msra.mxu0 %v3109
        %3130 = vmatpush.xpose.msra.mxu0 %v3107
        %3131 = vmatpush.xpose.msra.mxu0 %v3105
        %3132 = vmatpush.xpose.msra.mxu0 %v3103
        %3133 = vmatpush.xpose.msra.mxu0 %v3101
        %3134 = vmatpush.xpose.msra.mxu0 %v3099
        %3135 = vmatmul.f32.gmra.mxu0 %v3079
        %v3136 = vpop.f32.mrf.mxu0
        %v3137 = vadd.f32 0.0, %v3136
        %3138 = vmatmul.f32.gmra.mxu0 %v3081
        %v3139 = vpop.f32.mrf.mxu0
        %v3140 = vadd.f32 0.0, %v3139
        %3141 = vmatmul.f32.gmra.mxu0 %v3083
        %v3142 = vpop.f32.mrf.mxu0
        %v3143 = vadd.f32 0.0, %v3142
        %3144 = vmatmul.f32.gmra.mxu0 %v3085
        %v3145 = vpop.f32.mrf.mxu0
        %v3146 = vadd.f32 0.0, %v3145
        %3147 = vmatmul.f32.gmra.mxu0 %v3087
        %v3148 = vpop.f32.mrf.mxu0
        %v3149 = vadd.f32 0.0, %v3148
        %3150 = vmatmul.f32.gmra.mxu0 %v3089
        %v3151 = vpop.f32.mrf.mxu0
        %v3152 = vadd.f32 0.0, %v3151
        %3153 = vmatmul.f32.gmra.mxu0 %v3091
        %v3154 = vpop.f32.mrf.mxu0
        %v3155 = vadd.f32 0.0, %v3154
        %3156 = vmatmul.f32.gmra.mxu0 %v3093
        %v3157 = vpop.f32.mrf.mxu0
        %v3158 = vadd.f32 0.0, %v3157
        %3159 = vmatmul.f32.gmra.mxu0 %v3095
        %v3160 = vpop.f32.mrf.mxu0
        %v3161 = vadd.f32 0.0, %v3160
        %3162 = vmatmul.f32.gmra.mxu0 %v3097
        %v3163 = vpop.f32.mrf.mxu0
        %v3164 = vadd.f32 0.0, %v3163
        %3165 = vdwg.mxu0
        %v3166 = vmul.f32 %v3137, 0.25
        %v3167 = vmul.f32 %v3140, 0.25
        %v3168 = vmul.f32 %v3143, 0.25
        %v3169 = vmul.f32 %v3146, 0.25
        %v3170 = vmul.f32 %v3149, 0.25
        %v3171 = vmul.f32 %v3152, 0.25
        %v3172 = vmul.f32 %v3155, 0.25
        %v3173 = vmul.f32 %v3158, 0.25
        %v3174 = vmul.f32 %v3161, 0.25
        %v3175 = vmul.f32 %v3164, 0.25
        %v3176 = vadd.f32 %v3166, %v519
        %v3177 = vadd.f32 %v3167, %v520
        %v3178 = vadd.f32 %v3168, %v521
        %v3179 = vadd.f32 %v3169, %v522
        %v3180 = vadd.f32 %v3170, %v523
        %v3181 = vadd.f32 %v3171, %v524
        %v3182 = vadd.f32 %v3172, %v525
        %v3183 = vadd.f32 %v3173, %v526
        %v3184 = vadd.f32 %v3174, %v527
        %v3185 = vadd.f32 %v3175, %v528
        %v3186 = vsel %vm657, %v3176, -inf
        %3187 = vmax.xlane.f32.xlu0 %v3186
        %v3188 = vpop.xlane.xlu0 %3187
        %v3189 = vsel %vm657, %v3177, -inf
        %3190 = vmax.xlane.f32.xlu0 %v3189
        %v3191 = vpop.xlane.xlu0 %3190
        %v3192 = vsel %vm657, %v3178, -inf
        %3193 = vmax.xlane.f32.xlu0 %v3192
        %v3194 = vpop.xlane.xlu0 %3193
        %v3195 = vsel %vm657, %v3179, -inf
        %3196 = vmax.xlane.f32.xlu0 %v3195
        %v3197 = vpop.xlane.xlu0 %3196
        %v3198 = vsel %vm657, %v3180, -inf
        %3199 = vmax.xlane.f32.xlu0 %v3198
        %v3200 = vpop.xlane.xlu0 %3199
        %v3201 = vsel %vm657, %v3181, -inf
        %3202 = vmax.xlane.f32.xlu0 %v3201
        %v3203 = vpop.xlane.xlu0 %3202
        %v3204 = vsel %vm657, %v3182, -inf
        %3205 = vmax.xlane.f32.xlu0 %v3204
        %v3206 = vpop.xlane.xlu0 %3205
        %v3207 = vsel %vm657, %v3183, -inf
        %3208 = vmax.xlane.f32.xlu0 %v3207
        %v3209 = vpop.xlane.xlu0 %3208
        %v3210 = vsel %vm657, %v3184, -inf
        %3211 = vmax.xlane.f32.xlu0 %v3210
        %v3212 = vpop.xlane.xlu0 %3211
        %v3213 = vsel %vm657, %v3185, -inf
        %3214 = vmax.xlane.f32.xlu0 %v3213
        %v3215 = vpop.xlane.xlu0 %3214
        %v3216 = vsub.f32 %v3176, %v3188
        %v3217 = vsub.f32 %v3177, %v3191
        %v3218 = vsub.f32 %v3178, %v3194
        %v3219 = vsub.f32 %v3179, %v3197
        %v3220 = vsub.f32 %v3180, %v3200
        %v3221 = vsub.f32 %v3181, %v3203
        %v3222 = vsub.f32 %v3182, %v3206
        %v3223 = vsub.f32 %v3183, %v3209
        %v3224 = vsub.f32 %v3184, %v3212
        %v3225 = vsub.f32 %v3185, %v3215
        %v3226 = vmul.f32 %v3216, 1.442695
        %v3227 = vpow.pop %v3226
        %v3228 = vmul.f32 %v3217, 1.442695
        %v3229 = vpow.pop %v3228
        %v3230 = vmul.f32 %v3218, 1.442695
        %v3231 = vpow.pop %v3230
        %v3232 = vmul.f32 %v3219, 1.442695
        %v3233 = vpow.pop %v3232
        %v3234 = vmul.f32 %v3220, 1.442695
        %v3235 = vpow.pop %v3234
        %v3236 = vmul.f32 %v3221, 1.442695
        %v3237 = vpow.pop %v3236
        %v3238 = vmul.f32 %v3222, 1.442695
        %v3239 = vpow.pop %v3238
        %v3240 = vmul.f32 %v3223, 1.442695
        %v3241 = vpow.pop %v3240
        %v3242 = vmul.f32 %v3224, 1.442695
        %v3243 = vpow.pop %v3242
        %v3244 = vmul.f32 %v3225, 1.442695
        %v3245 = vpow.pop %v3244
        %v3246 = vsel %vm657, %v3227, 0.0
        %3247 = vadd.xlane.f32.xlu0 %v3246
        %v3248 = vpop.xlane.xlu0 %3247
        %v3249 = vsel %vm657, %v3229, 0.0
        %3250 = vadd.xlane.f32.xlu0 %v3249
        %v3251 = vpop.xlane.xlu0 %3250
        %v3252 = vsel %vm657, %v3231, 0.0
        %3253 = vadd.xlane.f32.xlu0 %v3252
        %v3254 = vpop.xlane.xlu0 %3253
        %v3255 = vsel %vm657, %v3233, 0.0
        %3256 = vadd.xlane.f32.xlu0 %v3255
        %v3257 = vpop.xlane.xlu0 %3256
        %v3258 = vsel %vm657, %v3235, 0.0
        %3259 = vadd.xlane.f32.xlu0 %v3258
        %v3260 = vpop.xlane.xlu0 %3259
        %v3261 = vsel %vm657, %v3237, 0.0
        %3262 = vadd.xlane.f32.xlu0 %v3261
        %v3263 = vpop.xlane.xlu0 %3262
        %v3264 = vsel %vm657, %v3239, 0.0
        %3265 = vadd.xlane.f32.xlu0 %v3264
        %v3266 = vpop.xlane.xlu0 %3265
        %v3267 = vsel %vm657, %v3241, 0.0
        %3268 = vadd.xlane.f32.xlu0 %v3267
        %v3269 = vpop.xlane.xlu0 %3268
        %v3270 = vsel %vm657, %v3243, 0.0
        %3271 = vadd.xlane.f32.xlu0 %v3270
        %v3272 = vpop.xlane.xlu0 %3271
        %v3273 = vsel %vm657, %v3245, 0.0
        %3274 = vadd.xlane.f32.xlu0 %v3273
        %v3275 = vpop.xlane.xlu0 %3274
        %3276 = vrot.lane.b32.xlu0 %v456, 16
        %v3277 = vpop.permute.xlu0 %3276
        %3278 = vrot.lane.b32.xlu0 %v459, 16
        %v3279 = vpop.permute.xlu0 %3278
        %3280 = vrot.lane.b32.xlu0 %v462, 16
        %v3281 = vpop.permute.xlu0 %3280
        %3282 = vrot.lane.b32.xlu0 %v465, 16
        %v3283 = vpop.permute.xlu0 %3282
        %3284 = vrot.lane.b32.xlu0 %v468, 16
        %v3285 = vpop.permute.xlu0 %3284
        %3286 = vrot.lane.b32.xlu0 %v471, 16
        %v3287 = vpop.permute.xlu0 %3286
        %3288 = vrot.lane.b32.xlu0 %v474, 16
        %v3289 = vpop.permute.xlu0 %3288
        %3290 = vrot.lane.b32.xlu0 %v477, 16
        %v3291 = vpop.permute.xlu0 %3290
        %3292 = vrot.lane.b32.xlu0 %v480, 16
        %v3293 = vpop.permute.xlu0 %3292
        %3294 = vrot.lane.b32.xlu0 %v483, 16
        %v3295 = vpop.permute.xlu0 %3294
        %v3307 = vsel %vm657, %v3227, 0
        %v3310 = vsel %vm657, %v3229, 0
        %v3313 = vsel %vm657, %v3231, 0
        %v3316 = vsel %vm657, %v3233, 0
        %v3319 = vsel %vm657, %v3235, 0
        %v3322 = vsel %vm657, %v3237, 0
        %v3325 = vsel %vm657, %v3239, 0
        %v3328 = vsel %vm657, %v3241, 0
        %v3331 = vsel %vm657, %v3243, 0
        %v3334 = vsel %vm657, %v3245, 0
        %3336 = vmatpush.msra.mxu0 0.0
        %3337 = vmatpush.msra.mxu0 0.0
        %3338 = vmatpush.msra.mxu0 0.0
        %3339 = vmatpush.msra.mxu0 0.0
        %3340 = vmatpush.msra.mxu0 0.0
        %3341 = vmatpush.msra.mxu0 0.0
        %3342 = vmatpush.msra.mxu0 %v3295
        %3343 = vmatpush.msra.mxu0 %v3293
        %3344 = vmatpush.msra.mxu0 %v3291
        %3345 = vmatpush.msra.mxu0 %v3289
        %3346 = vmatpush.msra.mxu0 %v3287
        %3347 = vmatpush.msra.mxu0 %v3285
        %3348 = vmatpush.msra.mxu0 %v3283
        %3349 = vmatpush.msra.mxu0 %v3281
        %3350 = vmatpush.msra.mxu0 %v3279
        %3351 = vmatpush.msra.mxu0 %v3277
        %3352 = vmatmul.f32.gmra.mxu0 %v3307
        %v3353 = vpop.f32.mrf.mxu0
        %v3354 = vadd.f32 0.0, %v3353
        %3355 = vmatmul.f32.gmra.mxu0 %v3310
        %v3356 = vpop.f32.mrf.mxu0
        %v3357 = vadd.f32 0.0, %v3356
        %3358 = vmatmul.f32.gmra.mxu0 %v3313
        %v3359 = vpop.f32.mrf.mxu0
        %v3360 = vadd.f32 0.0, %v3359
        %3361 = vmatmul.f32.gmra.mxu0 %v3316
        %v3362 = vpop.f32.mrf.mxu0
        %v3363 = vadd.f32 0.0, %v3362
        %3364 = vmatmul.f32.gmra.mxu0 %v3319
        %v3365 = vpop.f32.mrf.mxu0
        %v3366 = vadd.f32 0.0, %v3365
        %3367 = vmatmul.f32.gmra.mxu0 %v3322
        %v3368 = vpop.f32.mrf.mxu0
        %v3369 = vadd.f32 0.0, %v3368
        %3370 = vmatmul.f32.gmra.mxu0 %v3325
        %v3371 = vpop.f32.mrf.mxu0
        %v3372 = vadd.f32 0.0, %v3371
        %3373 = vmatmul.f32.gmra.mxu0 %v3328
        %v3374 = vpop.f32.mrf.mxu0
        %v3375 = vadd.f32 0.0, %v3374
        %3376 = vmatmul.f32.gmra.mxu0 %v3331
        %v3377 = vpop.f32.mrf.mxu0
        %v3378 = vadd.f32 0.0, %v3377
        %3379 = vmatmul.f32.gmra.mxu0 %v3334
        %v3380 = vpop.f32.mrf.mxu0
        %v3381 = vadd.f32 0.0, %v3380
        %3382 = vdwg.mxu0
        %v3383 = vrcp.pop %v3248
        %v3384 = vrcp.pop %v3251
        %v3385 = vrcp.pop %v3254
        %v3386 = vrcp.pop %v3257
        %v3387 = vrcp.pop %v3260
        %v3388 = vrcp.pop %v3263
        %v3389 = vrcp.pop %v3266
        %v3390 = vrcp.pop %v3269
        %v3391 = vrcp.pop %v3272
        %v3392 = vrcp.pop %v3275
        %v3393 = vmul.f32 %v3354, %v3383
        %v3394 = vmul.f32 %v3357, %v3384
        %v3395 = vmul.f32 %v3360, %v3385
        %v3396 = vmul.f32 %v3363, %v3386
        %v3397 = vmul.f32 %v3366, %v3387
        %v3398 = vmul.f32 %v3369, %v3388
        %v3399 = vmul.f32 %v3372, %v3389
        %v3400 = vmul.f32 %v3375, %v3390
        %v3401 = vmul.f32 %v3378, %v3391
        %v3402 = vmul.f32 %v3381, %v3392
        %3413 = vrot.lane.b32.xlu0 %v1209, 16
        %v3414 = vpop.permute.xlu0 %3413
        %3415 = vrot.lane.b32.xlu0 %v1210, 16
        %v3416 = vpop.permute.xlu0 %3415
        %3417 = vrot.lane.b32.xlu0 %v1211, 16
        %v3418 = vpop.permute.xlu0 %3417
        %3419 = vrot.lane.b32.xlu0 %v1212, 16
        %v3420 = vpop.permute.xlu0 %3419
        %3421 = vrot.lane.b32.xlu0 %v1213, 16
        %v3422 = vpop.permute.xlu0 %3421
        %3423 = vrot.lane.b32.xlu0 %v1214, 16
        %v3424 = vpop.permute.xlu0 %3423
        %3425 = vrot.lane.b32.xlu0 %v1215, 16
        %v3426 = vpop.permute.xlu0 %3425
        %3427 = vrot.lane.b32.xlu0 %v1216, 16
        %v3428 = vpop.permute.xlu0 %3427
        %3429 = vrot.lane.b32.xlu0 %v1217, 16
        %v3430 = vpop.permute.xlu0 %3429
        %3431 = vrot.lane.b32.xlu0 %v1218, 16
        %v3432 = vpop.permute.xlu0 %3431
        %3453 = vrot.lane.b32.xlu0 %v1573, 32
        %v3454 = vpop.permute.xlu0 %3453
        %3455 = vrot.lane.b32.xlu0 %v1574, 32
        %v3456 = vpop.permute.xlu0 %3455
        %3457 = vrot.lane.b32.xlu0 %v1575, 32
        %v3458 = vpop.permute.xlu0 %3457
        %3459 = vrot.lane.b32.xlu0 %v1576, 32
        %v3460 = vpop.permute.xlu0 %3459
        %3461 = vrot.lane.b32.xlu0 %v1577, 32
        %v3462 = vpop.permute.xlu0 %3461
        %3463 = vrot.lane.b32.xlu0 %v1578, 32
        %v3464 = vpop.permute.xlu0 %3463
        %3465 = vrot.lane.b32.xlu0 %v1579, 32
        %v3466 = vpop.permute.xlu0 %3465
        %3467 = vrot.lane.b32.xlu0 %v1580, 32
        %v3468 = vpop.permute.xlu0 %3467
        %3469 = vrot.lane.b32.xlu0 %v1581, 32
        %v3470 = vpop.permute.xlu0 %3469
        %3471 = vrot.lane.b32.xlu0 %v1582, 32
        %v3472 = vpop.permute.xlu0 %3471
        %3493 = vrot.lane.b32.xlu0 %v1937, 48
        %v3494 = vpop.permute.xlu0 %3493
        %3495 = vrot.lane.b32.xlu0 %v1938, 48
        %v3496 = vpop.permute.xlu0 %3495
        %3497 = vrot.lane.b32.xlu0 %v1939, 48
        %v3498 = vpop.permute.xlu0 %3497
        %3499 = vrot.lane.b32.xlu0 %v1940, 48
        %v3500 = vpop.permute.xlu0 %3499
        %3501 = vrot.lane.b32.xlu0 %v1941, 48
        %v3502 = vpop.permute.xlu0 %3501
        %3503 = vrot.lane.b32.xlu0 %v1942, 48
        %v3504 = vpop.permute.xlu0 %3503
        %3505 = vrot.lane.b32.xlu0 %v1943, 48
        %v3506 = vpop.permute.xlu0 %3505
        %3507 = vrot.lane.b32.xlu0 %v1944, 48
        %v3508 = vpop.permute.xlu0 %3507
        %3509 = vrot.lane.b32.xlu0 %v1945, 48
        %v3510 = vpop.permute.xlu0 %3509
        %3511 = vrot.lane.b32.xlu0 %v1946, 48
        %v3512 = vpop.permute.xlu0 %3511
        %3533 = vrot.lane.b32.xlu0 %v2301, 64
        %v3534 = vpop.permute.xlu0 %3533
        %3535 = vrot.lane.b32.xlu0 %v2302, 64
        %v3536 = vpop.permute.xlu0 %3535
        %3537 = vrot.lane.b32.xlu0 %v2303, 64
        %v3538 = vpop.permute.xlu0 %3537
        %3539 = vrot.lane.b32.xlu0 %v2304, 64
        %v3540 = vpop.permute.xlu0 %3539
        %3541 = vrot.lane.b32.xlu0 %v2305, 64
        %v3542 = vpop.permute.xlu0 %3541
        %3543 = vrot.lane.b32.xlu0 %v2306, 64
        %v3544 = vpop.permute.xlu0 %3543
        %3545 = vrot.lane.b32.xlu0 %v2307, 64
        %v3546 = vpop.permute.xlu0 %3545
        %3547 = vrot.lane.b32.xlu0 %v2308, 64
        %v3548 = vpop.permute.xlu0 %3547
        %3549 = vrot.lane.b32.xlu0 %v2309, 64
        %v3550 = vpop.permute.xlu0 %3549
        %3551 = vrot.lane.b32.xlu0 %v2310, 64
        %v3552 = vpop.permute.xlu0 %3551
        %3573 = vrot.lane.b32.xlu0 %v2665, 80
        %v3574 = vpop.permute.xlu0 %3573
        %3575 = vrot.lane.b32.xlu0 %v2666, 80
        %v3576 = vpop.permute.xlu0 %3575
        %3577 = vrot.lane.b32.xlu0 %v2667, 80
        %v3578 = vpop.permute.xlu0 %3577
        %3579 = vrot.lane.b32.xlu0 %v2668, 80
        %v3580 = vpop.permute.xlu0 %3579
        %3581 = vrot.lane.b32.xlu0 %v2669, 80
        %v3582 = vpop.permute.xlu0 %3581
        %3583 = vrot.lane.b32.xlu0 %v2670, 80
        %v3584 = vpop.permute.xlu0 %3583
        %3585 = vrot.lane.b32.xlu0 %v2671, 80
        %v3586 = vpop.permute.xlu0 %3585
        %3587 = vrot.lane.b32.xlu0 %v2672, 80
        %v3588 = vpop.permute.xlu0 %3587
        %3589 = vrot.lane.b32.xlu0 %v2673, 80
        %v3590 = vpop.permute.xlu0 %3589
        %3591 = vrot.lane.b32.xlu0 %v2674, 80
        %v3592 = vpop.permute.xlu0 %3591
        %3613 = vrot.lane.b32.xlu0 %v3029, 96
        %v3614 = vpop.permute.xlu0 %3613
        %3615 = vrot.lane.b32.xlu0 %v3030, 96
        %v3616 = vpop.permute.xlu0 %3615
        %3617 = vrot.lane.b32.xlu0 %v3031, 96
        %v3618 = vpop.permute.xlu0 %3617
        %3619 = vrot.lane.b32.xlu0 %v3032, 96
        %v3620 = vpop.permute.xlu0 %3619
        %3621 = vrot.lane.b32.xlu0 %v3033, 96
        %v3622 = vpop.permute.xlu0 %3621
        %3623 = vrot.lane.b32.xlu0 %v3034, 96
        %v3624 = vpop.permute.xlu0 %3623
        %3625 = vrot.lane.b32.xlu0 %v3035, 96
        %v3626 = vpop.permute.xlu0 %3625
        %3627 = vrot.lane.b32.xlu0 %v3036, 96
        %v3628 = vpop.permute.xlu0 %3627
        %3629 = vrot.lane.b32.xlu0 %v3037, 96
        %v3630 = vpop.permute.xlu0 %3629
        %3631 = vrot.lane.b32.xlu0 %v3038, 96
        %v3632 = vpop.permute.xlu0 %3631
        %3653 = vrot.lane.b32.xlu0 %v3393, 112
        %v3654 = vpop.permute.xlu0 %3653
        %3655 = vrot.lane.b32.xlu0 %v3394, 112
        %v3656 = vpop.permute.xlu0 %3655
        %3657 = vrot.lane.b32.xlu0 %v3395, 112
        %v3658 = vpop.permute.xlu0 %3657
        %3659 = vrot.lane.b32.xlu0 %v3396, 112
        %v3660 = vpop.permute.xlu0 %3659
        %3661 = vrot.lane.b32.xlu0 %v3397, 112
        %v3662 = vpop.permute.xlu0 %3661
        %3663 = vrot.lane.b32.xlu0 %v3398, 112
        %v3664 = vpop.permute.xlu0 %3663
        %3665 = vrot.lane.b32.xlu0 %v3399, 112
        %v3666 = vpop.permute.xlu0 %3665
        %3667 = vrot.lane.b32.xlu0 %v3400, 112
        %v3668 = vpop.permute.xlu0 %3667
        %3669 = vrot.lane.b32.xlu0 %v3401, 112
        %v3670 = vpop.permute.xlu0 %3669
        %3671 = vrot.lane.b32.xlu0 %v3402, 112
        %v3672 = vpop.permute.xlu0 %3671
        %v3683 = vsel %vm529, %v835, %v3414
        %v3684 = vsel %vm529, %v836, %v3416
        %v3685 = vsel %vm529, %v837, %v3418
        %v3686 = vsel %vm529, %v838, %v3420
        %v3687 = vsel %vm529, %v839, %v3422
        %v3688 = vsel %vm529, %v840, %v3424
        %v3689 = vsel %vm529, %v841, %v3426
        %v3690 = vsel %vm529, %v842, %v3428
        %v3691 = vsel %vm529, %v843, %v3430
        %v3692 = vsel %vm529, %v844, %v3432
        %vm3693 = vcmask 261120
        %v3694 = vsel %vm3693, %v3683, %v3454
        %v3695 = vsel %vm3693, %v3684, %v3456
        %v3696 = vsel %vm3693, %v3685, %v3458
        %v3697 = vsel %vm3693, %v3686, %v3460
        %v3698 = vsel %vm3693, %v3687, %v3462
        %v3699 = vsel %vm3693, %v3688, %v3464
        %v3700 = vsel %vm3693, %v3689, %v3466
        %v3701 = vsel %vm3693, %v3690, %v3468
        %v3702 = vsel %vm3693, %v3691, %v3470
        %v3703 = vsel %vm3693, %v3692, %v3472
        %vm3704 = vcmask 392192
        %v3705 = vsel %vm3704, %v3694, %v3494
        %v3706 = vsel %vm3704, %v3695, %v3496
        %v3707 = vsel %vm3704, %v3696, %v3498
        %v3708 = vsel %vm3704, %v3697, %v3500
        %v3709 = vsel %vm3704, %v3698, %v3502
        %v3710 = vsel %vm3704, %v3699, %v3504
        %v3711 = vsel %vm3704, %v3700, %v3506
        %v3712 = vsel %vm3704, %v3701, %v3508
        %v3713 = vsel %vm3704, %v3702, %v3510
        %v3714 = vsel %vm3704, %v3703, %v3512
        %vm3715 = vcmask 523264
        %v3716 = vsel %vm3715, %v3705, %v3534
        %v3717 = vsel %vm3715, %v3706, %v3536
        %v3718 = vsel %vm3715, %v3707, %v3538
        %v3719 = vsel %vm3715, %v3708, %v3540
        %v3720 = vsel %vm3715, %v3709, %v3542
        %v3721 = vsel %vm3715, %v3710, %v3544
        %v3722 = vsel %vm3715, %v3711, %v3546
        %v3723 = vsel %vm3715, %v3712, %v3548
        %v3724 = vsel %vm3715, %v3713, %v3550
        %v3725 = vsel %vm3715, %v3714, %v3552
        %v3726 = vsel %vm657, %v3716, %v3574
        %v3727 = vsel %vm657, %v3717, %v3576
        %v3728 = vsel %vm657, %v3718, %v3578
        %v3729 = vsel %vm657, %v3719, %v3580
        %v3730 = vsel %vm657, %v3720, %v3582
        %v3731 = vsel %vm657, %v3721, %v3584
        %v3732 = vsel %vm657, %v3722, %v3586
        %v3733 = vsel %vm657, %v3723, %v3588
        %v3734 = vsel %vm657, %v3724, %v3590
        %v3735 = vsel %vm657, %v3725, %v3592
        %vm3736 = vcmask 785408
        %v3737 = vsel %vm3736, %v3726, %v3614
        %v3738 = vsel %vm3736, %v3727, %v3616
        %v3739 = vsel %vm3736, %v3728, %v3618
        %v3740 = vsel %vm3736, %v3729, %v3620
        %v3741 = vsel %vm3736, %v3730, %v3622
        %v3742 = vsel %vm3736, %v3731, %v3624
        %v3743 = vsel %vm3736, %v3732, %v3626
        %v3744 = vsel %vm3736, %v3733, %v3628
        %v3745 = vsel %vm3736, %v3734, %v3630
        %v3746 = vsel %vm3736, %v3735, %v3632
        %vm3747 = vcmask 916480
        %v3748 = vsel %vm3747, %v3737, %v3654
        %v3749 = vsel %vm3747, %v3738, %v3656
        %v3750 = vsel %vm3747, %v3739, %v3658
        %v3751 = vsel %vm3747, %v3740, %v3660
        %v3752 = vsel %vm3747, %v3741, %v3662
        %v3753 = vsel %vm3747, %v3742, %v3664
        %v3754 = vsel %vm3747, %v3743, %v3666
        %v3755 = vsel %vm3747, %v3744, %v3668
        %v3756 = vsel %vm3747, %v3745, %v3670
        %v3757 = vsel %vm3747, %v3746, %v3672
        %v3758 = vld [vmem:[#allocation7] sm:$0xff]
        %v3759 = vld [vmem:[#allocation7 + $0x8] sm:$0xff]
        %v3760 = vld [vmem:[#allocation7 + $0x10] sm:$0xff]
        %v3761 = vld [vmem:[#allocation7 + $0x18] sm:$0xff]
        %v3762 = vld [vmem:[#allocation7 + $0x20] sm:$0xff]
        %v3763 = vld [vmem:[#allocation7 + $0x28] sm:$0xff]
        %v3764 = vld [vmem:[#allocation7 + $0x30] sm:$0xff]
        %v3765 = vld [vmem:[#allocation7 + $0x38] sm:$0xff]
        %v3766 = vld [vmem:[#allocation7 + $0x40] sm:$0xff]
        %v3767 = vld [vmem:[#allocation7 + $0x48] sm:$0xff]
        %v3768 = vld [vmem:[#allocation7 + $0x50] sm:$0xff]
        %v3769 = vld [vmem:[#allocation7 + $0x58] sm:$0xff]
        %v3770 = vld [vmem:[#allocation7 + $0x60] sm:$0xff]
        %v3771 = vld [vmem:[#allocation7 + $0x68] sm:$0xff]
        %v3772 = vld [vmem:[#allocation7 + $0x70] sm:$0xff]
        %v3773 = vld [vmem:[#allocation7 + $0x78] sm:$0xff]
        %v3774 = vld [vmem:[%s4] sm:$0x1]
        %v3776 = vperm.slane %v3774, 0
        %3778 = vmatpush.msra.mxu0 %v3773
        %3779 = vmatpush.msra.mxu0 %v3772
        %3780 = vmatpush.msra.mxu0 %v3771
        %3781 = vmatpush.msra.mxu0 %v3770
        %3782 = vmatpush.msra.mxu0 %v3769
        %3783 = vmatpush.msra.mxu0 %v3768
        %3784 = vmatpush.msra.mxu0 %v3767
        %3785 = vmatpush.msra.mxu0 %v3766
        %3786 = vmatpush.msra.mxu0 %v3765
        %3787 = vmatpush.msra.mxu0 %v3764
        %3788 = vmatpush.msra.mxu0 %v3763
        %3789 = vmatpush.msra.mxu0 %v3762
        %3790 = vmatpush.msra.mxu0 %v3761
        %3791 = vmatpush.msra.mxu0 %v3760
        %3792 = vmatpush.msra.mxu0 %v3759
        %3793 = vmatpush.msra.mxu0 %v3758
        %3794 = vmatmul.f32.gmra.mxu0 %v3748
        %v3795 = vpop.f32.mrf.mxu0
        %v3796 = vadd.f32 %v3776, %v3795
        %3797 = vmatmul.f32.gmra.mxu0 %v3749
        %v3798 = vpop.f32.mrf.mxu0
        %v3799 = vadd.f32 %v3776, %v3798
        %3800 = vmatmul.f32.gmra.mxu0 %v3750
        %v3801 = vpop.f32.mrf.mxu0
        %v3802 = vadd.f32 %v3776, %v3801
        %3803 = vmatmul.f32.gmra.mxu0 %v3751
        %v3804 = vpop.f32.mrf.mxu0
        %v3805 = vadd.f32 %v3776, %v3804
        %3806 = vmatmul.f32.gmra.mxu0 %v3752
        %v3807 = vpop.f32.mrf.mxu0
        %v3808 = vadd.f32 %v3776, %v3807
        %3809 = vmatmul.f32.gmra.mxu0 %v3753
        %v3810 = vpop.f32.mrf.mxu0
        %v3811 = vadd.f32 %v3776, %v3810
        %3812 = vmatmul.f32.gmra.mxu0 %v3754
        %v3813 = vpop.f32.mrf.mxu0
        %v3814 = vadd.f32 %v3776, %v3813
        %3815 = vmatmul.f32.gmra.mxu0 %v3755
        %v3816 = vpop.f32.mrf.mxu0
        %v3817 = vadd.f32 %v3776, %v3816
        %3818 = vmatmul.f32.gmra.mxu0 %v3756
        %v3819 = vpop.f32.mrf.mxu0
        %v3820 = vadd.f32 %v3776, %v3819
        %3821 = vmatmul.f32.gmra.mxu0 %v3757
        %v3822 = vpop.f32.mrf.mxu0
        %v3823 = vadd.f32 %v3776, %v3822
        %3824 = vdwg.mxu0
        %3825 = vst [vmem:[%s277] sm:$0xff] %v3796
        %3826 = vst [vmem:[%s277 + $0x8] sm:$0xff] %v3799
        %3827 = vst [vmem:[%s277 + $0x10] sm:$0xff] %v3802
        %3828 = vst [vmem:[%s277 + $0x18] sm:$0xff] %v3805
        %3829 = vst [vmem:[%s277 + $0x20] sm:$0xff] %v3808
        %3830 = vst [vmem:[%s277 + $0x28] sm:$0xff] %v3811
        %3831 = vst [vmem:[%s277 + $0x30] sm:$0xff] %v3814
        %3832 = vst [vmem:[%s277 + $0x38] sm:$0xff] %v3817
        %3833 = vst [vmem:[%s277 + $0x40] sm:$0xff] %v3820
        %3834 = vst [vmem:[%s277 + $0x48] sm:$0xff] %v3823
        %s3835 = sand.u32 %s141, 1
        %s3836 = scalar_lea.sflag [#allocation4], %s3835
        %s3837 = sand.u32 %s141, 1
        %s3838 = smul.addr %s3837, 80
        %s3839 = scalar_lea.vmem [#allocation8], %s3838
        // Predicated region
        $region53: #{attention_pallas.1} parent=39 // pred_check
          %p3840 = pneg %p151
        $region54: #{attention_pallas.1} parent=39 // pred_check_branch
          %3842 = sbr.rel (%p3840) target = $region56
        $region55: #{attention_pallas.1} parent=39 // pred_region
          %3844 = vsyncadd %s3836, 0
          %s3845 = smul.addr %s23, 10
          %s3846 = smul.addr %s3845, 8
          %s3847 = scalar_lea.hbm %s5, %s3846
          %s3848 = sshll.u32 %s3839, 4
          %s3849 = int_to_ptr.vmem [resolvable:$true] %s3848
          %s3850 = sshll.u32 %s3847, 4
          %s3851 = int_to_ptr.hbm [resolvable:$true] %s3850
          %3856 = dma.vmem_to_hbm [thread:$0]  %s3849, 1280, %s3851, %s3836, 128, 128, 8
        $region56: #{attention_pallas.1} parent=39 // pred_fallthru
          _
      $region40: #{attention_pallas.1} parent=5 // pred_fallthru
        _
      %p3857 = scmp.le.s32.totalorder 2, %s18
      // Predicated region
      $region57: #{attention_pallas.1} parent=5 // pred_check
        %p3858 = pneg %p3857
      $region58: #{attention_pallas.1} parent=5 // pred_check_branch
        %3860 = sbr.rel (%p3858) target = $region60
      $region59: #{attention_pallas.1} parent=5 // pred_region
        %s3861 = ssub.s32 %s18, 2
        // Predicated region
        $region61: #{attention_pallas.1} parent=59 // pred_check
          %p3862 = pneg %p157
        $region62: #{attention_pallas.1} parent=59 // pred_check_branch
          %3864 = sbr.rel (%p3862) target = $region64
        $region63: #{attention_pallas.1} parent=59 // pred_region
          %s3865 = sand.u32 %s142, 1
          %s3866 = scalar_lea.sflag [#allocation4], %s3865
          %s3867 = sand.u32 %s142, 1
          %s3868 = smul.addr %s3867, 80
          %s3869 = scalar_lea.vmem [#allocation8], %s3868
          %3871 = dma.done %s3866, 1280
        $region64: #{attention_pallas.1} parent=59 // pred_fallthru
          _
      $region60: #{attention_pallas.1} parent=5 // pred_fallthru
        _
    $region6: #{attention_pallas.1} parent=1 // loop_footer
      %s22 = sadd.s32 1, %s18
    $region7: #{attention_pallas.1} parent=1 // loop_footer_branch
      %17 = sbr.rel target = $region3
    $region8: #{attention_pallas.1} parent=1 // loop_exit
      _
    %3872 = vsyncpa [#allocation3], 1
    %s3873 = scalar_lea.sflag [#allocation3], 1
    %3874 = vsyncpa %s3873, 1
    %3875 = vsyncpa [#allocation6], 1
    %3876 = vsyncpa [#allocation4], 1
    %s3877 = scalar_lea.sflag [#allocation4], 1
    %3878 = vsyncpa %s3877, 1

</llo_original>
